<compile_context>
chip_gen: v7x
topology: tpu7x:2x2x1
jax: 0.10.0
libtpu: 0.0.40
codegen_flags: <defaults>
</compile_context>

<pallas_src>
import functools

import numpy as np
import jax
import jax.numpy as jnp
from jax import lax
from jax.experimental import pallas as pl
from jax.experimental.pallas import tpu as pltpu


LANE = 128
ROW_TILE_TARGET = 1024                # review: 512 -> 1024 (still tiny in VMEM)
VMEM_LIMIT_BYTES = 48 * 1024 * 1024   # <= ~48 MiB: safe on v7x (64 MiB physical)
BN_EPS = 1e-5


# --------------------------------------------------------------------------
# small helpers
# --------------------------------------------------------------------------

def _round_up(n, m=LANE):
    return ((n + m - 1) // m) * m


def _pad_to(a, shape):
    pads = [(0, int(t) - int(s)) for s, t in zip(a.shape, shape)]
    if not any(p for _, p in pads):
        return a
    return jnp.pad(a, pads)


def _row_tile(n, target=ROW_TILE_TARGET):
    """Largest multiple-of-8 divisor of n that is <= target; prefers a grid of
    at least 2 steps (v7x has 2 TensorCores)."""
    if n % 8 or n <= 8:
        return n                       # tiny / odd row count: single block
    t = min(n, target)
    t -= t % 8
    while t > 8 and n % t:
        t -= 8
    if t == n:
        half = n // 2
        if half % 8 == 0 and n % half == 0:
            t = half                   # guarantee grid >= 2 for dual-TC chips
    return t


def _img_tile(batch, hw, target=ROW_TILE_TARGET):
    """Images per grid step for image-blocked kernels.  Tile rows = d*hw must
    be a multiple of 8 (or the whole array).  Preference: fits the row target,
    then grid >= 2, then the largest (smallest if over budget) tile."""
    best_d, best_key = None, None
    for d in range(1, batch + 1):
        if batch % d:
            continue
        rows = d * hw
        if rows % 8 and d != batch:
            continue
        key = (rows <= target, (batch // d) >= 2,
               rows if rows <= target else -rows)
        if best_key is None or key > best_key:
            best_d, best_key = d, key
    return best_d


def _compiler_params(n_axes):
    return pltpu.CompilerParams(
        dimension_semantics=("parallel",) * n_axes,
        vmem_limit_bytes=VMEM_LIMIT_BYTES,
    )


def _affine_from_stats(st, gamma, beta, n_rows):
    # st: (g, 2, C) per-tile [sum(y), sum(y*y)]; gamma/beta: (1, C).
    # NOTE: single-pass E[y^2]-mean^2 in f32 (clamped); acceptable for BN here.
    s = jnp.sum(st, axis=0)                               # (2, C)
    inv_n = 1.0 / n_rows
    mean = s[0:1, :] * inv_n                              # (1, C)
    var = jnp.maximum(s[1:2, :] * inv_n - mean * mean, 0.0)
    scale = gamma * lax.rsqrt(var + BN_EPS)               # (1, C)
    shift = beta - mean * scale
    return scale, shift


# --------------------------------------------------------------------------
# Pallas kernels
# --------------------------------------------------------------------------

def _conv1x1_stats_kernel(x_ref, w_ref, y_ref, st_ref):
    # x: (tn, Cin) bf16   w: (Cin, Cout) bf16 -> y: (tn, Cout) bf16, stats f32.
    z = jnp.dot(x_ref[...], w_ref[...], preferred_element_type=jnp.float32)
    y_ref[...] = z.astype(y_ref.dtype)
    st_ref[0] = jnp.concatenate(
        [jnp.sum(z, axis=0, keepdims=True),
         jnp.sum(z * z, axis=0, keepdims=True)], axis=0)


def _bn_relu_conv1x1_stats_kernel(st_ref, g_ref, b_ref, y_ref, w_ref,
                                  o_ref, so_ref, *, n_rows):
    # BN(prev, from partial stats) + ReLU fused with the next 1x1 conv.
    scale, shift = _affine_from_stats(st_ref[...], g_ref[...], b_ref[...], n_rows)
    h = jnp.maximum(y_ref[...].astype(jnp.float32) * scale + shift, 0.0)
    z = jnp.dot(h.astype(jnp.bfloat16), w_ref[...],
                preferred_element_type=jnp.float32)
    o_ref[...] = z.astype(o_ref.dtype)
    so_ref[0] = jnp.concatenate(
        [jnp.sum(z, axis=0, keepdims=True),
         jnp.sum(z * z, axis=0, keepdims=True)], axis=0)


def _bn_relu_conv3x3_stats_kernel(st_ref, g_ref, b_ref, y_ref, w_ref,
                                  o_ref, so_ref, *, h_dim, w_dim, n_rows):
    # BN1+ReLU fused with a 3x3 (stride 1, pad 1) conv.  The tile holds whole
    # images (rows = d*H*W), so a flat-row roll + hoisted border masks exactly
    # reproduce zero padding.  The 9 masked taps are concatenated along the
    # contraction dim -> a single MXU matmul with K = 9*Cin.
    rows = o_ref.shape[0]
    scale, shift = _affine_from_stats(st_ref[...], g_ref[...], b_ref[...], n_rows)
    x = jnp.maximum(y_ref[...].astype(jnp.float32) * scale + shift, 0.0)

    pos = lax.broadcasted_iota(jnp.int32, (rows, 1), 0)
    if (h_dim & (h_dim - 1)) == 0 and (w_dim & (w_dim - 1)) == 0:
        r = (pos >> int(np.log2(w_dim))) & (h_dim - 1)
        c = pos & (w_dim - 1)
    else:
        r = (pos // w_dim) % h_dim
        c = pos % w_dim
    # hoisted validity masks: 3 row (dh) x 3 col (dw); index 1 == always valid
    row_ok = [r >= 1, None, r < (h_dim - 1)]
    col_ok = [c >= 1, None, c < (w_dim - 1)]

    taps = []
    for kh in range(3):
        for kw in range(3):
            dh, dw = kh - 1, kw - 1
            shift_rc = dh * w_dim + dw
            src = x if shift_rc == 0 else pltpu.roll(
                x, shift=(-shift_rc) % rows, axis=0)
            m = row_ok[kh]
            if col_ok[kw] is not None:
                m = col_ok[kw] if m is None else (m & col_ok[kw])
            if m is not None:
                src = src * m.astype(jnp.float32)
            taps.append(src.astype(jnp.bfloat16))
    big = jnp.concatenate(taps, axis=-1)              # (rows, 9*Cin) bf16
    z = jnp.dot(big, w_ref[...], preferred_element_type=jnp.float32)
    o_ref[...] = z.astype(o_ref.dtype)
    so_ref[0] = jnp.concatenate(
        [jnp.sum(z, axis=0, keepdims=True),
         jnp.sum(z * z, axis=0, keepdims=True)], axis=0)


def _bn_pool_excite_proj_kernel(st_ref, g_ref, b_ref, y_ref, filt_ref,
                                we1_ref, we2_ref, wp_ref, bp_ref, res_ref,
                                o_ref, *, n_rows):
    # Fused tail over a block of images: BN3 -> Gram-Schmidt orthogonal pooling
    # -> excitation MLP -> channel scale -> 1x1 projection + bias + residual
    # -> ReLU.
    it, hw, c4 = y_ref.shape
    scale, shift = _affine_from_stats(st_ref[...], g_ref[...], b_ref[...], n_rows)
    out = y_ref[...].astype(jnp.float32) * scale[None] + shift[None]   # (it,hw,c4)
    comp = jnp.sum(filt_ref[...][None] * out, axis=1)                  # (it,c4)
    hid = jnp.maximum(jnp.dot(comp, we1_ref[...],
                              preferred_element_type=jnp.float32), 0.0)
    att = jax.nn.sigmoid(jnp.dot(hid, we2_ref[...],
                                 preferred_element_type=jnp.float32))  # (it,c4)
    scaled = (out * att[:, None, :]).astype(jnp.bfloat16)              # (it,hw,c4)
    proj = jnp.dot(scaled.reshape(it * hw, c4), wp_ref[...],
                   preferred_element_type=jnp.float32)
    y = proj.reshape(it, hw, -1) + bp_ref[...][None] + res_ref[...].astype(jnp.float32)
    o_ref[...] = jnp.maximum(y, 0.0)


# --------------------------------------------------------------------------
# pallas_call wrappers
# --------------------------------------------------------------------------

def conv1x1_with_stats(x2d, w):
    n, cin = x2d.shape
    cout = w.shape[1]
    tn = _row_tile(n)
    g = n // tn
    return pl.pallas_call(
        _conv1x1_stats_kernel,
        out_shape=(jax.ShapeDtypeStruct((n, cout), jnp.bfloat16),
                   jax.ShapeDtypeStruct((g, 2, cout), jnp.float32)),
        grid=(g,),
        in_specs=[pl.BlockSpec((tn, cin), lambda i: (i, 0)),
                  pl.BlockSpec((cin, cout), lambda i: (0, 0))],
        out_specs=[pl.BlockSpec((tn, cout), lambda i: (i, 0)),
                   pl.BlockSpec((1, 2, cout), lambda i: (i, 0, 0))],
        compiler_params=_compiler_params(1),
    )(x2d, w)


def bn_relu_conv1x1_with_stats(st, gamma, beta, y_prev, w, n_rows):
    n, cin = y_prev.shape
    cout = w.shape[1]
    gs = st.shape[0]
    tn = _row_tile(n)
    g = n // tn
    kern = functools.partial(_bn_relu_conv1x1_stats_kernel, n_rows=float(n_rows))
    return pl.pallas_call(
        kern,
        out_shape=(jax.ShapeDtypeStruct((n, cout), jnp.bfloat16),
                   jax.ShapeDtypeStruct((g, 2, cout), jnp.float32)),
        grid=(g,),
        in_specs=[pl.BlockSpec((gs, 2, cin), lambda i: (0, 0, 0)),
                  pl.BlockSpec((1, cin), lambda i: (0, 0)),
                  pl.BlockSpec((1, cin), lambda i: (0, 0)),
                  pl.BlockSpec((tn, cin), lambda i: (i, 0)),
                  pl.BlockSpec((cin, cout), lambda i: (0, 0))],
        out_specs=[pl.BlockSpec((tn, cout), lambda i: (i, 0)),
                   pl.BlockSpec((1, 2, cout), lambda i: (i, 0, 0))],
        compiler_params=_compiler_params(1),
    )(st, gamma, beta, y_prev, w)


def bn_relu_conv3x3_with_stats(st, gamma, beta, y_prev, w_taps, batch, h, w,
                               n_rows):
    n, cin = y_prev.shape
    cout = w_taps.shape[1]
    gs = st.shape[0]
    hw = h * w
    d = _img_tile(batch, hw)
    tn = d * hw
    # whole images per tile: required for flat-row roll + border-mask exactness
    assert n % tn == 0 and tn % hw == 0
    g = n // tn
    kern = functools.partial(_bn_relu_conv3x3_stats_kernel,
                             h_dim=h, w_dim=w, n_rows=float(n_rows))
    return pl.pallas_call(
        kern,
        out_shape=(jax.ShapeDtypeStruct((n, cout), jnp.bfloat16),
                   jax.ShapeDtypeStruct((g, 2, cout), jnp.float32)),
        grid=(g,),
        in_specs=[pl.BlockSpec((gs, 2, cin), lambda i: (0, 0, 0)),
                  pl.BlockSpec((1, cin), lambda i: (0, 0)),
                  pl.BlockSpec((1, cin), lambda i: (0, 0)),
                  pl.BlockSpec((tn, cin), lambda i: (i, 0)),
                  pl.BlockSpec((9 * cin, cout), lambda i: (0, 0))],
        out_specs=[pl.BlockSpec((tn, cout), lambda i: (i, 0)),
                   pl.BlockSpec((1, 2, cout), lambda i: (i, 0, 0))],
        compiler_params=_compiler_params(1),
    )(st, gamma, beta, y_prev, w_taps)


def bn_pool_excite_proj(st, gamma, beta, y3, filt, we1, we2, wp, bp, res3,
                        n_rows):
    b, hw, c4 = y3.shape
    cin = wp.shape[1]
    hid = we1.shape[1]
    gs = st.shape[0]
    it = _img_tile(b, hw, target=512)
    g = b // it
    kern = functools.partial(_bn_pool_excite_proj_kernel, n_rows=float(n_rows))
    return pl.pallas_call(
        kern,
        out_shape=jax.ShapeDtypeStruct((b, hw, cin), jnp.float32),
        grid=(g,),
        in_specs=[pl.BlockSpec((gs, 2, c4), lambda i: (0, 0, 0)),
                  pl.BlockSpec((1, c4), lambda i: (0, 0)),
                  pl.BlockSpec((1, c4), lambda i: (0, 0)),
                  pl.BlockSpec((it, hw, c4), lambda i: (i, 0, 0)),
                  pl.BlockSpec((hw, c4), lambda i: (0, 0)),
                  pl.BlockSpec((c4, hid), lambda i: (0, 0)),
                  pl.BlockSpec((hid, c4), lambda i: (0, 0)),
                  pl.BlockSpec((c4, cin), lambda i: (0, 0)),
                  pl.BlockSpec((1, cin), lambda i: (0, 0)),
                  pl.BlockSpec((it, hw, cin), lambda i: (i, 0, 0))],
        out_specs=pl.BlockSpec((it, hw, cin), lambda i: (i, 0, 0)),
        compiler_params=_compiler_params(1),
    )(st, gamma, beta, y3, filt, we1, we2, wp, bp.reshape(1, cin), res3)


# --------------------------------------------------------------------------
# Gram-Schmidt filter init + synthetic params
# --------------------------------------------------------------------------

def _gram_schmidt_np(vs):
    out = []
    for v in vs:
        v = v.astype(np.float32).copy()
        for u in out:
            v = v - (v * u).sum() / (u * u).sum() * u
        v = v / np.sqrt((v * v).sum())
        out.append(v)
    return np.stack(out)


def initialize_orthogonal_filters_np(c, h, w, seed=0):
    rng = np.random.default_rng(seed)
    if h * w < c:
        n = c // (h * w)
        blocks = [_gram_schmidt_np(rng.random((h * w, 1, h, w)).astype(np.float32))
                  for _ in range(n)]
        return np.concatenate(blocks, axis=0)
    return _gram_schmidt_np(rng.random((c, 1, h, w)).astype(np.float32))


def init_params(key, inplanes, planes, height):
    c4 = 4 * planes
    hidden = max(1, int(round(planes / 4)))
    ks = jax.random.split(key, 13)
    p = {
        "w1": 0.2 * jax.random.normal(ks[0], (inplanes, planes), jnp.float32),
        "g1": 1.0 + 0.1 * jax.random.normal(ks[1], (planes,), jnp.float32),
        "b1": 0.1 * jax.random.normal(ks[2], (planes,), jnp.float32),
        "w2": 0.2 * jax.random.normal(ks[3], (3, 3, planes, planes), jnp.float32),
        "g2": 1.0 + 0.1 * jax.random.normal(ks[4], (planes,), jnp.float32),
        "b2": 0.1 * jax.random.normal(ks[5], (planes,), jnp.float32),
        "w3": 0.2 * jax.random.normal(ks[6], (planes, c4), jnp.float32),
        "g3": 1.0 + 0.1 * jax.random.normal(ks[7], (c4,), jnp.float32),
        "b3": 0.1 * jax.random.normal(ks[8], (c4,), jnp.float32),
        "we1": 0.3 * jax.random.normal(ks[9], (c4, hidden), jnp.float32),
        "we2": 0.3 * jax.random.normal(ks[10], (hidden, c4), jnp.float32),
        "wp": 0.2 * jax.random.normal(ks[11], (c4, inplanes), jnp.float32),
        "bp": 0.1 * jax.random.normal(ks[12], (inplanes,), jnp.float32),
    }
    filt_chw = initialize_orthogonal_filters_np(c4, height, height).reshape(
        c4, height * height)
    p["filt"] = jnp.asarray(filt_chw.T)                    # (HW, C4)
    return p


# --------------------------------------------------------------------------
# Forward pass (Pallas) and pure-JAX f32 reference
# --------------------------------------------------------------------------

def oca1_forward(x_nchw, p):
    b, cin, h, w = x_nchw.shape
    planes = p["w1"].shape[1]
    c4 = 4 * planes
    hw = h * w
    n = b * hw
    assert p["filt"].shape[0] == hw, "height mismatch"
    # TODO(synk): adaptive_avg_pool2d fallback inside GramSchmidtTransform
    # (only taken when input spatial != filter size) is not implemented; with
    # stride=1 and height == input spatial size it is never hit.

    cin_p = _round_up(cin)
    planes_p = _round_up(planes)
    c4_p = _round_up(c4)
    hid = p["we1"].shape[1]
    hid_p = _round_up(hid)

    # NHWC, channel-padded to lane-dense 128-multiples; activations in bf16
    # (the transpose+pad already materializes a copy, so the cast is free).
    x = jnp.transpose(x_nchw, (0, 2, 3, 1))
    x_pad = _pad_to(x, (b, h, w, cin_p)).astype(jnp.bfloat16)
    x2d = x_pad.reshape(n, cin_p)
    res3 = x_pad.reshape(b, hw, cin_p)

    # Zero-padded weights; MXU operands in bf16, BN params / excitation in f32.
    w1 = _pad_to(p["w1"], (cin_p, planes_p)).astype(jnp.bfloat16)
    w2 = _pad_to(p["w2"].reshape(9, planes, planes),
                 (9, planes_p, planes_p)).astype(jnp.bfloat16).reshape(
                     9 * planes_p, planes_p)               # K = 9*Cin layout
    w3 = _pad_to(p["w3"], (planes_p, c4_p)).astype(jnp.bfloat16)
    wp = _pad_to(p["wp"], (c4_p, cin_p)).astype(jnp.bfloat16)
    we1 = _pad_to(p["we1"], (c4_p, hid_p))
    we2 = _pad_to(p["we2"], (hid_p, c4_p))
    g1 = _pad_to(p["g1"], (planes_p,)).reshape(1, planes_p)
    b1 = _pad_to(p["b1"], (planes_p,)).reshape(1, planes_p)
    g2 = _pad_to(p["g2"], (planes_p,)).reshape(1, planes_p)
    b2 = _pad_to(p["b2"], (planes_p,)).reshape(1, planes_p)
    g3 = _pad_to(p["g3"], (c4_p,)).reshape(1, c4_p)
    b3 = _pad_to(p["b3"], (c4_p,)).reshape(1, c4_p)
    bp = _pad_to(p["bp"], (cin_p,))
    filt = _pad_to(p["filt"], (hw, c4_p))

    # conv1 (1x1) + per-tile BN moments.
    y1, st1 = conv1x1_with_stats(x2d, w1)
    # BN1+ReLU fused with the 3x3 conv (single K=9*Cin matmul) + moments.
    y2, st2 = bn_relu_conv3x3_with_stats(st1, g1, b1, y1, w2, b, h, w, n)
    # BN2+ReLU fused with the 1x1 expansion conv + moments.
    y3, st3 = bn_relu_conv1x1_with_stats(st2, g2, b2, y2, w3, n)
    # Fused tail: BN3 + orthogonal pooling + excitation + scale + proj + residual.
    y = bn_pool_excite_proj(st3, g3, b3, y3.reshape(b, hw, c4_p), filt,
                            we1, we2, wp, bp, res3, n)

    y = y[:, :, :cin].reshape(b, h, w, cin)
    return jnp.transpose(y, (0, 3, 1, 2))


def im2col_3x3(x_nhwc):
    b, h, w, c = x_nhwc.shape
    xp = jnp.pad(x_nhwc, ((0, 0), (1, 1), (1, 1), (0, 0)))
    cols = []
    for dh in range(3):
        for dw in range(3):
            cols.append(xp[:, dh:dh + h, dw:dw + w, :])
    patches = jnp.concatenate(cols, axis=-1)          # (B,H,W,9C), order (kh,kw,c)
    return patches.reshape(b * h * w, 9 * c)


def oca1_reference(x_nchw, p):
    b, cin, h, w = x_nchw.shape
    planes = p["w1"].shape[1]
    c4 = 4 * planes
    x = jnp.transpose(x_nchw, (0, 2, 3, 1))
    x2d = x.reshape(b * h * w, cin)

    def bn(y, g, beta, eps=BN_EPS):
        m = jnp.mean(y, axis=0, keepdims=True)
        v = jnp.mean((y - m) ** 2, axis=0, keepdims=True)
        return (y - m) * lax.rsqrt(v + eps) * g[None, :] + beta[None, :]

    h1 = jax.nn.relu(bn(x2d @ p["w1"], p["g1"], p["b1"]))
    patches = im2col_3x3(h1.reshape(b, h, w, planes))
    h2 = jax.nn.relu(bn(patches @ p["w2"].reshape(9 * planes, planes),
                        p["g2"], p["b2"]))
    h3 = bn(h2 @ p["w3"], p["g3"], p["b3"])
    out3 = h3.reshape(b, h * w, c4)
    comp = jnp.sum(out3 * p["filt"][None], axis=1)
    att = jax.nn.sigmoid(jax.nn.relu(comp @ p["we1"]) @ p["we2"])
    scaled = out3 * att[:, None, :]
    y = jnp.einsum("bpc,cd->bpd", scaled, p["wp"]) + p["bp"][None, None, :]
    y = jax.nn.relu(y + x.reshape(b, h * w, cin))
    return jnp.transpose(y.reshape(b, h, w, cin), (0, 3, 1, 2))


# --------------------------------------------------------------------------

if __name__ == "__main__":
    B, inplanes, H, W = 2, 16, 8, 8        # x: (B, inplanes, H, W) NCHW
    planes = 8                              # planes*4 = 32 channels, height = 8

    key = jax.random.PRNGKey(0)
    k_x, k_p = jax.random.split(key)
    x = jax.random.normal(k_x, (B, inplanes, H, W), dtype=jnp.float32)
    params = init_params(k_p, inplanes, planes, H)

    fwd = jax.jit(oca1_forward)
    out = jax.block_until_ready(fwd(x, params))
    ref = jax.block_until_ready(oca1_reference(x, params))

    assert out.shape == (B, inplanes, H, W)
    # bf16 activation streams + bf16 MXU operands (f32 accumulation / f32 BN
    # statistics) vs. the all-f32 reference.
    np.testing.assert_allclose(np.asarray(out), np.asarray(ref), rtol=5e-2, atol=5e-2)
    print("KERNEL_OK")
</pallas_src>

<mosaic_0001>
module attributes {stable_mosaic.version = 11 : i64} {
  func.func @_conv1x1_stats_kernel(%arg0: i32, %arg1: memref<64x128xbf16, #tpu.memory_space<vmem>>, %arg2: memref<128x128xbf16, #tpu.memory_space<vmem>>, %arg3: memref<64x128xbf16, #tpu.memory_space<vmem>>, %arg4: memref<1x2x128xf32, #tpu.memory_space<vmem>>) attributes {dimension_semantics = [#tpu.dimension_semantics<parallel>], iteration_bounds = array<i64: 2>, scalar_prefetch = 0 : i64, scratch_operands = 0 : i64, tpu.core_type = #tpu.core_type<tc>, window_params = [{transform_indices = @transform_0, window_bounds = array<i64: 64, 128>}, {pipeline_mode = #tpu.pipeline_mode<synchronous>, transform_indices = @transform_1, window_bounds = array<i64: 128, 128>}, {transform_indices = @transform_2, window_bounds = array<i64: 64, 128>}, {transform_indices = @transform_3, window_bounds = array<i64: 1, 2, 128>}]} {
    %c0 = arith.constant 0 : index
    %c0_0 = arith.constant 0 : index
    %0 = vector.load %arg1[%c0, %c0_0] : memref<64x128xbf16, #tpu.memory_space<vmem>>, vector<64x128xbf16>
    %c0_1 = arith.constant 0 : index
    %c0_2 = arith.constant 0 : index
    %1 = vector.load %arg2[%c0_1, %c0_2] : memref<128x128xbf16, #tpu.memory_space<vmem>>, vector<128x128xbf16>
    %cst = arith.constant dense<0.000000e+00> : vector<64x128xf32>
    %2 = tpu.matmul %0, %1, %cst {dimension_numbers = #tpu.dot_dimension_numbers<[1], [0], [0], [1], [0, 0, 1, 1], [], []>} : vector<64x128xbf16>, vector<128x128xbf16>, vector<64x128xf32> -> vector<64x128xf32>
    %3 = arith.truncf %2 : vector<64x128xf32> to vector<64x128xbf16>
    %c0_3 = arith.constant 0 : index
    %c0_4 = arith.constant 0 : index
    %4 = vector.load %arg3[%c0_3, %c0_4] : memref<64x128xbf16, #tpu.memory_space<vmem>>, vector<64x128xbf16>
    tpu.vector_store %arg3[%c0_3, %c0_4], %3 {strides = array<i32>} : memref<64x128xbf16, #tpu.memory_space<vmem>>, vector<64x128xbf16>,
    %cst_5 = arith.constant dense<0.000000e+00> : vector<128xf32>
    %5 = vector.multi_reduction <add>, %2, %cst_5 [0] : vector<64x128xf32> to vector<128xf32>
    %6 = vector.shape_cast %5 : vector<128xf32> to vector<1x128xf32>
    %7 = arith.mulf %2, %2 : vector<64x128xf32>
    %cst_6 = arith.constant dense<0.000000e+00> : vector<128xf32>
    %8 = vector.multi_reduction <add>, %7, %cst_6 [0] : vector<64x128xf32> to vector<128xf32>
    %9 = vector.shape_cast %8 : vector<128xf32> to vector<1x128xf32>
    %10 = tpu.concatenate %6, %9 in 0 : vector<1x128xf32>, vector<1x128xf32> -> vector<2x128xf32>
    %c0_7 = arith.constant 0 : index
    %c0_8 = arith.constant 0 : index
    %c0_9 = arith.constant 0 : index
    %11 = vector.load %arg4[%c0_7, %c0_8, %c0_9] : memref<1x2x128xf32, #tpu.memory_space<vmem>>, vector<1x2x128xf32>
    %12 = vector.shape_cast %11 : vector<1x2x128xf32> to vector<2x128xf32>
    %13 = vector.shape_cast %10 : vector<2x128xf32> to vector<1x2x128xf32>
    tpu.vector_store %arg4[%c0_7, %c0_8, %c0_9], %13 {strides = array<i32>} : memref<1x2x128xf32, #tpu.memory_space<vmem>>, vector<1x2x128xf32>,
    return
  }
  func.func @transform_0(%arg0: i32) -> (i32, i32) {
    %c0_i32 = arith.constant 0 : i32
    %c0_i32_0 = arith.constant 0 : i32
    return %arg0, %c0_i32 : i32, i32
  }
  func.func @transform_1(%arg0: i32) -> (i32, i32) {
    %c0_i32 = arith.constant 0 : i32
    %c0_i32_0 = arith.constant 0 : i32
    %c0_i32_1 = arith.constant 0 : i32
    return %c0_i32, %c0_i32_0 : i32, i32
  }
  func.func @transform_2(%arg0: i32) -> (i32, i32) {
    %c0_i32 = arith.constant 0 : i32
    %c0_i32_0 = arith.constant 0 : i32
    return %arg0, %c0_i32 : i32, i32
  }
  func.func @transform_3(%arg0: i32) -> (i32, i32, i32) {
    %c0_i32 = arith.constant 0 : i32
    %c0_i32_0 = arith.constant 0 : i32
    %c0_i32_1 = arith.constant 0 : i32
    return %arg0, %c0_i32, %c0_i32_0 : i32, i32, i32
  }
}

module attributes {stable_mosaic.version = 11 : i64} {
  func.func @_bn_relu_conv3x3_stats_kernel(%arg0: i32, %arg1: memref<2x2x128xf32, #tpu.memory_space<vmem>>, %arg2: memref<1x128xf32, #tpu.memory_space<vmem>>, %arg3: memref<1x128xf32, #tpu.memory_space<vmem>>, %arg4: memref<64x128xbf16, #tpu.memory_space<vmem>>, %arg5: memref<1152x128xbf16, #tpu.memory_space<vmem>>, %arg6: memref<64x128xbf16, #tpu.memory_space<vmem>>, %arg7: memref<1x2x128xf32, #tpu.memory_space<vmem>>) attributes {dimension_semantics = [#tpu.dimension_semantics<parallel>], iteration_bounds = array<i64: 2>, scalar_prefetch = 0 : i64, scratch_operands = 0 : i64, tpu.core_type = #tpu.core_type<tc>, window_params = [{pipeline_mode = #tpu.pipeline_mode<synchronous>, transform_indices = @transform_0, window_bounds = array<i64: 2, 2, 128>}, {pipeline_mode = #tpu.pipeline_mode<synchronous>, transform_indices = @transform_1, window_bounds = array<i64: 1, 128>}, {pipeline_mode = #tpu.pipeline_mode<synchronous>, transform_indices = @transform_2, window_bounds = array<i64: 1, 128>}, {transform_indices = @transform_3, window_bounds = array<i64: 64, 128>}, {pipeline_mode = #tpu.pipeline_mode<synchronous>, transform_indices = @transform_4, window_bounds = array<i64: 1152, 128>}, {transform_indices = @transform_5, window_bounds = array<i64: 64, 128>}, {transform_indices = @transform_6, window_bounds = array<i64: 1, 2, 128>}]} {
    %c0 = arith.constant 0 : index
    %c0_0 = arith.constant 0 : index
    %c0_1 = arith.constant 0 : index
    %0 = vector.load %arg1[%c0, %c0_0, %c0_1] : memref<2x2x128xf32, #tpu.memory_space<vmem>>, vector<2x2x128xf32>
    %c0_2 = arith.constant 0 : index
    %c0_3 = arith.constant 0 : index
    %1 = vector.load %arg2[%c0_2, %c0_3] : memref<1x128xf32, #tpu.memory_space<vmem>>, vector<1x128xf32>
    %c0_4 = arith.constant 0 : index
    %c0_5 = arith.constant 0 : index
    %2 = vector.load %arg3[%c0_4, %c0_5] : memref<1x128xf32, #tpu.memory_space<vmem>>, vector<1x128xf32>
    %cst = arith.constant dense<0.000000e+00> : vector<2x128xf32>
    %3 = vector.multi_reduction <add>, %0, %cst [0] : vector<2x2x128xf32> to vector<2x128xf32>
    %4 = vector.extract_strided_slice %3 {offsets = [0, 0], sizes = [1, 128], strides = [1, 1]} : vector<2x128xf32> to vector<1x128xf32>
    %cst_6 = arith.constant 7.812500e-03 : f32
    %5 = vector.broadcast %cst_6 : f32 to vector<1x128xf32>
    %6 = arith.mulf %4, %5 : vector<1x128xf32>
    %7 = vector.extract_strided_slice %3 {offsets = [1, 0], sizes = [1, 128], strides = [1, 1]} : vector<2x128xf32> to vector<1x128xf32>
    %cst_7 = arith.constant 7.812500e-03 : f32
    %8 = vector.broadcast %cst_7 : f32 to vector<1x128xf32>
    %9 = arith.mulf %7, %8 : vector<1x128xf32>
    %10 = arith.mulf %6, %6 : vector<1x128xf32>
    %11 = arith.subf %9, %10 : vector<1x128xf32>
    %cst_8 = arith.constant 0.000000e+00 : f32
    %12 = vector.broadcast %cst_8 : f32 to vector<1x128xf32>
    %13 = arith.maximumf %11, %12 : vector<1x128xf32>
    %cst_9 = arith.constant 9.99999974E-6 : f32
    %14 = vector.broadcast %cst_9 : f32 to vector<1x128xf32>
    %15 = arith.addf %13, %14 : vector<1x128xf32>
    %16 = math.rsqrt %15 : vector<1x128xf32>
    %17 = arith.mulf %1, %16 : vector<1x128xf32>
    %18 = arith.mulf %6, %17 : vector<1x128xf32>
    %19 = arith.subf %2, %18 : vector<1x128xf32>
    %c0_10 = arith.constant 0 : index
    %c0_11 = arith.constant 0 : index
    %20 = vector.load %arg4[%c0_10, %c0_11] : memref<64x128xbf16, #tpu.memory_space<vmem>>, vector<64x128xbf16>
    %21 = arith.extf %20 : vector<64x128xbf16> to vector<64x128xf32>
    %22 = vector.broadcast %17 : vector<1x128xf32> to vector<64x128xf32>
    %23 = arith.mulf %21, %22 : vector<64x128xf32>
    %24 = vector.broadcast %19 : vector<1x128xf32> to vector<64x128xf32>
    %25 = arith.addf %23, %24 : vector<64x128xf32>
    %cst_12 = arith.constant 0.000000e+00 : f32
    %26 = vector.broadcast %cst_12 : f32 to vector<64x128xf32>
    %27 = arith.maximumf %25, %26 : vector<64x128xf32>
    %28 = tpu.iota {dimensions = array<i32: 0>} : vector<64x1xi32>
    %c3_i32 = arith.constant 3 : i32
    %29 = vector.broadcast %c3_i32 : i32 to vector<64x1xi32>
    %30 = arith.shrsi %28, %29 : vector<64x1xi32>
    %c7_i32 = arith.constant 7 : i32
    %31 = vector.broadcast %c7_i32 : i32 to vector<64x1xi32>
    %32 = arith.andi %30, %31 : vector<64x1xi32>
    %c7_i32_13 = arith.constant 7 : i32
    %33 = vector.broadcast %c7_i32_13 : i32 to vector<64x1xi32>
    %34 = arith.andi %28, %33 : vector<64x1xi32>
    %c1_i32 = arith.constant 1 : i32
    %35 = vector.broadcast %c1_i32 : i32 to vector<64x1xi32>
    %36 = arith.cmpi sge, %32, %35 : vector<64x1xi32>
    %c7_i32_14 = arith.constant 7 : i32
    %37 = vector.broadcast %c7_i32_14 : i32 to vector<64x1xi32>
    %38 = arith.cmpi slt, %32, %37 : vector<64x1xi32>
    %c1_i32_15 = arith.constant 1 : i32
    %39 = vector.broadcast %c1_i32_15 : i32 to vector<64x1xi32>
    %40 = arith.cmpi sge, %34, %39 : vector<64x1xi32>
    %c7_i32_16 = arith.constant 7 : i32
    %41 = vector.broadcast %c7_i32_16 : i32 to vector<64x1xi32>
    %42 = arith.cmpi slt, %34, %41 : vector<64x1xi32>
    %c9_i32 = arith.constant 9 : i32
    %43 = tpu.dynamic_rotate %27 by %c9_i32 dim 0 : vector<64x128xf32>, i32 -> vector<64x128xf32>
    %44 = arith.andi %36, %40 : vector<64x1xi1>
    %45 = arith.extui %44 : vector<64x1xi1> to vector<64x1xi32>
    %46 = arith.sitofp %45 : vector<64x1xi32> to vector<64x1xf32>
    %47 = vector.broadcast %46 : vector<64x1xf32> to vector<64x128xf32>
    %48 = arith.mulf %43, %47 : vector<64x128xf32>
    %49 = arith.truncf %48 : vector<64x128xf32> to vector<64x128xbf16>
    %c8_i32 = arith.constant 8 : i32
    %50 = tpu.dynamic_rotate %27 by %c8_i32 dim 0 : vector<64x128xf32>, i32 -> vector<64x128xf32>
    %51 = arith.extui %36 : vector<64x1xi1> to vector<64x1xi32>
    %52 = arith.sitofp %51 : vector<64x1xi32> to vector<64x1xf32>
    %53 = vector.broadcast %52 : vector<64x1xf32> to vector<64x128xf32>
    %54 = arith.mulf %50, %53 : vector<64x128xf32>
    %55 = arith.truncf %54 : vector<64x128xf32> to vector<64x128xbf16>
    %c7_i32_17 = arith.constant 7 : i32
    %56 = tpu.dynamic_rotate %27 by %c7_i32_17 dim 0 : vector<64x128xf32>, i32 -> vector<64x128xf32>
    %57 = arith.andi %36, %42 : vector<64x1xi1>
    %58 = arith.extui %57 : vector<64x1xi1> to vector<64x1xi32>
    %59 = arith.sitofp %58 : vector<64x1xi32> to vector<64x1xf32>
    %60 = vector.broadcast %59 : vector<64x1xf32> to vector<64x128xf32>
    %61 = arith.mulf %56, %60 : vector<64x128xf32>
    %62 = arith.truncf %61 : vector<64x128xf32> to vector<64x128xbf16>
    %c1_i32_18 = arith.constant 1 : i32
    %63 = tpu.dynamic_rotate %27 by %c1_i32_18 dim 0 : vector<64x128xf32>, i32 -> vector<64x128xf32>
    %64 = arith.extui %40 : vector<64x1xi1> to vector<64x1xi32>
    %65 = arith.sitofp %64 : vector<64x1xi32> to vector<64x1xf32>
    %66 = vector.broadcast %65 : vector<64x1xf32> to vector<64x128xf32>
    %67 = arith.mulf %63, %66 : vector<64x128xf32>
    %68 = arith.truncf %67 : vector<64x128xf32> to vector<64x128xbf16>
    %69 = arith.truncf %27 : vector<64x128xf32> to vector<64x128xbf16>
    %c63_i32 = arith.constant 63 : i32
    %70 = tpu.dynamic_rotate %27 by %c63_i32 dim 0 : vector<64x128xf32>, i32 -> vector<64x128xf32>
    %71 = arith.extui %42 : vector<64x1xi1> to vector<64x1xi32>
    %72 = arith.sitofp %71 : vector<64x1xi32> to vector<64x1xf32>
    %73 = vector.broadcast %72 : vector<64x1xf32> to vector<64x128xf32>
    %74 = arith.mulf %70, %73 : vector<64x128xf32>
    %75 = arith.truncf %74 : vector<64x128xf32> to vector<64x128xbf16>
    %c57_i32 = arith.constant 57 : i32
    %76 = tpu.dynamic_rotate %27 by %c57_i32 dim 0 : vector<64x128xf32>, i32 -> vector<64x128xf32>
    %77 = arith.andi %38, %40 : vector<64x1xi1>
    %78 = arith.extui %77 : vector<64x1xi1> to vector<64x1xi32>
    %79 = arith.sitofp %78 : vector<64x1xi32> to vector<64x1xf32>
    %80 = vector.broadcast %79 : vector<64x1xf32> to vector<64x128xf32>
    %81 = arith.mulf %76, %80 : vector<64x128xf32>
    %82 = arith.truncf %81 : vector<64x128xf32> to vector<64x128xbf16>
    %c56_i32 = arith.constant 56 : i32
    %83 = tpu.dynamic_rotate %27 by %c56_i32 dim 0 : vector<64x128xf32>, i32 -> vector<64x128xf32>
    %84 = arith.extui %38 : vector<64x1xi1> to vector<64x1xi32>
    %85 = arith.sitofp %84 : vector<64x1xi32> to vector<64x1xf32>
    %86 = vector.broadcast %85 : vector<64x1xf32> to vector<64x128xf32>
    %87 = arith.mulf %83, %86 : vector<64x128xf32>
    %88 = arith.truncf %87 : vector<64x128xf32> to vector<64x128xbf16>
    %c55_i32 = arith.constant 55 : i32
    %89 = tpu.dynamic_rotate %27 by %c55_i32 dim 0 : vector<64x128xf32>, i32 -> vector<64x128xf32>
    %90 = arith.andi %38, %42 : vector<64x1xi1>
    %91 = arith.extui %90 : vector<64x1xi1> to vector<64x1xi32>
    %92 = arith.sitofp %91 : vector<64x1xi32> to vector<64x1xf32>
    %93 = vector.broadcast %92 : vector<64x1xf32> to vector<64x128xf32>
    %94 = arith.mulf %89, %93 : vector<64x128xf32>
    %95 = arith.truncf %94 : vector<64x128xf32> to vector<64x128xbf16>
    %96 = tpu.concatenate %49, %55, %62, %68, %69, %75, %82, %88, %95 in 1 : vector<64x128xbf16>, vector<64x128xbf16>, vector<64x128xbf16>, vector<64x128xbf16>, vector<64x128xbf16>, vector<64x128xbf16>, vector<64x128xbf16>, vector<64x128xbf16>, vector<64x128xbf16> -> vector<64x1152xbf16>
    %c0_19 = arith.constant 0 : index
    %c0_20 = arith.constant 0 : index
    %97 = vector.load %arg5[%c0_19, %c0_20] : memref<1152x128xbf16, #tpu.memory_space<vmem>>, vector<1152x128xbf16>
    %cst_21 = arith.constant dense<0.000000e+00> : vector<64x128xf32>
    %98 = tpu.matmul %96, %97, %cst_21 {dimension_numbers = #tpu.dot_dimension_numbers<[1], [0], [0], [1], [0, 0, 1, 1], [], []>} : vector<64x1152xbf16>, vector<1152x128xbf16>, vector<64x128xf32> -> vector<64x128xf32>
    %99 = arith.truncf %98 : vector<64x128xf32> to vector<64x128xbf16>
    %c0_22 = arith.constant 0 : index
    %c0_23 = arith.constant 0 : index
    %100 = vector.load %arg6[%c0_22, %c0_23] : memref<64x128xbf16, #tpu.memory_space<vmem>>, vector<64x128xbf16>
    tpu.vector_store %arg6[%c0_22, %c0_23], %99 {strides = array<i32>} : memref<64x128xbf16, #tpu.memory_space<vmem>>, vector<64x128xbf16>,
    %cst_24 = arith.constant dense<0.000000e+00> : vector<128xf32>
    %101 = vector.multi_reduction <add>, %98, %cst_24 [0] : vector<64x128xf32> to vector<128xf32>
    %102 = vector.shape_cast %101 : vector<128xf32> to vector<1x128xf32>
    %103 = arith.mulf %98, %98 : vector<64x128xf32>
    %cst_25 = arith.constant dense<0.000000e+00> : vector<128xf32>
    %104 = vector.multi_reduction <add>, %103, %cst_25 [0] : vector<64x128xf32> to vector<128xf32>
    %105 = vector.shape_cast %104 : vector<128xf32> to vector<1x128xf32>
    %106 = tpu.concatenate %102, %105 in 0 : vector<1x128xf32>, vector<1x128xf32> -> vector<2x128xf32>
    %c0_26 = arith.constant 0 : index
    %c0_27 = arith.constant 0 : index
    %c0_28 = arith.constant 0 : index
    %107 = vector.load %arg7[%c0_26, %c0_27, %c0_28] : memref<1x2x128xf32, #tpu.memory_space<vmem>>, vector<1x2x128xf32>
    %108 = vector.shape_cast %107 : vector<1x2x128xf32> to vector<2x128xf32>
    %109 = vector.shape_cast %106 : vector<2x128xf32> to vector<1x2x128xf32>
    tpu.vector_store %arg7[%c0_26, %c0_27, %c0_28], %109 {strides = array<i32>} : memref<1x2x128xf32, #tpu.memory_space<vmem>>, vector<1x2x128xf32>,
    return
  }
  func.func @transform_0(%arg0: i32) -> (i32, i32, i32) {
    %c0_i32 = arith.constant 0 : i32
    %c0_i32_0 = arith.constant 0 : i32
    %c0_i32_1 = arith.constant 0 : i32
    %c0_i32_2 = arith.constant 0 : i32
    return %c0_i32, %c0_i32_0, %c0_i32_1 : i32, i32, i32
  }
  func.func @transform_1(%arg0: i32) -> (i32, i32) {
    %c0_i32 = arith.constant 0 : i32
    %c0_i32_0 = arith.constant 0 : i32
    %c0_i32_1 = arith.constant 0 : i32
    return %c0_i32, %c0_i32_0 : i32, i32
  }
  func.func @transform_2(%arg0: i32) -> (i32, i32) {
    %c0_i32 = arith.constant 0 : i32
    %c0_i32_0 = arith.constant 0 : i32
    %c0_i32_1 = arith.constant 0 : i32
    return %c0_i32, %c0_i32_0 : i32, i32
  }
  func.func @transform_3(%arg0: i32) -> (i32, i32) {
    %c0_i32 = arith.constant 0 : i32
    %c0_i32_0 = arith.constant 0 : i32
    return %arg0, %c0_i32 : i32, i32
  }
  func.func @transform_4(%arg0: i32) -> (i32, i32) {
    %c0_i32 = arith.constant 0 : i32
    %c0_i32_0 = arith.constant 0 : i32
    %c0_i32_1 = arith.constant 0 : i32
    return %c0_i32, %c0_i32_0 : i32, i32
  }
  func.func @transform_5(%arg0: i32) -> (i32, i32) {
    %c0_i32 = arith.constant 0 : i32
    %c0_i32_0 = arith.constant 0 : i32
    return %arg0, %c0_i32 : i32, i32
  }
  func.func @transform_6(%arg0: i32) -> (i32, i32, i32) {
    %c0_i32 = arith.constant 0 : i32
    %c0_i32_0 = arith.constant 0 : i32
    %c0_i32_1 = arith.constant 0 : i32
    return %arg0, %c0_i32, %c0_i32_0 : i32, i32, i32
  }
}

module attributes {stable_mosaic.version = 11 : i64} {
  func.func @_bn_relu_conv1x1_stats_kernel(%arg0: i32, %arg1: memref<2x2x128xf32, #tpu.memory_space<vmem>>, %arg2: memref<1x128xf32, #tpu.memory_space<vmem>>, %arg3: memref<1x128xf32, #tpu.memory_space<vmem>>, %arg4: memref<64x128xbf16, #tpu.memory_space<vmem>>, %arg5: memref<128x128xbf16, #tpu.memory_space<vmem>>, %arg6: memref<64x128xbf16, #tpu.memory_space<vmem>>, %arg7: memref<1x2x128xf32, #tpu.memory_space<vmem>>) attributes {dimension_semantics = [#tpu.dimension_semantics<parallel>], iteration_bounds = array<i64: 2>, scalar_prefetch = 0 : i64, scratch_operands = 0 : i64, tpu.core_type = #tpu.core_type<tc>, window_params = [{pipeline_mode = #tpu.pipeline_mode<synchronous>, transform_indices = @transform_0, window_bounds = array<i64: 2, 2, 128>}, {pipeline_mode = #tpu.pipeline_mode<synchronous>, transform_indices = @transform_1, window_bounds = array<i64: 1, 128>}, {pipeline_mode = #tpu.pipeline_mode<synchronous>, transform_indices = @transform_2, window_bounds = array<i64: 1, 128>}, {transform_indices = @transform_3, window_bounds = array<i64: 64, 128>}, {pipeline_mode = #tpu.pipeline_mode<synchronous>, transform_indices = @transform_4, window_bounds = array<i64: 128, 128>}, {transform_indices = @transform_5, window_bounds = array<i64: 64, 128>}, {transform_indices = @transform_6, window_bounds = array<i64: 1, 2, 128>}]} {
    %c0 = arith.constant 0 : index
    %c0_0 = arith.constant 0 : index
    %c0_1 = arith.constant 0 : index
    %0 = vector.load %arg1[%c0, %c0_0, %c0_1] : memref<2x2x128xf32, #tpu.memory_space<vmem>>, vector<2x2x128xf32>
    %c0_2 = arith.constant 0 : index
    %c0_3 = arith.constant 0 : index
    %1 = vector.load %arg2[%c0_2, %c0_3] : memref<1x128xf32, #tpu.memory_space<vmem>>, vector<1x128xf32>
    %c0_4 = arith.constant 0 : index
    %c0_5 = arith.constant 0 : index
    %2 = vector.load %arg3[%c0_4, %c0_5] : memref<1x128xf32, #tpu.memory_space<vmem>>, vector<1x128xf32>
    %cst = arith.constant dense<0.000000e+00> : vector<2x128xf32>
    %3 = vector.multi_reduction <add>, %0, %cst [0] : vector<2x2x128xf32> to vector<2x128xf32>
    %4 = vector.extract_strided_slice %3 {offsets = [0, 0], sizes = [1, 128], strides = [1, 1]} : vector<2x128xf32> to vector<1x128xf32>
    %cst_6 = arith.constant 7.812500e-03 : f32
    %5 = vector.broadcast %cst_6 : f32 to vector<1x128xf32>
    %6 = arith.mulf %4, %5 : vector<1x128xf32>
    %7 = vector.extract_strided_slice %3 {offsets = [1, 0], sizes = [1, 128], strides = [1, 1]} : vector<2x128xf32> to vector<1x128xf32>
    %cst_7 = arith.constant 7.812500e-03 : f32
    %8 = vector.broadcast %cst_7 : f32 to vector<1x128xf32>
    %9 = arith.mulf %7, %8 : vector<1x128xf32>
    %10 = arith.mulf %6, %6 : vector<1x128xf32>
    %11 = arith.subf %9, %10 : vector<1x128xf32>
    %cst_8 = arith.constant 0.000000e+00 : f32
    %12 = vector.broadcast %cst_8 : f32 to vector<1x128xf32>
    %13 = arith.maximumf %11, %12 : vector<1x128xf32>
    %cst_9 = arith.constant 9.99999974E-6 : f32
    %14 = vector.broadcast %cst_9 : f32 to vector<1x128xf32>
    %15 = arith.addf %13, %14 : vector<1x128xf32>
    %16 = math.rsqrt %15 : vector<1x128xf32>
    %17 = arith.mulf %1, %16 : vector<1x128xf32>
    %18 = arith.mulf %6, %17 : vector<1x128xf32>
    %19 = arith.subf %2, %18 : vector<1x128xf32>
    %c0_10 = arith.constant 0 : index
    %c0_11 = arith.constant 0 : index
    %20 = vector.load %arg4[%c0_10, %c0_11] : memref<64x128xbf16, #tpu.memory_space<vmem>>, vector<64x128xbf16>
    %21 = arith.extf %20 : vector<64x128xbf16> to vector<64x128xf32>
    %22 = vector.broadcast %17 : vector<1x128xf32> to vector<64x128xf32>
    %23 = arith.mulf %21, %22 : vector<64x128xf32>
    %24 = vector.broadcast %19 : vector<1x128xf32> to vector<64x128xf32>
    %25 = arith.addf %23, %24 : vector<64x128xf32>
    %cst_12 = arith.constant 0.000000e+00 : f32
    %26 = vector.broadcast %cst_12 : f32 to vector<64x128xf32>
    %27 = arith.maximumf %25, %26 : vector<64x128xf32>
    %28 = arith.truncf %27 : vector<64x128xf32> to vector<64x128xbf16>
    %c0_13 = arith.constant 0 : index
    %c0_14 = arith.constant 0 : index
    %29 = vector.load %arg5[%c0_13, %c0_14] : memref<128x128xbf16, #tpu.memory_space<vmem>>, vector<128x128xbf16>
    %cst_15 = arith.constant dense<0.000000e+00> : vector<64x128xf32>
    %30 = tpu.matmul %28, %29, %cst_15 {dimension_numbers = #tpu.dot_dimension_numbers<[1], [0], [0], [1], [0, 0, 1, 1], [], []>} : vector<64x128xbf16>, vector<128x128xbf16>, vector<64x128xf32> -> vector<64x128xf32>
    %31 = arith.truncf %30 : vector<64x128xf32> to vector<64x128xbf16>
    %c0_16 = arith.constant 0 : index
    %c0_17 = arith.constant 0 : index
    %32 = vector.load %arg6[%c0_16, %c0_17] : memref<64x128xbf16, #tpu.memory_space<vmem>>, vector<64x128xbf16>
    tpu.vector_store %arg6[%c0_16, %c0_17], %31 {strides = array<i32>} : memref<64x128xbf16, #tpu.memory_space<vmem>>, vector<64x128xbf16>,
    %cst_18 = arith.constant dense<0.000000e+00> : vector<128xf32>
    %33 = vector.multi_reduction <add>, %30, %cst_18 [0] : vector<64x128xf32> to vector<128xf32>
    %34 = vector.shape_cast %33 : vector<128xf32> to vector<1x128xf32>
    %35 = arith.mulf %30, %30 : vector<64x128xf32>
    %cst_19 = arith.constant dense<0.000000e+00> : vector<128xf32>
    %36 = vector.multi_reduction <add>, %35, %cst_19 [0] : vector<64x128xf32> to vector<128xf32>
    %37 = vector.shape_cast %36 : vector<128xf32> to vector<1x128xf32>
    %38 = tpu.concatenate %34, %37 in 0 : vector<1x128xf32>, vector<1x128xf32> -> vector<2x128xf32>
    %c0_20 = arith.constant 0 : index
    %c0_21 = arith.constant 0 : index
    %c0_22 = arith.constant 0 : index
    %39 = vector.load %arg7[%c0_20, %c0_21, %c0_22] : memref<1x2x128xf32, #tpu.memory_space<vmem>>, vector<1x2x128xf32>
    %40 = vector.shape_cast %39 : vector<1x2x128xf32> to vector<2x128xf32>
    %41 = vector.shape_cast %38 : vector<2x128xf32> to vector<1x2x128xf32>
    tpu.vector_store %arg7[%c0_20, %c0_21, %c0_22], %41 {strides = array<i32>} : memref<1x2x128xf32, #tpu.memory_space<vmem>>, vector<1x2x128xf32>,
    return
  }
  func.func @transform_0(%arg0: i32) -> (i32, i32, i32) {
    %c0_i32 = arith.constant 0 : i32
    %c0_i32_0 = arith.constant 0 : i32
    %c0_i32_1 = arith.constant 0 : i32
    %c0_i32_2 = arith.constant 0 : i32
    return %c0_i32, %c0_i32_0, %c0_i32_1 : i32, i32, i32
  }
  func.func @transform_1(%arg0: i32) -> (i32, i32) {
    %c0_i32 = arith.constant 0 : i32
    %c0_i32_0 = arith.constant 0 : i32
    %c0_i32_1 = arith.constant 0 : i32
    return %c0_i32, %c0_i32_0 : i32, i32
  }
  func.func @transform_2(%arg0: i32) -> (i32, i32) {
    %c0_i32 = arith.constant 0 : i32
    %c0_i32_0 = arith.constant 0 : i32
    %c0_i32_1 = arith.constant 0 : i32
    return %c0_i32, %c0_i32_0 : i32, i32
  }
  func.func @transform_3(%arg0: i32) -> (i32, i32) {
    %c0_i32 = arith.constant 0 : i32
    %c0_i32_0 = arith.constant 0 : i32
    return %arg0, %c0_i32 : i32, i32
  }
  func.func @transform_4(%arg0: i32) -> (i32, i32) {
    %c0_i32 = arith.constant 0 : i32
    %c0_i32_0 = arith.constant 0 : i32
    %c0_i32_1 = arith.constant 0 : i32
    return %c0_i32, %c0_i32_0 : i32, i32
  }
  func.func @transform_5(%arg0: i32) -> (i32, i32) {
    %c0_i32 = arith.constant 0 : i32
    %c0_i32_0 = arith.constant 0 : i32
    return %arg0, %c0_i32 : i32, i32
  }
  func.func @transform_6(%arg0: i32) -> (i32, i32, i32) {
    %c0_i32 = arith.constant 0 : i32
    %c0_i32_0 = arith.constant 0 : i32
    %c0_i32_1 = arith.constant 0 : i32
    return %arg0, %c0_i32, %c0_i32_0 : i32, i32, i32
  }
}

module attributes {stable_mosaic.version = 11 : i64} {
  func.func @_bn_pool_excite_proj_kernel(%arg0: i32, %arg1: memref<2x2x128xf32, #tpu.memory_space<vmem>>, %arg2: memref<1x128xf32, #tpu.memory_space<vmem>>, %arg3: memref<1x128xf32, #tpu.memory_space<vmem>>, %arg4: memref<1x64x128xbf16, #tpu.memory_space<vmem>>, %arg5: memref<64x128xf32, #tpu.memory_space<vmem>>, %arg6: memref<128x128xf32, #tpu.memory_space<vmem>>, %arg7: memref<128x128xf32, #tpu.memory_space<vmem>>, %arg8: memref<128x128xbf16, #tpu.memory_space<vmem>>, %arg9: memref<1x128xf32, #tpu.memory_space<vmem>>, %arg10: memref<1x64x128xbf16, #tpu.memory_space<vmem>>, %arg11: memref<1x64x128xf32, #tpu.memory_space<vmem>>) attributes {dimension_semantics = [#tpu.dimension_semantics<parallel>], iteration_bounds = array<i64: 2>, scalar_prefetch = 0 : i64, scratch_operands = 0 : i64, tpu.core_type = #tpu.core_type<tc>, window_params = [{pipeline_mode = #tpu.pipeline_mode<synchronous>, transform_indices = @transform_0, window_bounds = array<i64: 2, 2, 128>}, {pipeline_mode = #tpu.pipeline_mode<synchronous>, transform_indices = @transform_1, window_bounds = array<i64: 1, 128>}, {pipeline_mode = #tpu.pipeline_mode<synchronous>, transform_indices = @transform_2, window_bounds = array<i64: 1, 128>}, {transform_indices = @transform_3, window_bounds = array<i64: 1, 64, 128>}, {pipeline_mode = #tpu.pipeline_mode<synchronous>, transform_indices = @transform_4, window_bounds = array<i64: 64, 128>}, {pipeline_mode = #tpu.pipeline_mode<synchronous>, transform_indices = @transform_5, window_bounds = array<i64: 128, 128>}, {pipeline_mode = #tpu.pipeline_mode<synchronous>, transform_indices = @transform_6, window_bounds = array<i64: 128, 128>}, {pipeline_mode = #tpu.pipeline_mode<synchronous>, transform_indices = @transform_7, window_bounds = array<i64: 128, 128>}, {pipeline_mode = #tpu.pipeline_mode<synchronous>, transform_indices = @transform_8, window_bounds = array<i64: 1, 128>}, {transform_indices = @transform_9, window_bounds = array<i64: 1, 64, 128>}, {transform_indices = @transform_10, window_bounds = array<i64: 1, 64, 128>}]} {
    %c0 = arith.constant 0 : index
    %c0_0 = arith.constant 0 : index
    %c0_1 = arith.constant 0 : index
    %0 = vector.load %arg1[%c0, %c0_0, %c0_1] : memref<2x2x128xf32, #tpu.memory_space<vmem>>, vector<2x2x128xf32>
    %c0_2 = arith.constant 0 : index
    %c0_3 = arith.constant 0 : index
    %1 = vector.load %arg2[%c0_2, %c0_3] : memref<1x128xf32, #tpu.memory_space<vmem>>, vector<1x128xf32>
    %c0_4 = arith.constant 0 : index
    %c0_5 = arith.constant 0 : index
    %2 = vector.load %arg3[%c0_4, %c0_5] : memref<1x128xf32, #tpu.memory_space<vmem>>, vector<1x128xf32>
    %cst = arith.constant dense<0.000000e+00> : vector<2x128xf32>
    %3 = vector.multi_reduction <add>, %0, %cst [0] : vector<2x2x128xf32> to vector<2x128xf32>
    %4 = vector.extract_strided_slice %3 {offsets = [0, 0], sizes = [1, 128], strides = [1, 1]} : vector<2x128xf32> to vector<1x128xf32>
    %cst_6 = arith.constant 7.812500e-03 : f32
    %5 = vector.broadcast %cst_6 : f32 to vector<1x128xf32>
    %6 = arith.mulf %4, %5 : vector<1x128xf32>
    %7 = vector.extract_strided_slice %3 {offsets = [1, 0], sizes = [1, 128], strides = [1, 1]} : vector<2x128xf32> to vector<1x128xf32>
    %cst_7 = arith.constant 7.812500e-03 : f32
    %8 = vector.broadcast %cst_7 : f32 to vector<1x128xf32>
    %9 = arith.mulf %7, %8 : vector<1x128xf32>
    %10 = arith.mulf %6, %6 : vector<1x128xf32>
    %11 = arith.subf %9, %10 : vector<1x128xf32>
    %cst_8 = arith.constant 0.000000e+00 : f32
    %12 = vector.broadcast %cst_8 : f32 to vector<1x128xf32>
    %13 = arith.maximumf %11, %12 : vector<1x128xf32>
    %cst_9 = arith.constant 9.99999974E-6 : f32
    %14 = vector.broadcast %cst_9 : f32 to vector<1x128xf32>
    %15 = arith.addf %13, %14 : vector<1x128xf32>
    %16 = math.rsqrt %15 : vector<1x128xf32>
    %17 = arith.mulf %1, %16 : vector<1x128xf32>
    %18 = arith.mulf %6, %17 : vector<1x128xf32>
    %19 = arith.subf %2, %18 : vector<1x128xf32>
    %c0_10 = arith.constant 0 : index
    %c0_11 = arith.constant 0 : index
    %c0_12 = arith.constant 0 : index
    %20 = vector.load %arg4[%c0_10, %c0_11, %c0_12] : memref<1x64x128xbf16, #tpu.memory_space<vmem>>, vector<1x64x128xbf16>
    %21 = arith.extf %20 : vector<1x64x128xbf16> to vector<1x64x128xf32>
    %22 = vector.shape_cast %17 : vector<1x128xf32> to vector<1x1x128xf32>
    %23 = vector.broadcast %22 : vector<1x1x128xf32> to vector<1x64x128xf32>
    %24 = arith.mulf %21, %23 : vector<1x64x128xf32>
    %25 = vector.shape_cast %19 : vector<1x128xf32> to vector<1x1x128xf32>
    %26 = vector.broadcast %25 : vector<1x1x128xf32> to vector<1x64x128xf32>
    %27 = arith.addf %24, %26 : vector<1x64x128xf32>
    %c0_13 = arith.constant 0 : index
    %c0_14 = arith.constant 0 : index
    %28 = vector.load %arg5[%c0_13, %c0_14] : memref<64x128xf32, #tpu.memory_space<vmem>>, vector<64x128xf32>
    %29 = vector.shape_cast %28 : vector<64x128xf32> to vector<1x64x128xf32>
    %30 = arith.mulf %29, %27 : vector<1x64x128xf32>
    %cst_15 = arith.constant dense<0.000000e+00> : vector<1x128xf32>
    %31 = vector.multi_reduction <add>, %30, %cst_15 [1] : vector<1x64x128xf32> to vector<1x128xf32>
    %c0_16 = arith.constant 0 : index
    %c0_17 = arith.constant 0 : index
    %32 = vector.load %arg6[%c0_16, %c0_17] : memref<128x128xf32, #tpu.memory_space<vmem>>, vector<128x128xf32>
    %cst_18 = arith.constant dense<0.000000e+00> : vector<1x128xf32>
    %33 = tpu.matmul %31, %32, %cst_18 {dimension_numbers = #tpu.dot_dimension_numbers<[1], [0], [0], [1], [0, 0, 1, 1], [], []>} : vector<1x128xf32>, vector<128x128xf32>, vector<1x128xf32> -> vector<1x128xf32>
    %cst_19 = arith.constant 0.000000e+00 : f32
    %34 = vector.broadcast %cst_19 : f32 to vector<1x128xf32>
    %35 = arith.maximumf %33, %34 : vector<1x128xf32>
    %c0_20 = arith.constant 0 : index
    %c0_21 = arith.constant 0 : index
    %36 = vector.load %arg7[%c0_20, %c0_21] : memref<128x128xf32, #tpu.memory_space<vmem>>, vector<128x128xf32>
    %cst_22 = arith.constant dense<0.000000e+00> : vector<1x128xf32>
    %37 = tpu.matmul %35, %36, %cst_22 {dimension_numbers = #tpu.dot_dimension_numbers<[1], [0], [0], [1], [0, 0, 1, 1], [], []>} : vector<1x128xf32>, vector<128x128xf32>, vector<1x128xf32> -> vector<1x128xf32>
    %38 = arith.negf %37 : vector<1x128xf32>
    %39 = math.exp %38 : vector<1x128xf32>
    %cst_23 = arith.constant 1.000000e+00 : f32
    %40 = vector.broadcast %cst_23 : f32 to vector<1x128xf32>
    %41 = arith.addf %40, %39 : vector<1x128xf32>
    %42 = arith.divf %40, %41 : vector<1x128xf32>
    %43 = vector.shape_cast %42 : vector<1x128xf32> to vector<1x1x128xf32>
    %44 = vector.broadcast %43 : vector<1x1x128xf32> to vector<1x64x128xf32>
    %45 = arith.mulf %27, %44 : vector<1x64x128xf32>
    %46 = arith.truncf %45 : vector<1x64x128xf32> to vector<1x64x128xbf16>
    %47 = vector.shape_cast %46 : vector<1x64x128xbf16> to vector<64x128xbf16>
    %c0_24 = arith.constant 0 : index
    %c0_25 = arith.constant 0 : index
    %48 = vector.load %arg8[%c0_24, %c0_25] : memref<128x128xbf16, #tpu.memory_space<vmem>>, vector<128x128xbf16>
    %cst_26 = arith.constant dense<0.000000e+00> : vector<64x128xf32>
    %49 = tpu.matmul %47, %48, %cst_26 {dimension_numbers = #tpu.dot_dimension_numbers<[1], [0], [0], [1], [0, 0, 1, 1], [], []>} : vector<64x128xbf16>, vector<128x128xbf16>, vector<64x128xf32> -> vector<64x128xf32>
    %50 = vector.shape_cast %49 : vector<64x128xf32> to vector<1x64x128xf32>
    %c0_27 = arith.constant 0 : index
    %c0_28 = arith.constant 0 : index
    %51 = vector.load %arg9[%c0_27, %c0_28] : memref<1x128xf32, #tpu.memory_space<vmem>>, vector<1x128xf32>
    %52 = vector.shape_cast %51 : vector<1x128xf32> to vector<1x1x128xf32>
    %53 = vector.broadcast %52 : vector<1x1x128xf32> to vector<1x64x128xf32>
    %54 = arith.addf %50, %53 : vector<1x64x128xf32>
    %c0_29 = arith.constant 0 : index
    %c0_30 = arith.constant 0 : index
    %c0_31 = arith.constant 0 : index
    %55 = vector.load %arg10[%c0_29, %c0_30, %c0_31] : memref<1x64x128xbf16, #tpu.memory_space<vmem>>, vector<1x64x128xbf16>
    %56 = arith.extf %55 : vector<1x64x128xbf16> to vector<1x64x128xf32>
    %57 = arith.addf %54, %56 : vector<1x64x128xf32>
    %cst_32 = arith.constant 0.000000e+00 : f32
    %58 = vector.broadcast %cst_32 : f32 to vector<1x64x128xf32>
    %59 = arith.maximumf %57, %58 : vector<1x64x128xf32>
    %c0_33 = arith.constant 0 : index
    %c0_34 = arith.constant 0 : index
    %c0_35 = arith.constant 0 : index
    %60 = vector.load %arg11[%c0_33, %c0_34, %c0_35] : memref<1x64x128xf32, #tpu.memory_space<vmem>>, vector<1x64x128xf32>
    tpu.vector_store %arg11[%c0_33, %c0_34, %c0_35], %59 {strides = array<i32>} : memref<1x64x128xf32, #tpu.memory_space<vmem>>, vector<1x64x128xf32>,
    return
  }
  func.func @transform_0(%arg0: i32) -> (i32, i32, i32) {
    %c0_i32 = arith.constant 0 : i32
    %c0_i32_0 = arith.constant 0 : i32
    %c0_i32_1 = arith.constant 0 : i32
    %c0_i32_2 = arith.constant 0 : i32
    return %c0_i32, %c0_i32_0, %c0_i32_1 : i32, i32, i32
  }
  func.func @transform_1(%arg0: i32) -> (i32, i32) {
    %c0_i32 = arith.constant 0 : i32
    %c0_i32_0 = arith.constant 0 : i32
    %c0_i32_1 = arith.constant 0 : i32
    return %c0_i32, %c0_i32_0 : i32, i32
  }
  func.func @transform_2(%arg0: i32) -> (i32, i32) {
    %c0_i32 = arith.constant 0 : i32
    %c0_i32_0 = arith.constant 0 : i32
    %c0_i32_1 = arith.constant 0 : i32
    return %c0_i32, %c0_i32_0 : i32, i32
  }
  func.func @transform_3(%arg0: i32) -> (i32, i32, i32) {
    %c0_i32 = arith.constant 0 : i32
    %c0_i32_0 = arith.constant 0 : i32
    %c0_i32_1 = arith.constant 0 : i32
    return %arg0, %c0_i32, %c0_i32_0 : i32, i32, i32
  }
  func.func @transform_4(%arg0: i32) -> (i32, i32) {
    %c0_i32 = arith.constant 0 : i32
    %c0_i32_0 = arith.constant 0 : i32
    %c0_i32_1 = arith.constant 0 : i32
    return %c0_i32, %c0_i32_0 : i32, i32
  }
  func.func @transform_5(%arg0: i32) -> (i32, i32) {
    %c0_i32 = arith.constant 0 : i32
    %c0_i32_0 = arith.constant 0 : i32
    %c0_i32_1 = arith.constant 0 : i32
    return %c0_i32, %c0_i32_0 : i32, i32
  }
  func.func @transform_6(%arg0: i32) -> (i32, i32) {
    %c0_i32 = arith.constant 0 : i32
    %c0_i32_0 = arith.constant 0 : i32
    %c0_i32_1 = arith.constant 0 : i32
    return %c0_i32, %c0_i32_0 : i32, i32
  }
  func.func @transform_7(%arg0: i32) -> (i32, i32) {
    %c0_i32 = arith.constant 0 : i32
    %c0_i32_0 = arith.constant 0 : i32
    %c0_i32_1 = arith.constant 0 : i32
    return %c0_i32, %c0_i32_0 : i32, i32
  }
  func.func @transform_8(%arg0: i32) -> (i32, i32) {
    %c0_i32 = arith.constant 0 : i32
    %c0_i32_0 = arith.constant 0 : i32
    %c0_i32_1 = arith.constant 0 : i32
    return %c0_i32, %c0_i32_0 : i32, i32
  }
  func.func @transform_9(%arg0: i32) -> (i32, i32, i32) {
    %c0_i32 = arith.constant 0 : i32
    %c0_i32_0 = arith.constant 0 : i32
    %c0_i32_1 = arith.constant 0 : i32
    return %arg0, %c0_i32, %c0_i32_0 : i32, i32, i32
  }
  func.func @transform_10(%arg0: i32) -> (i32, i32, i32) {
    %c0_i32 = arith.constant 0 : i32
    %c0_i32_0 = arith.constant 0 : i32
    %c0_i32_1 = arith.constant 0 : i32
    return %arg0, %c0_i32, %c0_i32_0 : i32, i32, i32
  }
}

</mosaic_0001>

<llo_original>
// kernel: oca1_forward.4
$region0: #{oca1_forward.4}
  #allocation0 [shape = 'u32[]', space=smem, size = 0x4, offset = 0x4, fixed_abs, tag = 'smem constant byte address 0x4 - core index']
  #allocation1 [shape = 'u32[144,128]{1,0:T(1,128)}', space=vmem, size = 0x12000, scoped, tag = 'internal scratch']
  %s0 = inlined_call_operand.vmem [shape: bf16[128,128], index: 0, kind: input, shape index: {}]
  %s1 = inlined_call_operand.vmem [shape: bf16[128,128], index: 1, kind: input, shape index: {}]
  %s2 = inlined_call_operand.vmem [shape: bf16[128,128], index: 2, kind: output, shape index: {0}]
  %s3 = inlined_call_operand.vmem [shape: f32[2,2,128], index: 3, kind: output, shape index: {1}]
  %4 = xla_tuple %s2, %s3
  %s5 = sld [smem:[#allocation0]]
  $region49: #{oca1_forward.4} parent=0
    _
  %s7 = ssub.s32 1, %s5
  %s8 = scalar_select 0, %s7, %s5
  loop: start=0, step=1, limit=4
  $region2: #{oca1_forward.4} parent=0 // loop_pre_header
    _
  $region3: #{oca1_forward.4} parent=0 // loop_header
    %s10 = sphi 0, %s14
    %p11 = scmp.ge.s32.totalorder %s10, 4
    %s20 = sphi 0, %s22
    %s23 = sphi 0, %s20
    %s24 = sphi 0, %s23
    %s40 = sphi 0, %s24
    %s44 = sphi 0, %s44
    %s46 = sphi 0, %s44
    %s47 = sphi 0, %s46
    %s61 = sphi 0, %s47
    %s67 = sphi 0, %s69
    %s70 = sphi 0, %s67
    %s71 = sphi 0, %s70
    %s87 = sphi 0, %s71
    %s93 = sphi 0, %s95
    %s96 = sphi 0, %s93
    %s97 = sphi 0, %s96
    %s113 = sphi 0, %s97
  $region4: #{oca1_forward.4} parent=0 // loop_header_branch
    %13 = sbr.rel (%p11) target = $region8
  $region5: #{oca1_forward.4} parent=0 // loop_body
    %s15 = ssub.s32 %s10, 1
    %s16 = ssub.s32 %s10, 2
    %s17 = sadd.s32 %s10, 1
    %s18 = ssub.s32 %s10, %s17
    %p19 = scmp.eq.s32.totalorder %s18, 0
    %s21 = sadd.s32 %s20, 1
    %s22 = scalar_select %p19, %s20, %s21
    %p25 = pneg %p19
    %p26 = scmp.eq.s32.totalorder %s10, 1
    %p27 = por %p25, %p26
    %p28 = scmp.ne.s32.totalorder %s20, %s23
    %p29 = scmp.eq.s32.totalorder %s10, 0
    %p30 = por %p28, %p29
    %p31 = scmp.ne.s32.totalorder %s20, %s23
    %p32 = scmp.eq.s32.totalorder %s15, 1
    %p33 = por %p31, %p32
    %p34 = scmp.ne.s32.totalorder %s23, %s24
    %p35 = scmp.eq.s32.totalorder %s15, 0
    %p36 = por %p34, %p35
    %p37 = scmp.ne.s32.totalorder %s23, %s24
    %p38 = scmp.eq.s32.totalorder %s16, 1
    %p39 = por %p37, %p38
    %p41 = scmp.ne.s32.totalorder %s24, %s40
    %p42 = scmp.eq.s32.totalorder %s16, 0
    %p43 = por %p41, %p42
    %s45 = sadd.s32 %s44, 1
    %p48 = scmp.eq.s32.totalorder %s10, 1
    %p49 = scmp.ne.s32.totalorder %s44, %s46
    %p50 = scmp.eq.s32.totalorder %s10, 0
    %p51 = por %p49, %p50
    %p52 = scmp.ne.s32.totalorder %s44, %s46
    %p53 = scmp.eq.s32.totalorder %s15, 1
    %p54 = por %p52, %p53
    %p55 = scmp.ne.s32.totalorder %s46, %s47
    %p56 = scmp.eq.s32.totalorder %s15, 0
    %p57 = por %p55, %p56
    %p58 = scmp.ne.s32.totalorder %s46, %s47
    %p59 = scmp.eq.s32.totalorder %s16, 1
    %p60 = por %p58, %p59
    %p62 = scmp.ne.s32.totalorder %s47, %s61
    %p63 = scmp.eq.s32.totalorder %s16, 0
    %p64 = por %p62, %p63
    %s65 = ssub.s32 %s10, %s17
    %p66 = scmp.eq.s32.totalorder %s65, 0
    %s68 = sadd.s32 %s67, 1
    %s69 = scalar_select %p66, %s67, %s68
    %p72 = pneg %p66
    %p73 = scmp.eq.s32.totalorder %s10, 1
    %p74 = por %p72, %p73
    %p75 = scmp.ne.s32.totalorder %s67, %s70
    %p76 = scmp.eq.s32.totalorder %s10, 0
    %p77 = por %p75, %p76
    %p78 = scmp.ne.s32.totalorder %s67, %s70
    %p79 = scmp.eq.s32.totalorder %s15, 1
    %p80 = por %p78, %p79
    %p81 = scmp.ne.s32.totalorder %s70, %s71
    %p82 = scmp.eq.s32.totalorder %s15, 0
    %p83 = por %p81, %p82
    %p84 = scmp.ne.s32.totalorder %s70, %s71
    %p85 = scmp.eq.s32.totalorder %s16, 1
    %p86 = por %p84, %p85
    %p88 = scmp.ne.s32.totalorder %s71, %s87
    %p89 = scmp.eq.s32.totalorder %s16, 0
    %p90 = por %p88, %p89
    %s91 = ssub.s32 %s10, %s17
    %p92 = scmp.eq.s32.totalorder %s91, 0
    %s94 = sadd.s32 %s93, 1
    %s95 = scalar_select %p92, %s93, %s94
    %p98 = pneg %p92
    %p99 = scmp.eq.s32.totalorder %s10, 1
    %p100 = por %p98, %p99
    %p101 = scmp.ne.s32.totalorder %s93, %s96
    %p102 = scmp.eq.s32.totalorder %s10, 0
    %p103 = por %p101, %p102
    %p104 = scmp.ne.s32.totalorder %s93, %s96
    %p105 = scmp.eq.s32.totalorder %s15, 1
    %p106 = por %p104, %p105
    %p107 = scmp.ne.s32.totalorder %s96, %s97
    %p108 = scmp.eq.s32.totalorder %s15, 0
    %p109 = por %p107, %p108
    %p110 = scmp.ne.s32.totalorder %s96, %s97
    %p111 = scmp.eq.s32.totalorder %s16, 1
    %p112 = por %p110, %p111
    %p114 = scmp.ne.s32.totalorder %s97, %s113
    %p115 = scmp.eq.s32.totalorder %s16, 0
    %p116 = por %p114, %p115
    %p117 = scmp.le.s32.totalorder 1, %s10
    %p118 = scmp.lt.s32.totalorder %s10, 3
    %p119 = pnand %p117, %p118
    %p120 = pneg %p119
    // Predicated region
    $region9: #{oca1_forward.4} parent=5 // pred_check
      _
    $region10: #{oca1_forward.4} parent=5 // pred_check_branch
      %122 = sbr.rel (%p119) target = $region12
    $region11: #{oca1_forward.4} parent=5 // pred_region
      %s123 = ssub.s32 %s10, 1
      // Predicated region
      $region13: #{oca1_forward.4} parent=11 // pred_check
        %p124 = pneg %p57
      $region14: #{oca1_forward.4} parent=11 // pred_check_branch
        %126 = sbr.rel (%p124) target = $region16
      $region15: #{oca1_forward.4} parent=11 // pred_region
        _
      $region16: #{oca1_forward.4} parent=11 // pred_fallthru
        _
    $region12: #{oca1_forward.4} parent=5 // pred_fallthru
      _
    %p127 = scmp.lt.s32.totalorder %s10, 2
    // Predicated region
    $region17: #{oca1_forward.4} parent=5 // pred_check
      %p128 = pneg %p127
    $region18: #{oca1_forward.4} parent=5 // pred_check_branch
      %130 = sbr.rel (%p128) target = $region20
    $region19: #{oca1_forward.4} parent=5 // pred_region
      // Predicated region
      $region21: #{oca1_forward.4} parent=19 // pred_check
        %p131 = pneg %p30
      $region22: #{oca1_forward.4} parent=19 // pred_check_branch
        %133 = sbr.rel (%p131) target = $region24
      $region23: #{oca1_forward.4} parent=19 // pred_region
        %s134 = smul.u32 8, %s10
        %p135 = scmp.lt.s32.totalorder %s134, 15
        %s136 = scalar_select %p135, %s134, 15
        %s137 = smul.addr %s136, 4
        %s138 = scalar_lea.vmem %s0, %s137
        %s139 = smul.u32 8, %s10
      $region24: #{oca1_forward.4} parent=19 // pred_fallthru
        _
    $region20: #{oca1_forward.4} parent=5 // pred_fallthru
      _
    %p140 = scmp.le.s32.totalorder 1, %s10
    %p141 = scmp.lt.s32.totalorder %s10, 3
    %p142 = pnand %p140, %p141
    %p143 = pneg %p142
    // Predicated region
    $region25: #{oca1_forward.4} parent=5 // pred_check
      _
    $region26: #{oca1_forward.4} parent=5 // pred_check_branch
      %145 = sbr.rel (%p142) target = $region28
    $region27: #{oca1_forward.4} parent=5 // pred_region
      %s146 = ssub.s32 %s10, 1
      %s147 = smul.u32 8, %s15
      %p148 = scmp.lt.s32.totalorder %s147, 15
      %s149 = scalar_select %p148, %s147, 15
      %s150 = smul.addr %s149, 4
      %s151 = scalar_lea.vmem %s0, %s150
      %p152 = pneg %p36
      %p153 = pneg %p33
      %p154 = pneg %p57
      %p155 = pneg %p54
      %p156 = pneg %p83
      %p157 = pneg %p80
      %s158 = smul.u32 8, %s15
      %p159 = scmp.lt.s32.totalorder %s158, 15
      %s160 = scalar_select %p159, %s158, 15
      %s161 = smul.addr %s160, 4
      %s162 = scalar_lea.vmem %s2, %s161
      %p163 = pneg %p109
      %p164 = pneg %p106
      %p165 = scmp.lt.s32.totalorder %s15, 1
      %s166 = scalar_select %p165, %s15, 1
      %s167 = smul.addr %s166, 2
      %s168 = scalar_lea.vmem %s3, %s167
      %s169 = smul.u32 8, %s15
      %p170 = scmp.lt.s32.totalorder %s169, 15
      %s171 = scalar_select %p170, %s169, 15
      %s172 = smul.addr %s171, 4
      %s173 = scalar_lea.vmem %s0, %s172
      %s174 = smul.u32 8, %s15
      %s175 = smul.u32 8, %s15
      %p176 = scmp.lt.s32.totalorder %s175, 15
      %s177 = scalar_select %p176, %s175, 15
      %s178 = smul.addr %s177, 4
      %s179 = scalar_lea.vmem %s2, %s178
      %s180 = smul.u32 8, %s15
      %p181 = scmp.lt.s32.totalorder %s15, 1
      %s182 = scalar_select %p181, %s15, 1
      %s183 = smul.addr %s182, 2
      %s184 = scalar_lea.vmem %s3, %s183
      %v186 = vld [vmem:[%s173] sm:$0xf]
      %v187 = vld [vmem:[%s173 + $0x4] sm:$0xf]
      %v188 = vld [vmem:[%s173 + $0x8] sm:$0xf]
      %v189 = vld [vmem:[%s173 + $0xc] sm:$0xf]
      %v190 = vld [vmem:[%s173 + $0x10] sm:$0xf]
      %v191 = vld [vmem:[%s173 + $0x14] sm:$0xf]
      %v192 = vld [vmem:[%s173 + $0x18] sm:$0xf]
      %v193 = vld [vmem:[%s173 + $0x1c] sm:$0xf]
      %v194 = vld [vmem:[%s1] sm:$0xf]
      %v195 = vld [vmem:[%s1 + $0x4] sm:$0xf]
      %v196 = vld [vmem:[%s1 + $0x8] sm:$0xf]
      %v197 = vld [vmem:[%s1 + $0xc] sm:$0xf]
      %v198 = vld [vmem:[%s1 + $0x10] sm:$0xf]
      %v199 = vld [vmem:[%s1 + $0x14] sm:$0xf]
      %v200 = vld [vmem:[%s1 + $0x18] sm:$0xf]
      %v201 = vld [vmem:[%s1 + $0x1c] sm:$0xf]
      %v202 = vld [vmem:[%s1 + $0x20] sm:$0xf]
      %v203 = vld [vmem:[%s1 + $0x24] sm:$0xf]
      %v204 = vld [vmem:[%s1 + $0x28] sm:$0xf]
      %v205 = vld [vmem:[%s1 + $0x2c] sm:$0xf]
      %v206 = vld [vmem:[%s1 + $0x30] sm:$0xf]
      %v207 = vld [vmem:[%s1 + $0x34] sm:$0xf]
      %v208 = vld [vmem:[%s1 + $0x38] sm:$0xf]
      %v209 = vld [vmem:[%s1 + $0x3c] sm:$0xf]
      %v218 = vunpack.c.l.b16 %v186
      %v219 = vunpack.c.l.b16 %v187
      %v220 = vunpack.c.l.b16 %v188
      %v221 = vunpack.c.l.b16 %v189
      %v222 = vunpack.c.l.b16 %v190
      %v223 = vunpack.c.l.b16 %v191
      %v224 = vunpack.c.l.b16 %v192
      %v225 = vunpack.c.l.b16 %v193
      %v226 = vpack.c.b16 %v219, %v218
      %v227 = vpack.c.b16 %v221, %v220
      %v228 = vpack.c.b16 %v223, %v222
      %v229 = vpack.c.b16 %v225, %v224
      %v250 = vunpack.c.l.b16 %v194
      %v251 = vunpack.c.l.b16 %v195
      %v252 = vunpack.c.l.b16 %v196
      %v253 = vunpack.c.l.b16 %v197
      %v254 = vunpack.c.l.b16 %v198
      %v255 = vunpack.c.l.b16 %v199
      %v256 = vunpack.c.l.b16 %v200
      %v257 = vunpack.c.l.b16 %v201
      %v258 = vunpack.c.l.b16 %v202
      %v259 = vunpack.c.l.b16 %v203
      %v260 = vunpack.c.l.b16 %v204
      %v261 = vunpack.c.l.b16 %v205
      %v262 = vunpack.c.l.b16 %v206
      %v263 = vunpack.c.l.b16 %v207
      %v264 = vunpack.c.l.b16 %v208
      %v265 = vunpack.c.l.b16 %v209
      %v266 = vpack.c.b16 %v251, %v250
      %v267 = vpack.c.b16 %v253, %v252
      %v268 = vpack.c.b16 %v255, %v254
      %v269 = vpack.c.b16 %v257, %v256
      %v270 = vpack.c.b16 %v259, %v258
      %v271 = vpack.c.b16 %v261, %v260
      %v272 = vpack.c.b16 %v263, %v262
      %v273 = vpack.c.b16 %v265, %v264
      %282 = vmatprep.subr.bf16.mxu0 0
      %283 = vmatpush1.bf16.msra.mxu0 %v266
      %284 = vmatprep.subr.bf16.mxu0 0
      %285 = vmatpush1.bf16.msra.mxu0 %v267
      %286 = vmatprep.subr.bf16.mxu0 0
      %287 = vmatpush1.bf16.msra.mxu0 %v268
      %288 = vmatprep.subr.bf16.mxu0 0
      %289 = vmatpush1.bf16.msra.mxu0 %v269
      %290 = vmatprep.subr.bf16.mxu0 0
      %291 = vmatpush1.bf16.msra.mxu0 %v270
      %292 = vmatprep.subr.bf16.mxu0 0
      %293 = vmatpush1.bf16.msra.mxu0 %v271
      %294 = vmatprep.subr.bf16.mxu0 0
      %295 = vmatpush1.bf16.msra.mxu0 %v272
      %296 = vmatprep.subr.bf16.mxu0 0
      %297 = vmatpush1.bf16.msra.mxu0 %v273
      %298 = vmatprep.subr.bf16.mxu0 0
      %299 = vmatpush1.bf16.msra.mxu0 0
      %300 = vmatprep.subr.bf16.mxu0 0
      %301 = vmatpush1.bf16.msra.mxu0 0
      %302 = vmatprep.subr.bf16.mxu0 0
      %303 = vmatpush1.bf16.msra.mxu0 0
      %304 = vmatprep.subr.bf16.mxu0 0
      %305 = vmatpush1.bf16.msra.mxu0 0
      %306 = vmatprep.subr.bf16.mxu0 0
      %307 = vmatpush1.bf16.msra.mxu0 0
      %308 = vmatprep.subr.bf16.mxu0 0
      %309 = vmatpush1.bf16.msra.mxu0 0
      %310 = vmatprep.subr.bf16.mxu0 0
      %311 = vmatpush1.bf16.msra.mxu0 0
      %312 = vmatprep.subr.bf16.mxu0 0
      %313 = vmatpush1.bf16.msra.mxu0 0
      %314 = vmatprep.mubr.bf16.mxu0 0
      %315 = vmatmul.mubr.bf16.gmra.mrb[0].mxu0 %v226
      %v316 = vpop.f32.mrb[0].mxu0
      %v317 = vadd.f32 0.0, %v316
      %v318 = vpop.f32.mrb[0].mxu0
      %v319 = vpop.f32.mrb[0].mxu0
      %v320 = vadd.f32 0.0, %v319
      %v321 = vpop.f32.mrb[0].mxu0
      %322 = vmatprep.mubr.bf16.mxu0 0
      %323 = vmatmul.mubr.bf16.gmra.mrb[0].mxu0 %v227
      %v324 = vpop.f32.mrb[0].mxu0
      %v325 = vadd.f32 0.0, %v324
      %v326 = vpop.f32.mrb[0].mxu0
      %v327 = vpop.f32.mrb[0].mxu0
      %v328 = vadd.f32 0.0, %v327
      %v329 = vpop.f32.mrb[0].mxu0
      %330 = vmatprep.mubr.bf16.mxu0 0
      %331 = vmatmul.mubr.bf16.gmra.mrb[0].mxu0 %v228
      %v332 = vpop.f32.mrb[0].mxu0
      %v333 = vadd.f32 0.0, %v332
      %v334 = vpop.f32.mrb[0].mxu0
      %v335 = vpop.f32.mrb[0].mxu0
      %v336 = vadd.f32 0.0, %v335
      %v337 = vpop.f32.mrb[0].mxu0
      %338 = vmatprep.mubr.bf16.mxu0 0
      %339 = vmatmul.mubr.bf16.gmra.mrb[0].mxu0 %v229
      %v340 = vpop.f32.mrb[0].mxu0
      %v341 = vadd.f32 0.0, %v340
      %v342 = vpop.f32.mrb[0].mxu0
      %v343 = vpop.f32.mrb[0].mxu0
      %v344 = vadd.f32 0.0, %v343
      %v345 = vpop.f32.mrb[0].mxu0
      %346 = vdwg.mxu0
      %v347 = vpack.c.bf16 %v320, %v317
      %v348 = vpack.c.bf16 %v328, %v325
      %v349 = vpack.c.bf16 %v336, %v333
      %v350 = vpack.c.bf16 %v344, %v341
      %v355 = vunpack.c.l.b16 %v347
      %v356 = vunpack.c.h.b16 %v347
      %v357 = vunpack.c.l.b16 %v348
      %v358 = vunpack.c.h.b16 %v348
      %v359 = vunpack.c.l.b16 %v349
      %v360 = vunpack.c.h.b16 %v349
      %v361 = vunpack.c.l.b16 %v350
      %v362 = vunpack.c.h.b16 %v350
      %v363 = vpack.c.b16 %v355, %v355
      %v364 = vpack.c.b16 %v356, %v356
      %v365 = vpack.c.b16 %v357, %v357
      %v366 = vpack.c.b16 %v358, %v358
      %v367 = vpack.c.b16 %v359, %v359
      %v368 = vpack.c.b16 %v360, %v360
      %v369 = vpack.c.b16 %v361, %v361
      %v370 = vpack.c.b16 %v362, %v362
      %379 = vst [vmem:[%s179] sm:$0xf] %v363
      %380 = vst [vmem:[%s179 + $0x4] sm:$0xf] %v364
      %381 = vst [vmem:[%s179 + $0x8] sm:$0xf] %v365
      %382 = vst [vmem:[%s179 + $0xc] sm:$0xf] %v366
      %383 = vst [vmem:[%s179 + $0x10] sm:$0xf] %v367
      %384 = vst [vmem:[%s179 + $0x14] sm:$0xf] %v368
      %385 = vst [vmem:[%s179 + $0x18] sm:$0xf] %v369
      %386 = vst [vmem:[%s179 + $0x1c] sm:$0xf] %v370
      %v387 = vadd.f32 %v317, %v320
      %v388 = vadd.f32 %v387, %v325
      %v389 = vadd.f32 %v388, %v328
      %v390 = vadd.f32 %v389, %v333
      %v391 = vadd.f32 %v390, %v336
      %v392 = vadd.f32 %v391, %v341
      %v393 = vadd.f32 %v392, %v344
      %v394 = vrot.slane %v393, 4
      %v395 = vadd.f32 %v393, %v394
      %v396 = vrot.slane %v395, 2
      %v397 = vadd.f32 %v395, %v396
      %v398 = vrot.slane %v397, 1
      %v399 = vadd.f32 %v397, %v398
      %v400 = vmul.f32 %v317, %v317
      %v401 = vmul.f32 %v320, %v320
      %v402 = vmul.f32 %v325, %v325
      %v403 = vmul.f32 %v328, %v328
      %v404 = vmul.f32 %v333, %v333
      %v405 = vmul.f32 %v336, %v336
      %v406 = vmul.f32 %v341, %v341
      %v407 = vmul.f32 %v344, %v344
      %v408 = vadd.f32 %v400, %v401
      %v409 = vadd.f32 %v408, %v402
      %v410 = vadd.f32 %v409, %v403
      %v411 = vadd.f32 %v410, %v404
      %v412 = vadd.f32 %v411, %v405
      %v413 = vadd.f32 %v412, %v406
      %v414 = vadd.f32 %v413, %v407
      %v415 = vrot.slane %v414, 4
      %v416 = vadd.f32 %v414, %v415
      %v417 = vrot.slane %v416, 2
      %v418 = vadd.f32 %v416, %v417
      %v419 = vrot.slane %v418, 1
      %v420 = vadd.f32 %v418, %v419
      %vm421 = vcmask 1040384
      %v422 = vsel %vm421, %v399, %v420
      %423 = vst [vmem:[%s184] sm:$0x3] %v422
      %s424 = smul.u32 8, %s15
      %p425 = scmp.lt.s32.totalorder %s424, 15
      %s426 = scalar_select %p425, %s424, 15
      %s427 = smul.addr %s426, 4
      %s428 = scalar_lea.vmem %s2, %s427
      %p429 = scmp.lt.s32.totalorder %s15, 1
      %s430 = scalar_select %p429, %s15, 1
      %s431 = smul.addr %s430, 2
      %s432 = scalar_lea.vmem %s3, %s431
      // Predicated region
      $region29: #{oca1_forward.4} parent=27 // pred_check
        %p433 = pneg %p80
      $region30: #{oca1_forward.4} parent=27 // pred_check_branch
        %435 = sbr.rel (%p433) target = $region32
      $region31: #{oca1_forward.4} parent=27 // pred_region
        %s436 = smul.u32 8, %s15
      $region32: #{oca1_forward.4} parent=27 // pred_fallthru
        _
      // Predicated region
      $region33: #{oca1_forward.4} parent=27 // pred_check
        %p437 = pneg %p106
      $region34: #{oca1_forward.4} parent=27 // pred_check_branch
        %439 = sbr.rel (%p437) target = $region36
      $region35: #{oca1_forward.4} parent=27 // pred_region
        _
      $region36: #{oca1_forward.4} parent=27 // pred_fallthru
        _
    $region28: #{oca1_forward.4} parent=5 // pred_fallthru
      _
    %p440 = scmp.le.s32.totalorder 2, %s10
    // Predicated region
    $region37: #{oca1_forward.4} parent=5 // pred_check
      %p441 = pneg %p440
    $region38: #{oca1_forward.4} parent=5 // pred_check_branch
      %443 = sbr.rel (%p441) target = $region40
    $region39: #{oca1_forward.4} parent=5 // pred_region
      %s444 = ssub.s32 %s10, 2
      // Predicated region
      $region41: #{oca1_forward.4} parent=39 // pred_check
        %p445 = pneg %p86
      $region42: #{oca1_forward.4} parent=39 // pred_check_branch
        %447 = sbr.rel (%p445) target = $region44
      $region43: #{oca1_forward.4} parent=39 // pred_region
        %s448 = smul.u32 8, %s16
        %p449 = scmp.lt.s32.totalorder %s448, 15
        %s450 = scalar_select %p449, %s448, 15
        %s451 = smul.addr %s450, 4
        %s452 = scalar_lea.vmem %s2, %s451
      $region44: #{oca1_forward.4} parent=39 // pred_fallthru
        _
      // Predicated region
      $region45: #{oca1_forward.4} parent=39 // pred_check
        %p453 = pneg %p112
      $region46: #{oca1_forward.4} parent=39 // pred_check_branch
        %455 = sbr.rel (%p453) target = $region48
      $region47: #{oca1_forward.4} parent=39 // pred_region
        %p456 = scmp.lt.s32.totalorder %s16, 1
        %s457 = scalar_select %p456, %s16, 1
        %s458 = smul.addr %s457, 2
        %s459 = scalar_lea.vmem %s3, %s458
      $region48: #{oca1_forward.4} parent=39 // pred_fallthru
        _
    $region40: #{oca1_forward.4} parent=5 // pred_fallthru
      _
  $region6: #{oca1_forward.4} parent=0 // loop_footer
    %s14 = sadd.s32 1, %s10
  $region7: #{oca1_forward.4} parent=0 // loop_footer_branch
    %9 = sbr.rel target = $region3
  $region8: #{oca1_forward.4} parent=0 // loop_exit
    _

// kernel: oca1_forward.6
$region0: #{oca1_forward.6}
  #allocation0 [shape = 'u32[]', space=smem, size = 0x4, offset = 0x4, fixed_abs, tag = 'smem constant byte address 0x4 - core index']
  #allocation1 [shape = 'u32[144,128]{1,0:T(1,128)}', space=vmem, size = 0x12000, scoped, tag = 'internal scratch']
  %s0 = inlined_call_operand.vmem [shape: f32[2,2,128], index: 0, kind: input, shape index: {}]
  %s1 = inlined_call_operand.vmem [shape: f32[1,128], index: 1, kind: input, shape index: {}]
  %s2 = inlined_call_operand.vmem [shape: f32[1,128], index: 2, kind: input, shape index: {}]
  %s3 = inlined_call_operand.vmem [shape: bf16[128,128], index: 3, kind: input, shape index: {}]
  %s4 = inlined_call_operand.vmem [shape: bf16[128,128], index: 4, kind: input, shape index: {}]
  %s5 = inlined_call_operand.vmem [shape: bf16[128,128], index: 5, kind: output, shape index: {0}]
  %s6 = inlined_call_operand.vmem [shape: f32[2,2,128], index: 6, kind: output, shape index: {1}]
  %7 = xla_tuple %s5, %s6
  %s8 = sld [smem:[#allocation0]]
  $region61: #{oca1_forward.6} parent=0
    _
  %s10 = ssub.s32 1, %s8
  %s11 = scalar_select 0, %s10, %s8
  loop: start=0, step=1, limit=4
  $region2: #{oca1_forward.6} parent=0 // loop_pre_header
    _
  $region3: #{oca1_forward.6} parent=0 // loop_header
    %s13 = sphi 0, %s17
    %p14 = scmp.ge.s32.totalorder %s13, 4
    %s21 = sphi 0, %s21
    %s23 = sphi 0, %s21
    %s24 = sphi 0, %s23
    %s38 = sphi 0, %s24
    %s42 = sphi 0, %s42
    %s44 = sphi 0, %s42
    %s45 = sphi 0, %s44
    %s59 = sphi 0, %s45
    %s63 = sphi 0, %s63
    %s65 = sphi 0, %s63
    %s66 = sphi 0, %s65
    %s80 = sphi 0, %s66
    %s86 = sphi 0, %s88
    %s89 = sphi 0, %s86
    %s90 = sphi 0, %s89
    %s106 = sphi 0, %s90
    %s110 = sphi 0, %s110
    %s112 = sphi 0, %s110
    %s113 = sphi 0, %s112
    %s127 = sphi 0, %s113
    %s133 = sphi 0, %s135
    %s136 = sphi 0, %s133
    %s137 = sphi 0, %s136
    %s153 = sphi 0, %s137
    %s159 = sphi 0, %s161
    %s162 = sphi 0, %s159
    %s163 = sphi 0, %s162
    %s179 = sphi 0, %s163
  $region4: #{oca1_forward.6} parent=0 // loop_header_branch
    %16 = sbr.rel (%p14) target = $region8
  $region5: #{oca1_forward.6} parent=0 // loop_body
    %s18 = ssub.s32 %s13, 1
    %s19 = ssub.s32 %s13, 2
    %s20 = sadd.s32 %s13, 1
    %s22 = sadd.s32 %s21, 1
    %p25 = scmp.eq.s32.totalorder %s13, 1
    %p26 = scmp.ne.s32.totalorder %s21, %s23
    %p27 = scmp.eq.s32.totalorder %s13, 0
    %p28 = por %p26, %p27
    %p29 = scmp.ne.s32.totalorder %s21, %s23
    %p30 = scmp.eq.s32.totalorder %s18, 1
    %p31 = por %p29, %p30
    %p32 = scmp.ne.s32.totalorder %s23, %s24
    %p33 = scmp.eq.s32.totalorder %s18, 0
    %p34 = por %p32, %p33
    %p35 = scmp.ne.s32.totalorder %s23, %s24
    %p36 = scmp.eq.s32.totalorder %s19, 1
    %p37 = por %p35, %p36
    %p39 = scmp.ne.s32.totalorder %s24, %s38
    %p40 = scmp.eq.s32.totalorder %s19, 0
    %p41 = por %p39, %p40
    %s43 = sadd.s32 %s42, 1
    %p46 = scmp.eq.s32.totalorder %s13, 1
    %p47 = scmp.ne.s32.totalorder %s42, %s44
    %p48 = scmp.eq.s32.totalorder %s13, 0
    %p49 = por %p47, %p48
    %p50 = scmp.ne.s32.totalorder %s42, %s44
    %p51 = scmp.eq.s32.totalorder %s18, 1
    %p52 = por %p50, %p51
    %p53 = scmp.ne.s32.totalorder %s44, %s45
    %p54 = scmp.eq.s32.totalorder %s18, 0
    %p55 = por %p53, %p54
    %p56 = scmp.ne.s32.totalorder %s44, %s45
    %p57 = scmp.eq.s32.totalorder %s19, 1
    %p58 = por %p56, %p57
    %p60 = scmp.ne.s32.totalorder %s45, %s59
    %p61 = scmp.eq.s32.totalorder %s19, 0
    %p62 = por %p60, %p61
    %s64 = sadd.s32 %s63, 1
    %p67 = scmp.eq.s32.totalorder %s13, 1
    %p68 = scmp.ne.s32.totalorder %s63, %s65
    %p69 = scmp.eq.s32.totalorder %s13, 0
    %p70 = por %p68, %p69
    %p71 = scmp.ne.s32.totalorder %s63, %s65
    %p72 = scmp.eq.s32.totalorder %s18, 1
    %p73 = por %p71, %p72
    %p74 = scmp.ne.s32.totalorder %s65, %s66
    %p75 = scmp.eq.s32.totalorder %s18, 0
    %p76 = por %p74, %p75
    %p77 = scmp.ne.s32.totalorder %s65, %s66
    %p78 = scmp.eq.s32.totalorder %s19, 1
    %p79 = por %p77, %p78
    %p81 = scmp.ne.s32.totalorder %s66, %s80
    %p82 = scmp.eq.s32.totalorder %s19, 0
    %p83 = por %p81, %p82
    %s84 = ssub.s32 %s13, %s20
    %p85 = scmp.eq.s32.totalorder %s84, 0
    %s87 = sadd.s32 %s86, 1
    %s88 = scalar_select %p85, %s86, %s87
    %p91 = pneg %p85
    %p92 = scmp.eq.s32.totalorder %s13, 1
    %p93 = por %p91, %p92
    %p94 = scmp.ne.s32.totalorder %s86, %s89
    %p95 = scmp.eq.s32.totalorder %s13, 0
    %p96 = por %p94, %p95
    %p97 = scmp.ne.s32.totalorder %s86, %s89
    %p98 = scmp.eq.s32.totalorder %s18, 1
    %p99 = por %p97, %p98
    %p100 = scmp.ne.s32.totalorder %s89, %s90
    %p101 = scmp.eq.s32.totalorder %s18, 0
    %p102 = por %p100, %p101
    %p103 = scmp.ne.s32.totalorder %s89, %s90
    %p104 = scmp.eq.s32.totalorder %s19, 1
    %p105 = por %p103, %p104
    %p107 = scmp.ne.s32.totalorder %s90, %s106
    %p108 = scmp.eq.s32.totalorder %s19, 0
    %p109 = por %p107, %p108
    %s111 = sadd.s32 %s110, 1
    %p114 = scmp.eq.s32.totalorder %s13, 1
    %p115 = scmp.ne.s32.totalorder %s110, %s112
    %p116 = scmp.eq.s32.totalorder %s13, 0
    %p117 = por %p115, %p116
    %p118 = scmp.ne.s32.totalorder %s110, %s112
    %p119 = scmp.eq.s32.totalorder %s18, 1
    %p120 = por %p118, %p119
    %p121 = scmp.ne.s32.totalorder %s112, %s113
    %p122 = scmp.eq.s32.totalorder %s18, 0
    %p123 = por %p121, %p122
    %p124 = scmp.ne.s32.totalorder %s112, %s113
    %p125 = scmp.eq.s32.totalorder %s19, 1
    %p126 = por %p124, %p125
    %p128 = scmp.ne.s32.totalorder %s113, %s127
    %p129 = scmp.eq.s32.totalorder %s19, 0
    %p130 = por %p128, %p129
    %s131 = ssub.s32 %s13, %s20
    %p132 = scmp.eq.s32.totalorder %s131, 0
    %s134 = sadd.s32 %s133, 1
    %s135 = scalar_select %p132, %s133, %s134
    %p138 = pneg %p132
    %p139 = scmp.eq.s32.totalorder %s13, 1
    %p140 = por %p138, %p139
    %p141 = scmp.ne.s32.totalorder %s133, %s136
    %p142 = scmp.eq.s32.totalorder %s13, 0
    %p143 = por %p141, %p142
    %p144 = scmp.ne.s32.totalorder %s133, %s136
    %p145 = scmp.eq.s32.totalorder %s18, 1
    %p146 = por %p144, %p145
    %p147 = scmp.ne.s32.totalorder %s136, %s137
    %p148 = scmp.eq.s32.totalorder %s18, 0
    %p149 = por %p147, %p148
    %p150 = scmp.ne.s32.totalorder %s136, %s137
    %p151 = scmp.eq.s32.totalorder %s19, 1
    %p152 = por %p150, %p151
    %p154 = scmp.ne.s32.totalorder %s137, %s153
    %p155 = scmp.eq.s32.totalorder %s19, 0
    %p156 = por %p154, %p155
    %s157 = ssub.s32 %s13, %s20
    %p158 = scmp.eq.s32.totalorder %s157, 0
    %s160 = sadd.s32 %s159, 1
    %s161 = scalar_select %p158, %s159, %s160
    %p164 = pneg %p158
    %p165 = scmp.eq.s32.totalorder %s13, 1
    %p166 = por %p164, %p165
    %p167 = scmp.ne.s32.totalorder %s159, %s162
    %p168 = scmp.eq.s32.totalorder %s13, 0
    %p169 = por %p167, %p168
    %p170 = scmp.ne.s32.totalorder %s159, %s162
    %p171 = scmp.eq.s32.totalorder %s18, 1
    %p172 = por %p170, %p171
    %p173 = scmp.ne.s32.totalorder %s162, %s163
    %p174 = scmp.eq.s32.totalorder %s18, 0
    %p175 = por %p173, %p174
    %p176 = scmp.ne.s32.totalorder %s162, %s163
    %p177 = scmp.eq.s32.totalorder %s19, 1
    %p178 = por %p176, %p177
    %p180 = scmp.ne.s32.totalorder %s163, %s179
    %p181 = scmp.eq.s32.totalorder %s19, 0
    %p182 = por %p180, %p181
    %p183 = scmp.le.s32.totalorder 1, %s13
    %p184 = scmp.lt.s32.totalorder %s13, 3
    %p185 = pnand %p183, %p184
    %p186 = pneg %p185
    // Predicated region
    $region9: #{oca1_forward.6} parent=5 // pred_check
      _
    $region10: #{oca1_forward.6} parent=5 // pred_check_branch
      %188 = sbr.rel (%p185) target = $region12
    $region11: #{oca1_forward.6} parent=5 // pred_region
      %s189 = ssub.s32 %s13, 1
      // Predicated region
      $region13: #{oca1_forward.6} parent=11 // pred_check
        %p190 = pneg %p34
      $region14: #{oca1_forward.6} parent=11 // pred_check_branch
        %192 = sbr.rel (%p190) target = $region16
      $region15: #{oca1_forward.6} parent=11 // pred_region
        _
      $region16: #{oca1_forward.6} parent=11 // pred_fallthru
        _
      // Predicated region
      $region17: #{oca1_forward.6} parent=11 // pred_check
        %p193 = pneg %p55
      $region18: #{oca1_forward.6} parent=11 // pred_check_branch
        %195 = sbr.rel (%p193) target = $region20
      $region19: #{oca1_forward.6} parent=11 // pred_region
        _
      $region20: #{oca1_forward.6} parent=11 // pred_fallthru
        _
      // Predicated region
      $region21: #{oca1_forward.6} parent=11 // pred_check
        %p196 = pneg %p76
      $region22: #{oca1_forward.6} parent=11 // pred_check_branch
        %198 = sbr.rel (%p196) target = $region24
      $region23: #{oca1_forward.6} parent=11 // pred_region
        _
      $region24: #{oca1_forward.6} parent=11 // pred_fallthru
        _
      // Predicated region
      $region25: #{oca1_forward.6} parent=11 // pred_check
        %p199 = pneg %p123
      $region26: #{oca1_forward.6} parent=11 // pred_check_branch
        %201 = sbr.rel (%p199) target = $region28
      $region27: #{oca1_forward.6} parent=11 // pred_region
        _
      $region28: #{oca1_forward.6} parent=11 // pred_fallthru
        _
    $region12: #{oca1_forward.6} parent=5 // pred_fallthru
      _
    %p202 = scmp.lt.s32.totalorder %s13, 2
    // Predicated region
    $region29: #{oca1_forward.6} parent=5 // pred_check
      %p203 = pneg %p202
    $region30: #{oca1_forward.6} parent=5 // pred_check_branch
      %205 = sbr.rel (%p203) target = $region32
    $region31: #{oca1_forward.6} parent=5 // pred_region
      // Predicated region
      $region33: #{oca1_forward.6} parent=31 // pred_check
        %p206 = pneg %p96
      $region34: #{oca1_forward.6} parent=31 // pred_check_branch
        %208 = sbr.rel (%p206) target = $region36
      $region35: #{oca1_forward.6} parent=31 // pred_region
        %s209 = smul.u32 8, %s13
        %p210 = scmp.lt.s32.totalorder %s209, 15
        %s211 = scalar_select %p210, %s209, 15
        %s212 = smul.addr %s211, 4
        %s213 = scalar_lea.vmem %s3, %s212
        %s214 = smul.u32 8, %s13
      $region36: #{oca1_forward.6} parent=31 // pred_fallthru
        _
    $region32: #{oca1_forward.6} parent=5 // pred_fallthru
      _
    %p215 = scmp.le.s32.totalorder 1, %s13
    %p216 = scmp.lt.s32.totalorder %s13, 3
    %p217 = pnand %p215, %p216
    %p218 = pneg %p217
    // Predicated region
    $region37: #{oca1_forward.6} parent=5 // pred_check
      _
    $region38: #{oca1_forward.6} parent=5 // pred_check_branch
      %220 = sbr.rel (%p217) target = $region40
    $region39: #{oca1_forward.6} parent=5 // pred_region
      %s221 = ssub.s32 %s13, 1
      %p222 = pneg %p34
      %p223 = pneg %p31
      %p224 = pneg %p55
      %p225 = pneg %p52
      %p226 = pneg %p76
      %p227 = pneg %p73
      %s228 = smul.u32 8, %s18
      %p229 = scmp.lt.s32.totalorder %s228, 15
      %s230 = scalar_select %p229, %s228, 15
      %s231 = smul.addr %s230, 4
      %s232 = scalar_lea.vmem %s3, %s231
      %p233 = pneg %p102
      %p234 = pneg %p99
      %p235 = pneg %p123
      %p236 = pneg %p120
      %p237 = pneg %p149
      %p238 = pneg %p146
      %s239 = smul.u32 8, %s18
      %p240 = scmp.lt.s32.totalorder %s239, 15
      %s241 = scalar_select %p240, %s239, 15
      %s242 = smul.addr %s241, 4
      %s243 = scalar_lea.vmem %s5, %s242
      %p244 = pneg %p175
      %p245 = pneg %p172
      %p246 = scmp.lt.s32.totalorder %s18, 1
      %s247 = scalar_select %p246, %s18, 1
      %s248 = smul.addr %s247, 2
      %s249 = scalar_lea.vmem %s6, %s248
      %s250 = smul.u32 8, %s18
      %p251 = scmp.lt.s32.totalorder %s250, 15
      %s252 = scalar_select %p251, %s250, 15
      %s253 = smul.addr %s252, 4
      %s254 = scalar_lea.vmem %s3, %s253
      %s255 = smul.u32 8, %s18
      %s256 = smul.u32 8, %s18
      %p257 = scmp.lt.s32.totalorder %s256, 15
      %s258 = scalar_select %p257, %s256, 15
      %s259 = smul.addr %s258, 4
      %s260 = scalar_lea.vmem %s5, %s259
      %s261 = smul.u32 8, %s18
      %p262 = scmp.lt.s32.totalorder %s18, 1
      %s263 = scalar_select %p262, %s18, 1
      %s264 = smul.addr %s263, 2
      %s265 = scalar_lea.vmem %s6, %s264
      %v267 = vld [vmem:[%s0] sm:$0x3]
      %v268 = vld [vmem:[%s0 + $0x2] sm:$0x3]
      %v269 = vld [vmem:[%s1] sm:$0x1]
      %v270 = vld [vmem:[%s2] sm:$0x1]
      %vm271 = vcmask 1041408
      %v272 = vsel %vm271, %v267, 0.0
      %v273 = vsel %vm271, %v268, 0.0
      %v274 = vadd.f32 %v272, %v273
      %v275 = vmul.f32 %v274, 0.0078125
      %v276 = vmul.f32 %v275, %v275
      %v278 = vrot.slane %v276, 7
      %v280 = vsub.f32 %v275, %v278
      %v281 = vmax.f32 %v280, 0.0
      %v282 = vadd.f32 %v281, 1e-05
      %v283 = vrsqrt.pop %v282
      %v286 = vunpack.c.l.s4 1966171168
      %v287 = vunpack.c.0.s8 %v286
      %v288 = vlaneseq
      %v289 = vshrl.u32 %v288, 7
      %v290 = vsub.s32 %v287, %v289
      %v291 = vrot.slane %v283, %v290
      %v292 = vcombine.high %v291, %v291
      %v294 = vunpack.c.l.s4 1966171168
      %v295 = vunpack.c.0.s8 %v294
      %v296 = vlaneseq
      %v297 = vshrl.u32 %v296, 7
      %v298 = vsub.s32 %v295, %v297
      %v299 = vrot.slane %v292, %v298
      %v301 = vmul.f32 %v269, %v299
      %v302 = vmul.f32 %v275, %v301
      %v303 = vsub.f32 %v270, %v302
      %v304 = vld [vmem:[%s254] sm:$0xf]
      %v305 = vld [vmem:[%s254 + $0x4] sm:$0xf]
      %v306 = vld [vmem:[%s254 + $0x8] sm:$0xf]
      %v307 = vld [vmem:[%s254 + $0xc] sm:$0xf]
      %v308 = vld [vmem:[%s254 + $0x10] sm:$0xf]
      %v309 = vld [vmem:[%s254 + $0x14] sm:$0xf]
      %v310 = vld [vmem:[%s254 + $0x18] sm:$0xf]
      %v311 = vld [vmem:[%s254 + $0x1c] sm:$0xf]
      %v312 = vunpack.c.l.bf16 %v304
      %v313 = vunpack.c.l.bf16 %v305
      %v314 = vunpack.c.l.bf16 %v306
      %v315 = vunpack.c.l.bf16 %v307
      %v316 = vunpack.c.l.bf16 %v308
      %v317 = vunpack.c.l.bf16 %v309
      %v318 = vunpack.c.l.bf16 %v310
      %v319 = vunpack.c.l.bf16 %v311
      %v321 = vlaneseq
      %v322 = vshrl.u32 %v321, 7
      %v323 = vsub.s32 0, %v322
      %v324 = vrot.slane %v301, %v323
      %v326 = vmul.f32 %v312, %v324
      %v327 = vmul.f32 %v313, %v324
      %v328 = vmul.f32 %v314, %v324
      %v329 = vmul.f32 %v315, %v324
      %v330 = vmul.f32 %v316, %v324
      %v331 = vmul.f32 %v317, %v324
      %v332 = vmul.f32 %v318, %v324
      %v333 = vmul.f32 %v319, %v324
      %v335 = vlaneseq
      %v336 = vshrl.u32 %v335, 7
      %v337 = vsub.s32 0, %v336
      %v338 = vrot.slane %v303, %v337
      %v340 = vadd.f32 %v326, %v338
      %v341 = vadd.f32 %v327, %v338
      %v342 = vadd.f32 %v328, %v338
      %v343 = vadd.f32 %v329, %v338
      %v344 = vadd.f32 %v330, %v338
      %v345 = vadd.f32 %v331, %v338
      %v346 = vadd.f32 %v332, %v338
      %v347 = vadd.f32 %v333, %v338
      %v348 = vmax.f32 %v340, 0.0
      %v349 = vmax.f32 %v341, 0.0
      %v350 = vmax.f32 %v342, 0.0
      %v351 = vmax.f32 %v343, 0.0
      %v352 = vmax.f32 %v344, 0.0
      %v353 = vmax.f32 %v345, 0.0
      %v354 = vmax.f32 %v346, 0.0
      %v355 = vmax.f32 %v347, 0.0
      %v356 = vpack.c.bf16 %v349, %v348
      %v357 = vpack.c.bf16 %v351, %v350
      %v358 = vpack.c.bf16 %v353, %v352
      %v359 = vpack.c.bf16 %v355, %v354
      %v360 = vld [vmem:[%s4] sm:$0xf]
      %v361 = vld [vmem:[%s4 + $0x4] sm:$0xf]
      %v362 = vld [vmem:[%s4 + $0x8] sm:$0xf]
      %v363 = vld [vmem:[%s4 + $0xc] sm:$0xf]
      %v364 = vld [vmem:[%s4 + $0x10] sm:$0xf]
      %v365 = vld [vmem:[%s4 + $0x14] sm:$0xf]
      %v366 = vld [vmem:[%s4 + $0x18] sm:$0xf]
      %v367 = vld [vmem:[%s4 + $0x1c] sm:$0xf]
      %v368 = vld [vmem:[%s4 + $0x20] sm:$0xf]
      %v369 = vld [vmem:[%s4 + $0x24] sm:$0xf]
      %v370 = vld [vmem:[%s4 + $0x28] sm:$0xf]
      %v371 = vld [vmem:[%s4 + $0x2c] sm:$0xf]
      %v372 = vld [vmem:[%s4 + $0x30] sm:$0xf]
      %v373 = vld [vmem:[%s4 + $0x34] sm:$0xf]
      %v374 = vld [vmem:[%s4 + $0x38] sm:$0xf]
      %v375 = vld [vmem:[%s4 + $0x3c] sm:$0xf]
      %v392 = vunpack.c.l.b16 %v360
      %v393 = vunpack.c.l.b16 %v361
      %v394 = vunpack.c.l.b16 %v362
      %v395 = vunpack.c.l.b16 %v363
      %v396 = vunpack.c.l.b16 %v364
      %v397 = vunpack.c.l.b16 %v365
      %v398 = vunpack.c.l.b16 %v366
      %v399 = vunpack.c.l.b16 %v367
      %v400 = vunpack.c.l.b16 %v368
      %v401 = vunpack.c.l.b16 %v369
      %v402 = vunpack.c.l.b16 %v370
      %v403 = vunpack.c.l.b16 %v371
      %v404 = vunpack.c.l.b16 %v372
      %v405 = vunpack.c.l.b16 %v373
      %v406 = vunpack.c.l.b16 %v374
      %v407 = vunpack.c.l.b16 %v375
      %v408 = vpack.c.b16 %v393, %v392
      %v409 = vpack.c.b16 %v395, %v394
      %v410 = vpack.c.b16 %v397, %v396
      %v411 = vpack.c.b16 %v399, %v398
      %v412 = vpack.c.b16 %v401, %v400
      %v413 = vpack.c.b16 %v403, %v402
      %v414 = vpack.c.b16 %v405, %v404
      %v415 = vpack.c.b16 %v407, %v406
      %424 = vmatprep.subr.bf16.mxu0 0
      %425 = vmatpush1.bf16.msra.mxu0 %v408
      %426 = vmatprep.subr.bf16.mxu0 0
      %427 = vmatpush1.bf16.msra.mxu0 %v409
      %428 = vmatprep.subr.bf16.mxu0 0
      %429 = vmatpush1.bf16.msra.mxu0 %v410
      %430 = vmatprep.subr.bf16.mxu0 0
      %431 = vmatpush1.bf16.msra.mxu0 %v411
      %432 = vmatprep.subr.bf16.mxu0 0
      %433 = vmatpush1.bf16.msra.mxu0 %v412
      %434 = vmatprep.subr.bf16.mxu0 0
      %435 = vmatpush1.bf16.msra.mxu0 %v413
      %436 = vmatprep.subr.bf16.mxu0 0
      %437 = vmatpush1.bf16.msra.mxu0 %v414
      %438 = vmatprep.subr.bf16.mxu0 0
      %439 = vmatpush1.bf16.msra.mxu0 %v415
      %440 = vmatprep.subr.bf16.mxu0 0
      %441 = vmatpush1.bf16.msra.mxu0 0
      %442 = vmatprep.subr.bf16.mxu0 0
      %443 = vmatpush1.bf16.msra.mxu0 0
      %444 = vmatprep.subr.bf16.mxu0 0
      %445 = vmatpush1.bf16.msra.mxu0 0
      %446 = vmatprep.subr.bf16.mxu0 0
      %447 = vmatpush1.bf16.msra.mxu0 0
      %448 = vmatprep.subr.bf16.mxu0 0
      %449 = vmatpush1.bf16.msra.mxu0 0
      %450 = vmatprep.subr.bf16.mxu0 0
      %451 = vmatpush1.bf16.msra.mxu0 0
      %452 = vmatprep.subr.bf16.mxu0 0
      %453 = vmatpush1.bf16.msra.mxu0 0
      %454 = vmatprep.subr.bf16.mxu0 0
      %455 = vmatpush1.bf16.msra.mxu0 0
      %456 = vmatprep.mubr.bf16.mxu0 0
      %457 = vmatmul.mubr.bf16.gmra.mrb[0].mxu0 %v356
      %v458 = vpop.f32.mrb[0].mxu0
      %v459 = vadd.f32 0.0, %v458
      %v460 = vpop.f32.mrb[0].mxu0
      %v461 = vpop.f32.mrb[0].mxu0
      %v462 = vadd.f32 0.0, %v461
      %v463 = vpop.f32.mrb[0].mxu0
      %464 = vmatprep.mubr.bf16.mxu0 0
      %465 = vmatmul.mubr.bf16.gmra.mrb[0].mxu0 %v357
      %v466 = vpop.f32.mrb[0].mxu0
      %v467 = vadd.f32 0.0, %v466
      %v468 = vpop.f32.mrb[0].mxu0
      %v469 = vpop.f32.mrb[0].mxu0
      %v470 = vadd.f32 0.0, %v469
      %v471 = vpop.f32.mrb[0].mxu0
      %472 = vmatprep.mubr.bf16.mxu0 0
      %473 = vmatmul.mubr.bf16.gmra.mrb[0].mxu0 %v358
      %v474 = vpop.f32.mrb[0].mxu0
      %v475 = vadd.f32 0.0, %v474
      %v476 = vpop.f32.mrb[0].mxu0
      %v477 = vpop.f32.mrb[0].mxu0
      %v478 = vadd.f32 0.0, %v477
      %v479 = vpop.f32.mrb[0].mxu0
      %480 = vmatprep.mubr.bf16.mxu0 0
      %481 = vmatmul.mubr.bf16.gmra.mrb[0].mxu0 %v359
      %v482 = vpop.f32.mrb[0].mxu0
      %v483 = vadd.f32 0.0, %v482
      %v484 = vpop.f32.mrb[0].mxu0
      %v485 = vpop.f32.mrb[0].mxu0
      %v486 = vadd.f32 0.0, %v485
      %v487 = vpop.f32.mrb[0].mxu0
      %488 = vdwg.mxu0
      %v489 = vpack.c.bf16 %v462, %v459
      %v490 = vpack.c.bf16 %v470, %v467
      %v491 = vpack.c.bf16 %v478, %v475
      %v492 = vpack.c.bf16 %v486, %v483
      %v497 = vunpack.c.l.b16 %v489
      %v498 = vunpack.c.h.b16 %v489
      %v499 = vunpack.c.l.b16 %v490
      %v500 = vunpack.c.h.b16 %v490
      %v501 = vunpack.c.l.b16 %v491
      %v502 = vunpack.c.h.b16 %v491
      %v503 = vunpack.c.l.b16 %v492
      %v504 = vunpack.c.h.b16 %v492
      %v505 = vpack.c.b16 %v497, %v497
      %v506 = vpack.c.b16 %v498, %v498
      %v507 = vpack.c.b16 %v499, %v499
      %v508 = vpack.c.b16 %v500, %v500
      %v509 = vpack.c.b16 %v501, %v501
      %v510 = vpack.c.b16 %v502, %v502
      %v511 = vpack.c.b16 %v503, %v503
      %v512 = vpack.c.b16 %v504, %v504
      %521 = vst [vmem:[%s260] sm:$0xf] %v505
      %522 = vst [vmem:[%s260 + $0x4] sm:$0xf] %v506
      %523 = vst [vmem:[%s260 + $0x8] sm:$0xf] %v507
      %524 = vst [vmem:[%s260 + $0xc] sm:$0xf] %v508
      %525 = vst [vmem:[%s260 + $0x10] sm:$0xf] %v509
      %526 = vst [vmem:[%s260 + $0x14] sm:$0xf] %v510
      %527 = vst [vmem:[%s260 + $0x18] sm:$0xf] %v511
      %528 = vst [vmem:[%s260 + $0x1c] sm:$0xf] %v512
      %v529 = vadd.f32 %v459, %v462
      %v530 = vadd.f32 %v529, %v467
      %v531 = vadd.f32 %v530, %v470
      %v532 = vadd.f32 %v531, %v475
      %v533 = vadd.f32 %v532, %v478
      %v534 = vadd.f32 %v533, %v483
      %v535 = vadd.f32 %v534, %v486
      %v536 = vrot.slane %v535, 4
      %v537 = vadd.f32 %v535, %v536
      %v538 = vrot.slane %v537, 2
      %v539 = vadd.f32 %v537, %v538
      %v540 = vrot.slane %v539, 1
      %v541 = vadd.f32 %v539, %v540
      %v542 = vmul.f32 %v459, %v459
      %v543 = vmul.f32 %v462, %v462
      %v544 = vmul.f32 %v467, %v467
      %v545 = vmul.f32 %v470, %v470
      %v546 = vmul.f32 %v475, %v475
      %v547 = vmul.f32 %v478, %v478
      %v548 = vmul.f32 %v483, %v483
      %v549 = vmul.f32 %v486, %v486
      %v550 = vadd.f32 %v542, %v543
      %v551 = vadd.f32 %v550, %v544
      %v552 = vadd.f32 %v551, %v545
      %v553 = vadd.f32 %v552, %v546
      %v554 = vadd.f32 %v553, %v547
      %v555 = vadd.f32 %v554, %v548
      %v556 = vadd.f32 %v555, %v549
      %v557 = vrot.slane %v556, 4
      %v558 = vadd.f32 %v556, %v557
      %v559 = vrot.slane %v558, 2
      %v560 = vadd.f32 %v558, %v559
      %v561 = vrot.slane %v560, 1
      %v562 = vadd.f32 %v560, %v561
      %vm563 = vcmask 1040384
      %v564 = vsel %vm563, %v541, %v562
      %565 = vst [vmem:[%s265] sm:$0x3] %v564
      %s566 = smul.u32 8, %s18
      %p567 = scmp.lt.s32.totalorder %s566, 15
      %s568 = scalar_select %p567, %s566, 15
      %s569 = smul.addr %s568, 4
      %s570 = scalar_lea.vmem %s5, %s569
      %p571 = scmp.lt.s32.totalorder %s18, 1
      %s572 = scalar_select %p571, %s18, 1
      %s573 = smul.addr %s572, 2
      %s574 = scalar_lea.vmem %s6, %s573
      // Predicated region
      $region41: #{oca1_forward.6} parent=39 // pred_check
        %p575 = pneg %p146
      $region42: #{oca1_forward.6} parent=39 // pred_check_branch
        %577 = sbr.rel (%p575) target = $region44
      $region43: #{oca1_forward.6} parent=39 // pred_region
        %s578 = smul.u32 8, %s18
      $region44: #{oca1_forward.6} parent=39 // pred_fallthru
        _
      // Predicated region
      $region45: #{oca1_forward.6} parent=39 // pred_check
        %p579 = pneg %p172
      $region46: #{oca1_forward.6} parent=39 // pred_check_branch
        %581 = sbr.rel (%p579) target = $region48
      $region47: #{oca1_forward.6} parent=39 // pred_region
        _
      $region48: #{oca1_forward.6} parent=39 // pred_fallthru
        _
    $region40: #{oca1_forward.6} parent=5 // pred_fallthru
      _
    %p582 = scmp.le.s32.totalorder 2, %s13
    // Predicated region
    $region49: #{oca1_forward.6} parent=5 // pred_check
      %p583 = pneg %p582
    $region50: #{oca1_forward.6} parent=5 // pred_check_branch
      %585 = sbr.rel (%p583) target = $region52
    $region51: #{oca1_forward.6} parent=5 // pred_region
      %s586 = ssub.s32 %s13, 2
      // Predicated region
      $region53: #{oca1_forward.6} parent=51 // pred_check
        %p587 = pneg %p152
      $region54: #{oca1_forward.6} parent=51 // pred_check_branch
        %589 = sbr.rel (%p587) target = $region56
      $region55: #{oca1_forward.6} parent=51 // pred_region
        %s590 = smul.u32 8, %s19
        %p591 = scmp.lt.s32.totalorder %s590, 15
        %s592 = scalar_select %p591, %s590, 15
        %s593 = smul.addr %s592, 4
        %s594 = scalar_lea.vmem %s5, %s593
      $region56: #{oca1_forward.6} parent=51 // pred_fallthru
        _
      // Predicated region
      $region57: #{oca1_forward.6} parent=51 // pred_check
        %p595 = pneg %p178
      $region58: #{oca1_forward.6} parent=51 // pred_check_branch
        %597 = sbr.rel (%p595) target = $region60
      $region59: #{oca1_forward.6} parent=51 // pred_region
        %p598 = scmp.lt.s32.totalorder %s19, 1
        %s599 = scalar_select %p598, %s19, 1
        %s600 = smul.addr %s599, 2
        %s601 = scalar_lea.vmem %s6, %s600
      $region60: #{oca1_forward.6} parent=51 // pred_fallthru
        _
    $region52: #{oca1_forward.6} parent=5 // pred_fallthru
      _
  $region6: #{oca1_forward.6} parent=0 // loop_footer
    %s17 = sadd.s32 1, %s13
  $region7: #{oca1_forward.6} parent=0 // loop_footer_branch
    %12 = sbr.rel target = $region3
  $region8: #{oca1_forward.6} parent=0 // loop_exit
    _

// kernel: oca1_forward.5
$region0: #{oca1_forward.5}
  #allocation0 [shape = 'u32[]', space=smem, size = 0x4, offset = 0x4, fixed_abs, tag = 'smem constant byte address 0x4 - core index']
  #allocation1 [shape = 'u32[144,128]{1,0:T(1,128)}', space=vmem, size = 0x12000, scoped, tag = 'internal scratch']
  %s0 = inlined_call_operand.vmem [shape: f32[2,2,128], index: 0, kind: input, shape index: {}]
  %s1 = inlined_call_operand.vmem [shape: f32[1,128], index: 1, kind: input, shape index: {}]
  %s2 = inlined_call_operand.vmem [shape: f32[1,128], index: 2, kind: input, shape index: {}]
  %s3 = inlined_call_operand.vmem [shape: bf16[128,128], index: 3, kind: input, shape index: {}]
  %s4 = inlined_call_operand.vmem [shape: bf16[1152,128], index: 4, kind: input, shape index: {}]
  %s5 = inlined_call_operand.vmem [shape: bf16[128,128], index: 5, kind: output, shape index: {0}]
  %s6 = inlined_call_operand.vmem [shape: f32[2,2,128], index: 6, kind: output, shape index: {1}]
  %7 = xla_tuple %s5, %s6
  %s8 = sld [smem:[#allocation0]]
  $region61: #{oca1_forward.5} parent=0
    _
  %s10 = ssub.s32 1, %s8
  %s11 = scalar_select 0, %s10, %s8
  loop: start=0, step=1, limit=4
  $region2: #{oca1_forward.5} parent=0 // loop_pre_header
    _
  $region3: #{oca1_forward.5} parent=0 // loop_header
    %s13 = sphi 0, %s17
    %p14 = scmp.ge.s32.totalorder %s13, 4
    %s21 = sphi 0, %s21
    %s23 = sphi 0, %s21
    %s24 = sphi 0, %s23
    %s38 = sphi 0, %s24
    %s42 = sphi 0, %s42
    %s44 = sphi 0, %s42
    %s45 = sphi 0, %s44
    %s59 = sphi 0, %s45
    %s63 = sphi 0, %s63
    %s65 = sphi 0, %s63
    %s66 = sphi 0, %s65
    %s80 = sphi 0, %s66
    %s86 = sphi 0, %s88
    %s89 = sphi 0, %s86
    %s90 = sphi 0, %s89
    %s106 = sphi 0, %s90
    %s110 = sphi 0, %s110
    %s112 = sphi 0, %s110
    %s113 = sphi 0, %s112
    %s127 = sphi 0, %s113
    %s133 = sphi 0, %s135
    %s136 = sphi 0, %s133
    %s137 = sphi 0, %s136
    %s153 = sphi 0, %s137
    %s159 = sphi 0, %s161
    %s162 = sphi 0, %s159
    %s163 = sphi 0, %s162
    %s179 = sphi 0, %s163
  $region4: #{oca1_forward.5} parent=0 // loop_header_branch
    %16 = sbr.rel (%p14) target = $region8
  $region5: #{oca1_forward.5} parent=0 // loop_body
    %s18 = ssub.s32 %s13, 1
    %s19 = ssub.s32 %s13, 2
    %s20 = sadd.s32 %s13, 1
    %s22 = sadd.s32 %s21, 1
    %p25 = scmp.eq.s32.totalorder %s13, 1
    %p26 = scmp.ne.s32.totalorder %s21, %s23
    %p27 = scmp.eq.s32.totalorder %s13, 0
    %p28 = por %p26, %p27
    %p29 = scmp.ne.s32.totalorder %s21, %s23
    %p30 = scmp.eq.s32.totalorder %s18, 1
    %p31 = por %p29, %p30
    %p32 = scmp.ne.s32.totalorder %s23, %s24
    %p33 = scmp.eq.s32.totalorder %s18, 0
    %p34 = por %p32, %p33
    %p35 = scmp.ne.s32.totalorder %s23, %s24
    %p36 = scmp.eq.s32.totalorder %s19, 1
    %p37 = por %p35, %p36
    %p39 = scmp.ne.s32.totalorder %s24, %s38
    %p40 = scmp.eq.s32.totalorder %s19, 0
    %p41 = por %p39, %p40
    %s43 = sadd.s32 %s42, 1
    %p46 = scmp.eq.s32.totalorder %s13, 1
    %p47 = scmp.ne.s32.totalorder %s42, %s44
    %p48 = scmp.eq.s32.totalorder %s13, 0
    %p49 = por %p47, %p48
    %p50 = scmp.ne.s32.totalorder %s42, %s44
    %p51 = scmp.eq.s32.totalorder %s18, 1
    %p52 = por %p50, %p51
    %p53 = scmp.ne.s32.totalorder %s44, %s45
    %p54 = scmp.eq.s32.totalorder %s18, 0
    %p55 = por %p53, %p54
    %p56 = scmp.ne.s32.totalorder %s44, %s45
    %p57 = scmp.eq.s32.totalorder %s19, 1
    %p58 = por %p56, %p57
    %p60 = scmp.ne.s32.totalorder %s45, %s59
    %p61 = scmp.eq.s32.totalorder %s19, 0
    %p62 = por %p60, %p61
    %s64 = sadd.s32 %s63, 1
    %p67 = scmp.eq.s32.totalorder %s13, 1
    %p68 = scmp.ne.s32.totalorder %s63, %s65
    %p69 = scmp.eq.s32.totalorder %s13, 0
    %p70 = por %p68, %p69
    %p71 = scmp.ne.s32.totalorder %s63, %s65
    %p72 = scmp.eq.s32.totalorder %s18, 1
    %p73 = por %p71, %p72
    %p74 = scmp.ne.s32.totalorder %s65, %s66
    %p75 = scmp.eq.s32.totalorder %s18, 0
    %p76 = por %p74, %p75
    %p77 = scmp.ne.s32.totalorder %s65, %s66
    %p78 = scmp.eq.s32.totalorder %s19, 1
    %p79 = por %p77, %p78
    %p81 = scmp.ne.s32.totalorder %s66, %s80
    %p82 = scmp.eq.s32.totalorder %s19, 0
    %p83 = por %p81, %p82
    %s84 = ssub.s32 %s13, %s20
    %p85 = scmp.eq.s32.totalorder %s84, 0
    %s87 = sadd.s32 %s86, 1
    %s88 = scalar_select %p85, %s86, %s87
    %p91 = pneg %p85
    %p92 = scmp.eq.s32.totalorder %s13, 1
    %p93 = por %p91, %p92
    %p94 = scmp.ne.s32.totalorder %s86, %s89
    %p95 = scmp.eq.s32.totalorder %s13, 0
    %p96 = por %p94, %p95
    %p97 = scmp.ne.s32.totalorder %s86, %s89
    %p98 = scmp.eq.s32.totalorder %s18, 1
    %p99 = por %p97, %p98
    %p100 = scmp.ne.s32.totalorder %s89, %s90
    %p101 = scmp.eq.s32.totalorder %s18, 0
    %p102 = por %p100, %p101
    %p103 = scmp.ne.s32.totalorder %s89, %s90
    %p104 = scmp.eq.s32.totalorder %s19, 1
    %p105 = por %p103, %p104
    %p107 = scmp.ne.s32.totalorder %s90, %s106
    %p108 = scmp.eq.s32.totalorder %s19, 0
    %p109 = por %p107, %p108
    %s111 = sadd.s32 %s110, 1
    %p114 = scmp.eq.s32.totalorder %s13, 1
    %p115 = scmp.ne.s32.totalorder %s110, %s112
    %p116 = scmp.eq.s32.totalorder %s13, 0
    %p117 = por %p115, %p116
    %p118 = scmp.ne.s32.totalorder %s110, %s112
    %p119 = scmp.eq.s32.totalorder %s18, 1
    %p120 = por %p118, %p119
    %p121 = scmp.ne.s32.totalorder %s112, %s113
    %p122 = scmp.eq.s32.totalorder %s18, 0
    %p123 = por %p121, %p122
    %p124 = scmp.ne.s32.totalorder %s112, %s113
    %p125 = scmp.eq.s32.totalorder %s19, 1
    %p126 = por %p124, %p125
    %p128 = scmp.ne.s32.totalorder %s113, %s127
    %p129 = scmp.eq.s32.totalorder %s19, 0
    %p130 = por %p128, %p129
    %s131 = ssub.s32 %s13, %s20
    %p132 = scmp.eq.s32.totalorder %s131, 0
    %s134 = sadd.s32 %s133, 1
    %s135 = scalar_select %p132, %s133, %s134
    %p138 = pneg %p132
    %p139 = scmp.eq.s32.totalorder %s13, 1
    %p140 = por %p138, %p139
    %p141 = scmp.ne.s32.totalorder %s133, %s136
    %p142 = scmp.eq.s32.totalorder %s13, 0
    %p143 = por %p141, %p142
    %p144 = scmp.ne.s32.totalorder %s133, %s136
    %p145 = scmp.eq.s32.totalorder %s18, 1
    %p146 = por %p144, %p145
    %p147 = scmp.ne.s32.totalorder %s136, %s137
    %p148 = scmp.eq.s32.totalorder %s18, 0
    %p149 = por %p147, %p148
    %p150 = scmp.ne.s32.totalorder %s136, %s137
    %p151 = scmp.eq.s32.totalorder %s19, 1
    %p152 = por %p150, %p151
    %p154 = scmp.ne.s32.totalorder %s137, %s153
    %p155 = scmp.eq.s32.totalorder %s19, 0
    %p156 = por %p154, %p155
    %s157 = ssub.s32 %s13, %s20
    %p158 = scmp.eq.s32.totalorder %s157, 0
    %s160 = sadd.s32 %s159, 1
    %s161 = scalar_select %p158, %s159, %s160
    %p164 = pneg %p158
    %p165 = scmp.eq.s32.totalorder %s13, 1
    %p166 = por %p164, %p165
    %p167 = scmp.ne.s32.totalorder %s159, %s162
    %p168 = scmp.eq.s32.totalorder %s13, 0
    %p169 = por %p167, %p168
    %p170 = scmp.ne.s32.totalorder %s159, %s162
    %p171 = scmp.eq.s32.totalorder %s18, 1
    %p172 = por %p170, %p171
    %p173 = scmp.ne.s32.totalorder %s162, %s163
    %p174 = scmp.eq.s32.totalorder %s18, 0
    %p175 = por %p173, %p174
    %p176 = scmp.ne.s32.totalorder %s162, %s163
    %p177 = scmp.eq.s32.totalorder %s19, 1
    %p178 = por %p176, %p177
    %p180 = scmp.ne.s32.totalorder %s163, %s179
    %p181 = scmp.eq.s32.totalorder %s19, 0
    %p182 = por %p180, %p181
    %p183 = scmp.le.s32.totalorder 1, %s13
    %p184 = scmp.lt.s32.totalorder %s13, 3
    %p185 = pnand %p183, %p184
    %p186 = pneg %p185
    // Predicated region
    $region9: #{oca1_forward.5} parent=5 // pred_check
      _
    $region10: #{oca1_forward.5} parent=5 // pred_check_branch
      %188 = sbr.rel (%p185) target = $region12
    $region11: #{oca1_forward.5} parent=5 // pred_region
      %s189 = ssub.s32 %s13, 1
      // Predicated region
      $region13: #{oca1_forward.5} parent=11 // pred_check
        %p190 = pneg %p34
      $region14: #{oca1_forward.5} parent=11 // pred_check_branch
        %192 = sbr.rel (%p190) target = $region16
      $region15: #{oca1_forward.5} parent=11 // pred_region
        _
      $region16: #{oca1_forward.5} parent=11 // pred_fallthru
        _
      // Predicated region
      $region17: #{oca1_forward.5} parent=11 // pred_check
        %p193 = pneg %p55
      $region18: #{oca1_forward.5} parent=11 // pred_check_branch
        %195 = sbr.rel (%p193) target = $region20
      $region19: #{oca1_forward.5} parent=11 // pred_region
        _
      $region20: #{oca1_forward.5} parent=11 // pred_fallthru
        _
      // Predicated region
      $region21: #{oca1_forward.5} parent=11 // pred_check
        %p196 = pneg %p76
      $region22: #{oca1_forward.5} parent=11 // pred_check_branch
        %198 = sbr.rel (%p196) target = $region24
      $region23: #{oca1_forward.5} parent=11 // pred_region
        _
      $region24: #{oca1_forward.5} parent=11 // pred_fallthru
        _
      // Predicated region
      $region25: #{oca1_forward.5} parent=11 // pred_check
        %p199 = pneg %p123
      $region26: #{oca1_forward.5} parent=11 // pred_check_branch
        %201 = sbr.rel (%p199) target = $region28
      $region27: #{oca1_forward.5} parent=11 // pred_region
        _
      $region28: #{oca1_forward.5} parent=11 // pred_fallthru
        _
    $region12: #{oca1_forward.5} parent=5 // pred_fallthru
      _
    %p202 = scmp.lt.s32.totalorder %s13, 2
    // Predicated region
    $region29: #{oca1_forward.5} parent=5 // pred_check
      %p203 = pneg %p202
    $region30: #{oca1_forward.5} parent=5 // pred_check_branch
      %205 = sbr.rel (%p203) target = $region32
    $region31: #{oca1_forward.5} parent=5 // pred_region
      // Predicated region
      $region33: #{oca1_forward.5} parent=31 // pred_check
        %p206 = pneg %p96
      $region34: #{oca1_forward.5} parent=31 // pred_check_branch
        %208 = sbr.rel (%p206) target = $region36
      $region35: #{oca1_forward.5} parent=31 // pred_region
        %s209 = smul.u32 8, %s13
        %p210 = scmp.lt.s32.totalorder %s209, 15
        %s211 = scalar_select %p210, %s209, 15
        %s212 = smul.addr %s211, 4
        %s213 = scalar_lea.vmem %s3, %s212
        %s214 = smul.u32 8, %s13
      $region36: #{oca1_forward.5} parent=31 // pred_fallthru
        _
    $region32: #{oca1_forward.5} parent=5 // pred_fallthru
      _
    %p215 = scmp.le.s32.totalorder 1, %s13
    %p216 = scmp.lt.s32.totalorder %s13, 3
    %p217 = pnand %p215, %p216
    %p218 = pneg %p217
    // Predicated region
    $region37: #{oca1_forward.5} parent=5 // pred_check
      _
    $region38: #{oca1_forward.5} parent=5 // pred_check_branch
      %220 = sbr.rel (%p217) target = $region40
    $region39: #{oca1_forward.5} parent=5 // pred_region
      %s221 = ssub.s32 %s13, 1
      %p222 = pneg %p34
      %p223 = pneg %p31
      %p224 = pneg %p55
      %p225 = pneg %p52
      %p226 = pneg %p76
      %p227 = pneg %p73
      %s228 = smul.u32 8, %s18
      %p229 = scmp.lt.s32.totalorder %s228, 15
      %s230 = scalar_select %p229, %s228, 15
      %s231 = smul.addr %s230, 4
      %s232 = scalar_lea.vmem %s3, %s231
      %p233 = pneg %p102
      %p234 = pneg %p99
      %p235 = pneg %p123
      %p236 = pneg %p120
      %p237 = pneg %p149
      %p238 = pneg %p146
      %s239 = smul.u32 8, %s18
      %p240 = scmp.lt.s32.totalorder %s239, 15
      %s241 = scalar_select %p240, %s239, 15
      %s242 = smul.addr %s241, 4
      %s243 = scalar_lea.vmem %s5, %s242
      %p244 = pneg %p175
      %p245 = pneg %p172
      %p246 = scmp.lt.s32.totalorder %s18, 1
      %s247 = scalar_select %p246, %s18, 1
      %s248 = smul.addr %s247, 2
      %s249 = scalar_lea.vmem %s6, %s248
      %s250 = smul.u32 8, %s18
      %p251 = scmp.lt.s32.totalorder %s250, 15
      %s252 = scalar_select %p251, %s250, 15
      %s253 = smul.addr %s252, 4
      %s254 = scalar_lea.vmem %s3, %s253
      %s255 = smul.u32 8, %s18
      %s256 = smul.u32 8, %s18
      %p257 = scmp.lt.s32.totalorder %s256, 15
      %s258 = scalar_select %p257, %s256, 15
      %s259 = smul.addr %s258, 4
      %s260 = scalar_lea.vmem %s5, %s259
      %s261 = smul.u32 8, %s18
      %p262 = scmp.lt.s32.totalorder %s18, 1
      %s263 = scalar_select %p262, %s18, 1
      %s264 = smul.addr %s263, 2
      %s265 = scalar_lea.vmem %s6, %s264
      %v267 = vld [vmem:[%s0] sm:$0x3]
      %v268 = vld [vmem:[%s0 + $0x2] sm:$0x3]
      %v269 = vld [vmem:[%s1] sm:$0x1]
      %v270 = vld [vmem:[%s2] sm:$0x1]
      %vm271 = vcmask 1041408
      %v272 = vsel %vm271, %v267, 0.0
      %v273 = vsel %vm271, %v268, 0.0
      %v274 = vadd.f32 %v272, %v273
      %v275 = vmul.f32 %v274, 0.0078125
      %v276 = vmul.f32 %v275, %v275
      %v278 = vrot.slane %v276, 7
      %v280 = vsub.f32 %v275, %v278
      %v281 = vmax.f32 %v280, 0.0
      %v282 = vadd.f32 %v281, 1e-05
      %v283 = vrsqrt.pop %v282
      %v286 = vunpack.c.l.s4 1966171168
      %v287 = vunpack.c.0.s8 %v286
      %v288 = vlaneseq
      %v289 = vshrl.u32 %v288, 7
      %v290 = vsub.s32 %v287, %v289
      %v291 = vrot.slane %v283, %v290
      %v292 = vcombine.high %v291, %v291
      %v294 = vunpack.c.l.s4 1966171168
      %v295 = vunpack.c.0.s8 %v294
      %v296 = vlaneseq
      %v297 = vshrl.u32 %v296, 7
      %v298 = vsub.s32 %v295, %v297
      %v299 = vrot.slane %v292, %v298
      %v301 = vmul.f32 %v269, %v299
      %v302 = vmul.f32 %v275, %v301
      %v303 = vsub.f32 %v270, %v302
      %v304 = vld [vmem:[%s254] sm:$0xf]
      %v305 = vld [vmem:[%s254 + $0x4] sm:$0xf]
      %v306 = vld [vmem:[%s254 + $0x8] sm:$0xf]
      %v307 = vld [vmem:[%s254 + $0xc] sm:$0xf]
      %v308 = vld [vmem:[%s254 + $0x10] sm:$0xf]
      %v309 = vld [vmem:[%s254 + $0x14] sm:$0xf]
      %v310 = vld [vmem:[%s254 + $0x18] sm:$0xf]
      %v311 = vld [vmem:[%s254 + $0x1c] sm:$0xf]
      %v312 = vunpack.c.l.bf16 %v304
      %v313 = vunpack.c.l.bf16 %v305
      %v314 = vunpack.c.l.bf16 %v306
      %v315 = vunpack.c.l.bf16 %v307
      %v316 = vunpack.c.l.bf16 %v308
      %v317 = vunpack.c.l.bf16 %v309
      %v318 = vunpack.c.l.bf16 %v310
      %v319 = vunpack.c.l.bf16 %v311
      %v321 = vlaneseq
      %v322 = vshrl.u32 %v321, 7
      %v323 = vsub.s32 0, %v322
      %v324 = vrot.slane %v301, %v323
      %v326 = vmul.f32 %v312, %v324
      %v327 = vmul.f32 %v313, %v324
      %v328 = vmul.f32 %v314, %v324
      %v329 = vmul.f32 %v315, %v324
      %v330 = vmul.f32 %v316, %v324
      %v331 = vmul.f32 %v317, %v324
      %v332 = vmul.f32 %v318, %v324
      %v333 = vmul.f32 %v319, %v324
      %v335 = vlaneseq
      %v336 = vshrl.u32 %v335, 7
      %v337 = vsub.s32 0, %v336
      %v338 = vrot.slane %v303, %v337
      %v340 = vadd.f32 %v326, %v338
      %v341 = vadd.f32 %v327, %v338
      %v342 = vadd.f32 %v328, %v338
      %v343 = vadd.f32 %v329, %v338
      %v344 = vadd.f32 %v330, %v338
      %v345 = vadd.f32 %v331, %v338
      %v346 = vadd.f32 %v332, %v338
      %v347 = vadd.f32 %v333, %v338
      %v348 = vmax.f32 %v340, 0.0
      %v349 = vmax.f32 %v341, 0.0
      %v350 = vmax.f32 %v342, 0.0
      %v351 = vmax.f32 %v343, 0.0
      %v352 = vmax.f32 %v344, 0.0
      %v353 = vmax.f32 %v345, 0.0
      %v354 = vmax.f32 %v346, 0.0
      %v355 = vmax.f32 %v347, 0.0
      %v356 = vlaneseq
      %v357 = vshrl.u32 %v356, 7
      %v358 = vadd.s32 %v357, 8
      %v359 = vadd.s32 %v357, 16
      %v360 = vadd.s32 %v357, 24
      %v361 = vadd.s32 %v357, 32
      %v362 = vadd.s32 %v357, 40
      %v363 = vadd.s32 %v357, 48
      %v364 = vadd.s32 %v357, 56
      %v365 = vshra.s32 %v357, 3
      %v366 = vshra.s32 %v358, 3
      %v367 = vshra.s32 %v359, 3
      %v368 = vshra.s32 %v360, 3
      %v369 = vshra.s32 %v361, 3
      %v370 = vshra.s32 %v362, 3
      %v371 = vshra.s32 %v363, 3
      %v372 = vshra.s32 %v364, 3
      %v373 = vand.u32 %v365, 7
      %v374 = vand.u32 %v366, 7
      %v375 = vand.u32 %v367, 7
      %v376 = vand.u32 %v368, 7
      %v377 = vand.u32 %v369, 7
      %v378 = vand.u32 %v370, 7
      %v379 = vand.u32 %v371, 7
      %v380 = vand.u32 %v372, 7
      %v381 = vand.u32 %v357, 7
      %v382 = vand.u32 %v358, 7
      %v383 = vand.u32 %v359, 7
      %v384 = vand.u32 %v360, 7
      %v385 = vand.u32 %v361, 7
      %v386 = vand.u32 %v362, 7
      %v387 = vand.u32 %v363, 7
      %v388 = vand.u32 %v364, 7
      %vm389 = vcmp.ge.s32.totalorder %v373, 1
      %vm390 = vcmp.ge.s32.totalorder %v374, 1
      %vm391 = vcmp.ge.s32.totalorder %v375, 1
      %vm392 = vcmp.ge.s32.totalorder %v376, 1
      %vm393 = vcmp.ge.s32.totalorder %v377, 1
      %vm394 = vcmp.ge.s32.totalorder %v378, 1
      %vm395 = vcmp.ge.s32.totalorder %v379, 1
      %vm396 = vcmp.ge.s32.totalorder %v380, 1
      %vm397 = vcmp.lt.s32.totalorder %v373, 7
      %vm398 = vcmp.lt.s32.totalorder %v374, 7
      %vm399 = vcmp.lt.s32.totalorder %v375, 7
      %vm400 = vcmp.lt.s32.totalorder %v376, 7
      %vm401 = vcmp.lt.s32.totalorder %v377, 7
      %vm402 = vcmp.lt.s32.totalorder %v378, 7
      %vm403 = vcmp.lt.s32.totalorder %v379, 7
      %vm404 = vcmp.lt.s32.totalorder %v380, 7
      %vm405 = vcmp.ge.s32.totalorder %v381, 1
      %vm406 = vcmp.ge.s32.totalorder %v382, 1
      %vm407 = vcmp.ge.s32.totalorder %v383, 1
      %vm408 = vcmp.ge.s32.totalorder %v384, 1
      %vm409 = vcmp.ge.s32.totalorder %v385, 1
      %vm410 = vcmp.ge.s32.totalorder %v386, 1
      %vm411 = vcmp.ge.s32.totalorder %v387, 1
      %vm412 = vcmp.ge.s32.totalorder %v388, 1
      %vm413 = vcmp.lt.s32.totalorder %v381, 7
      %vm414 = vcmp.lt.s32.totalorder %v382, 7
      %vm415 = vcmp.lt.s32.totalorder %v383, 7
      %vm416 = vcmp.lt.s32.totalorder %v384, 7
      %vm417 = vcmp.lt.s32.totalorder %v385, 7
      %vm418 = vcmp.lt.s32.totalorder %v386, 7
      %vm419 = vcmp.lt.s32.totalorder %v387, 7
      %vm420 = vcmp.lt.s32.totalorder %v388, 7
      %v421 = vrot.slane %v348, 7
      %v422 = vrot.slane %v349, 7
      %v423 = vrot.slane %v350, 7
      %v424 = vrot.slane %v351, 7
      %v425 = vrot.slane %v352, 7
      %v426 = vrot.slane %v353, 7
      %v427 = vrot.slane %v354, 7
      %v428 = vrot.slane %v355, 7
      %vm429 = vcmp.lt.s32.totalorder %v357, 1
      %v430 = vsel %vm429, %v427, %v428
      %v431 = vsel %vm429, %v426, %v427
      %v432 = vsel %vm429, %v425, %v426
      %v433 = vsel %vm429, %v424, %v425
      %v434 = vsel %vm429, %v423, %v424
      %v435 = vsel %vm429, %v422, %v423
      %v436 = vsel %vm429, %v421, %v422
      %v437 = vsel %vm429, %v428, %v421
      %vm438 = vmand %vm389, %vm405
      %vm439 = vmand %vm390, %vm406
      %vm440 = vmand %vm391, %vm407
      %vm441 = vmand %vm392, %vm408
      %vm442 = vmand %vm393, %vm409
      %vm443 = vmand %vm394, %vm410
      %vm444 = vmand %vm395, %vm411
      %vm445 = vmand %vm396, %vm412
      %v446 = vsel %vm438, 1, 0
      %v447 = vsel %vm439, 1, 0
      %v448 = vsel %vm440, 1, 0
      %v449 = vsel %vm441, 1, 0
      %v450 = vsel %vm442, 1, 0
      %v451 = vsel %vm443, 1, 0
      %v452 = vsel %vm444, 1, 0
      %v453 = vsel %vm445, 1, 0
      %v454 = vcvt.s32.f32 %v446
      %v455 = vcvt.s32.f32 %v447
      %v456 = vcvt.s32.f32 %v448
      %v457 = vcvt.s32.f32 %v449
      %v458 = vcvt.s32.f32 %v450
      %v459 = vcvt.s32.f32 %v451
      %v460 = vcvt.s32.f32 %v452
      %v461 = vcvt.s32.f32 %v453
      %v462 = vmul.f32 %v430, %v454
      %v463 = vmul.f32 %v437, %v455
      %v464 = vmul.f32 %v436, %v456
      %v465 = vmul.f32 %v435, %v457
      %v466 = vmul.f32 %v434, %v458
      %v467 = vmul.f32 %v433, %v459
      %v468 = vmul.f32 %v432, %v460
      %v469 = vmul.f32 %v431, %v461
      %v470 = vpack.c.bf16 %v463, %v462
      %v471 = vpack.c.bf16 %v465, %v464
      %v472 = vpack.c.bf16 %v467, %v466
      %v473 = vpack.c.bf16 %v469, %v468
      %v474 = vsel %vm389, 1, 0
      %v475 = vsel %vm390, 1, 0
      %v476 = vsel %vm391, 1, 0
      %v477 = vsel %vm392, 1, 0
      %v478 = vsel %vm393, 1, 0
      %v479 = vsel %vm394, 1, 0
      %v480 = vsel %vm395, 1, 0
      %v481 = vsel %vm396, 1, 0
      %v482 = vcvt.s32.f32 %v474
      %v483 = vcvt.s32.f32 %v475
      %v484 = vcvt.s32.f32 %v476
      %v485 = vcvt.s32.f32 %v477
      %v486 = vcvt.s32.f32 %v478
      %v487 = vcvt.s32.f32 %v479
      %v488 = vcvt.s32.f32 %v480
      %v489 = vcvt.s32.f32 %v481
      %v490 = vmul.f32 %v355, %v482
      %v491 = vmul.f32 %v348, %v483
      %v492 = vmul.f32 %v349, %v484
      %v493 = vmul.f32 %v350, %v485
      %v494 = vmul.f32 %v351, %v486
      %v495 = vmul.f32 %v352, %v487
      %v496 = vmul.f32 %v353, %v488
      %v497 = vmul.f32 %v354, %v489
      %v498 = vpack.c.bf16 %v491, %v490
      %v499 = vpack.c.bf16 %v493, %v492
      %v500 = vpack.c.bf16 %v495, %v494
      %v501 = vpack.c.bf16 %v497, %v496
      %v502 = vrot.slane %v348, 1
      %v503 = vrot.slane %v349, 1
      %v504 = vrot.slane %v350, 1
      %v505 = vrot.slane %v351, 1
      %v506 = vrot.slane %v352, 1
      %v507 = vrot.slane %v353, 1
      %v508 = vrot.slane %v354, 1
      %v509 = vrot.slane %v355, 1
      %vm510 = vcmp.lt.s32.totalorder %v357, 7
      %v511 = vsel %vm510, %v508, %v509
      %v512 = vsel %vm510, %v507, %v508
      %v513 = vsel %vm510, %v506, %v507
      %v514 = vsel %vm510, %v505, %v506
      %v515 = vsel %vm510, %v504, %v505
      %v516 = vsel %vm510, %v503, %v504
      %v517 = vsel %vm510, %v502, %v503
      %v518 = vsel %vm510, %v509, %v502
      %vm519 = vmand %vm389, %vm413
      %vm520 = vmand %vm390, %vm414
      %vm521 = vmand %vm391, %vm415
      %vm522 = vmand %vm392, %vm416
      %vm523 = vmand %vm393, %vm417
      %vm524 = vmand %vm394, %vm418
      %vm525 = vmand %vm395, %vm419
      %vm526 = vmand %vm396, %vm420
      %v527 = vsel %vm519, 1, 0
      %v528 = vsel %vm520, 1, 0
      %v529 = vsel %vm521, 1, 0
      %v530 = vsel %vm522, 1, 0
      %v531 = vsel %vm523, 1, 0
      %v532 = vsel %vm524, 1, 0
      %v533 = vsel %vm525, 1, 0
      %v534 = vsel %vm526, 1, 0
      %v535 = vcvt.s32.f32 %v527
      %v536 = vcvt.s32.f32 %v528
      %v537 = vcvt.s32.f32 %v529
      %v538 = vcvt.s32.f32 %v530
      %v539 = vcvt.s32.f32 %v531
      %v540 = vcvt.s32.f32 %v532
      %v541 = vcvt.s32.f32 %v533
      %v542 = vcvt.s32.f32 %v534
      %v543 = vmul.f32 %v518, %v535
      %v544 = vmul.f32 %v517, %v536
      %v545 = vmul.f32 %v516, %v537
      %v546 = vmul.f32 %v515, %v538
      %v547 = vmul.f32 %v514, %v539
      %v548 = vmul.f32 %v513, %v540
      %v549 = vmul.f32 %v512, %v541
      %v550 = vmul.f32 %v511, %v542
      %v551 = vpack.c.bf16 %v544, %v543
      %v552 = vpack.c.bf16 %v546, %v545
      %v553 = vpack.c.bf16 %v548, %v547
      %v554 = vpack.c.bf16 %v550, %v549
      %v555 = vsel %vm405, 1, 0
      %v556 = vsel %vm406, 1, 0
      %v557 = vsel %vm407, 1, 0
      %v558 = vsel %vm408, 1, 0
      %v559 = vsel %vm409, 1, 0
      %v560 = vsel %vm410, 1, 0
      %v561 = vsel %vm411, 1, 0
      %v562 = vsel %vm412, 1, 0
      %v563 = vcvt.s32.f32 %v555
      %v564 = vcvt.s32.f32 %v556
      %v565 = vcvt.s32.f32 %v557
      %v566 = vcvt.s32.f32 %v558
      %v567 = vcvt.s32.f32 %v559
      %v568 = vcvt.s32.f32 %v560
      %v569 = vcvt.s32.f32 %v561
      %v570 = vcvt.s32.f32 %v562
      %v571 = vmul.f32 %v437, %v563
      %v572 = vmul.f32 %v436, %v564
      %v573 = vmul.f32 %v435, %v565
      %v574 = vmul.f32 %v434, %v566
      %v575 = vmul.f32 %v433, %v567
      %v576 = vmul.f32 %v432, %v568
      %v577 = vmul.f32 %v431, %v569
      %v578 = vmul.f32 %v430, %v570
      %v579 = vpack.c.bf16 %v572, %v571
      %v580 = vpack.c.bf16 %v574, %v573
      %v581 = vpack.c.bf16 %v576, %v575
      %v582 = vpack.c.bf16 %v578, %v577
      %v583 = vpack.c.bf16 %v349, %v348
      %v584 = vpack.c.bf16 %v351, %v350
      %v585 = vpack.c.bf16 %v353, %v352
      %v586 = vpack.c.bf16 %v355, %v354
      %v587 = vsel %vm413, 1, 0
      %v588 = vsel %vm414, 1, 0
      %v589 = vsel %vm415, 1, 0
      %v590 = vsel %vm416, 1, 0
      %v591 = vsel %vm417, 1, 0
      %v592 = vsel %vm418, 1, 0
      %v593 = vsel %vm419, 1, 0
      %v594 = vsel %vm420, 1, 0
      %v595 = vcvt.s32.f32 %v587
      %v596 = vcvt.s32.f32 %v588
      %v597 = vcvt.s32.f32 %v589
      %v598 = vcvt.s32.f32 %v590
      %v599 = vcvt.s32.f32 %v591
      %v600 = vcvt.s32.f32 %v592
      %v601 = vcvt.s32.f32 %v593
      %v602 = vcvt.s32.f32 %v594
      %v603 = vmul.f32 %v517, %v595
      %v604 = vmul.f32 %v516, %v596
      %v605 = vmul.f32 %v515, %v597
      %v606 = vmul.f32 %v514, %v598
      %v607 = vmul.f32 %v513, %v599
      %v608 = vmul.f32 %v512, %v600
      %v609 = vmul.f32 %v511, %v601
      %v610 = vmul.f32 %v518, %v602
      %v611 = vpack.c.bf16 %v604, %v603
      %v612 = vpack.c.bf16 %v606, %v605
      %v613 = vpack.c.bf16 %v608, %v607
      %v614 = vpack.c.bf16 %v610, %v609
      %vm615 = vmand %vm397, %vm405
      %vm616 = vmand %vm398, %vm406
      %vm617 = vmand %vm399, %vm407
      %vm618 = vmand %vm400, %vm408
      %vm619 = vmand %vm401, %vm409
      %vm620 = vmand %vm402, %vm410
      %vm621 = vmand %vm403, %vm411
      %vm622 = vmand %vm404, %vm412
      %v623 = vsel %vm615, 1, 0
      %v624 = vsel %vm616, 1, 0
      %v625 = vsel %vm617, 1, 0
      %v626 = vsel %vm618, 1, 0
      %v627 = vsel %vm619, 1, 0
      %v628 = vsel %vm620, 1, 0
      %v629 = vsel %vm621, 1, 0
      %v630 = vsel %vm622, 1, 0
      %v631 = vcvt.s32.f32 %v623
      %v632 = vcvt.s32.f32 %v624
      %v633 = vcvt.s32.f32 %v625
      %v634 = vcvt.s32.f32 %v626
      %v635 = vcvt.s32.f32 %v627
      %v636 = vcvt.s32.f32 %v628
      %v637 = vcvt.s32.f32 %v629
      %v638 = vcvt.s32.f32 %v630
      %v639 = vmul.f32 %v436, %v631
      %v640 = vmul.f32 %v435, %v632
      %v641 = vmul.f32 %v434, %v633
      %v642 = vmul.f32 %v433, %v634
      %v643 = vmul.f32 %v432, %v635
      %v644 = vmul.f32 %v431, %v636
      %v645 = vmul.f32 %v430, %v637
      %v646 = vmul.f32 %v437, %v638
      %v647 = vpack.c.bf16 %v640, %v639
      %v648 = vpack.c.bf16 %v642, %v641
      %v649 = vpack.c.bf16 %v644, %v643
      %v650 = vpack.c.bf16 %v646, %v645
      %v651 = vsel %vm397, 1, 0
      %v652 = vsel %vm398, 1, 0
      %v653 = vsel %vm399, 1, 0
      %v654 = vsel %vm400, 1, 0
      %v655 = vsel %vm401, 1, 0
      %v656 = vsel %vm402, 1, 0
      %v657 = vsel %vm403, 1, 0
      %v658 = vsel %vm404, 1, 0
      %v659 = vcvt.s32.f32 %v651
      %v660 = vcvt.s32.f32 %v652
      %v661 = vcvt.s32.f32 %v653
      %v662 = vcvt.s32.f32 %v654
      %v663 = vcvt.s32.f32 %v655
      %v664 = vcvt.s32.f32 %v656
      %v665 = vcvt.s32.f32 %v657
      %v666 = vcvt.s32.f32 %v658
      %v667 = vmul.f32 %v349, %v659
      %v668 = vmul.f32 %v350, %v660
      %v669 = vmul.f32 %v351, %v661
      %v670 = vmul.f32 %v352, %v662
      %v671 = vmul.f32 %v353, %v663
      %v672 = vmul.f32 %v354, %v664
      %v673 = vmul.f32 %v355, %v665
      %v674 = vmul.f32 %v348, %v666
      %v675 = vpack.c.bf16 %v668, %v667
      %v676 = vpack.c.bf16 %v670, %v669
      %v677 = vpack.c.bf16 %v672, %v671
      %v678 = vpack.c.bf16 %v674, %v673
      %vm679 = vmand %vm397, %vm413
      %vm680 = vmand %vm398, %vm414
      %vm681 = vmand %vm399, %vm415
      %vm682 = vmand %vm400, %vm416
      %vm683 = vmand %vm401, %vm417
      %vm684 = vmand %vm402, %vm418
      %vm685 = vmand %vm403, %vm419
      %vm686 = vmand %vm404, %vm420
      %v687 = vsel %vm679, 1, 0
      %v688 = vsel %vm680, 1, 0
      %v689 = vsel %vm681, 1, 0
      %v690 = vsel %vm682, 1, 0
      %v691 = vsel %vm683, 1, 0
      %v692 = vsel %vm684, 1, 0
      %v693 = vsel %vm685, 1, 0
      %v694 = vsel %vm686, 1, 0
      %v695 = vcvt.s32.f32 %v687
      %v696 = vcvt.s32.f32 %v688
      %v697 = vcvt.s32.f32 %v689
      %v698 = vcvt.s32.f32 %v690
      %v699 = vcvt.s32.f32 %v691
      %v700 = vcvt.s32.f32 %v692
      %v701 = vcvt.s32.f32 %v693
      %v702 = vcvt.s32.f32 %v694
      %v703 = vmul.f32 %v516, %v695
      %v704 = vmul.f32 %v515, %v696
      %v705 = vmul.f32 %v514, %v697
      %v706 = vmul.f32 %v513, %v698
      %v707 = vmul.f32 %v512, %v699
      %v708 = vmul.f32 %v511, %v700
      %v709 = vmul.f32 %v518, %v701
      %v710 = vmul.f32 %v517, %v702
      %v711 = vpack.c.bf16 %v704, %v703
      %v712 = vpack.c.bf16 %v706, %v705
      %v713 = vpack.c.bf16 %v708, %v707
      %v714 = vpack.c.bf16 %v710, %v709
      %v715 = vld [vmem:[%s4] sm:$0xf]
      %v716 = vld [vmem:[%s4 + $0x4] sm:$0xf]
      %v717 = vld [vmem:[%s4 + $0x8] sm:$0xf]
      %v718 = vld [vmem:[%s4 + $0xc] sm:$0xf]
      %v719 = vld [vmem:[%s4 + $0x10] sm:$0xf]
      %v720 = vld [vmem:[%s4 + $0x14] sm:$0xf]
      %v721 = vld [vmem:[%s4 + $0x18] sm:$0xf]
      %v722 = vld [vmem:[%s4 + $0x1c] sm:$0xf]
      %v723 = vld [vmem:[%s4 + $0x20] sm:$0xf]
      %v724 = vld [vmem:[%s4 + $0x24] sm:$0xf]
      %v725 = vld [vmem:[%s4 + $0x28] sm:$0xf]
      %v726 = vld [vmem:[%s4 + $0x2c] sm:$0xf]
      %v727 = vld [vmem:[%s4 + $0x30] sm:$0xf]
      %v728 = vld [vmem:[%s4 + $0x34] sm:$0xf]
      %v729 = vld [vmem:[%s4 + $0x38] sm:$0xf]
      %v730 = vld [vmem:[%s4 + $0x3c] sm:$0xf]
      %v731 = vld [vmem:[%s4 + $0x40] sm:$0xf]
      %v732 = vld [vmem:[%s4 + $0x44] sm:$0xf]
      %v733 = vld [vmem:[%s4 + $0x48] sm:$0xf]
      %v734 = vld [vmem:[%s4 + $0x4c] sm:$0xf]
      %v735 = vld [vmem:[%s4 + $0x50] sm:$0xf]
      %v736 = vld [vmem:[%s4 + $0x54] sm:$0xf]
      %v737 = vld [vmem:[%s4 + $0x58] sm:$0xf]
      %v738 = vld [vmem:[%s4 + $0x5c] sm:$0xf]
      %v739 = vld [vmem:[%s4 + $0x60] sm:$0xf]
      %v740 = vld [vmem:[%s4 + $0x64] sm:$0xf]
      %v741 = vld [vmem:[%s4 + $0x68] sm:$0xf]
      %v742 = vld [vmem:[%s4 + $0x6c] sm:$0xf]
      %v743 = vld [vmem:[%s4 + $0x70] sm:$0xf]
      %v744 = vld [vmem:[%s4 + $0x74] sm:$0xf]
      %v745 = vld [vmem:[%s4 + $0x78] sm:$0xf]
      %v746 = vld [vmem:[%s4 + $0x7c] sm:$0xf]
      %v747 = vld [vmem:[%s4 + $0x80] sm:$0xf]
      %v748 = vld [vmem:[%s4 + $0x84] sm:$0xf]
      %v749 = vld [vmem:[%s4 + $0x88] sm:$0xf]
      %v750 = vld [vmem:[%s4 + $0x8c] sm:$0xf]
      %v751 = vld [vmem:[%s4 + $0x90] sm:$0xf]
      %v752 = vld [vmem:[%s4 + $0x94] sm:$0xf]
      %v753 = vld [vmem:[%s4 + $0x98] sm:$0xf]
      %v754 = vld [vmem:[%s4 + $0x9c] sm:$0xf]
      %v755 = vld [vmem:[%s4 + $0xa0] sm:$0xf]
      %v756 = vld [vmem:[%s4 + $0xa4] sm:$0xf]
      %v757 = vld [vmem:[%s4 + $0xa8] sm:$0xf]
      %v758 = vld [vmem:[%s4 + $0xac] sm:$0xf]
      %v759 = vld [vmem:[%s4 + $0xb0] sm:$0xf]
      %v760 = vld [vmem:[%s4 + $0xb4] sm:$0xf]
      %v761 = vld [vmem:[%s4 + $0xb8] sm:$0xf]
      %v762 = vld [vmem:[%s4 + $0xbc] sm:$0xf]
      %v763 = vld [vmem:[%s4 + $0xc0] sm:$0xf]
      %v764 = vld [vmem:[%s4 + $0xc4] sm:$0xf]
      %v765 = vld [vmem:[%s4 + $0xc8] sm:$0xf]
      %v766 = vld [vmem:[%s4 + $0xcc] sm:$0xf]
      %v767 = vld [vmem:[%s4 + $0xd0] sm:$0xf]
      %v768 = vld [vmem:[%s4 + $0xd4] sm:$0xf]
      %v769 = vld [vmem:[%s4 + $0xd8] sm:$0xf]
      %v770 = vld [vmem:[%s4 + $0xdc] sm:$0xf]
      %v771 = vld [vmem:[%s4 + $0xe0] sm:$0xf]
      %v772 = vld [vmem:[%s4 + $0xe4] sm:$0xf]
      %v773 = vld [vmem:[%s4 + $0xe8] sm:$0xf]
      %v774 = vld [vmem:[%s4 + $0xec] sm:$0xf]
      %v775 = vld [vmem:[%s4 + $0xf0] sm:$0xf]
      %v776 = vld [vmem:[%s4 + $0xf4] sm:$0xf]
      %v777 = vld [vmem:[%s4 + $0xf8] sm:$0xf]
      %v778 = vld [vmem:[%s4 + $0xfc] sm:$0xf]
      %v779 = vld [vmem:[%s4 + $0x100] sm:$0xf]
      %v780 = vld [vmem:[%s4 + $0x104] sm:$0xf]
      %v781 = vld [vmem:[%s4 + $0x108] sm:$0xf]
      %v782 = vld [vmem:[%s4 + $0x10c] sm:$0xf]
      %v783 = vld [vmem:[%s4 + $0x110] sm:$0xf]
      %v784 = vld [vmem:[%s4 + $0x114] sm:$0xf]
      %v785 = vld [vmem:[%s4 + $0x118] sm:$0xf]
      %v786 = vld [vmem:[%s4 + $0x11c] sm:$0xf]
      %v787 = vld [vmem:[%s4 + $0x120] sm:$0xf]
      %v788 = vld [vmem:[%s4 + $0x124] sm:$0xf]
      %v789 = vld [vmem:[%s4 + $0x128] sm:$0xf]
      %v790 = vld [vmem:[%s4 + $0x12c] sm:$0xf]
      %v791 = vld [vmem:[%s4 + $0x130] sm:$0xf]
      %v792 = vld [vmem:[%s4 + $0x134] sm:$0xf]
      %v793 = vld [vmem:[%s4 + $0x138] sm:$0xf]
      %v794 = vld [vmem:[%s4 + $0x13c] sm:$0xf]
      %v795 = vld [vmem:[%s4 + $0x140] sm:$0xf]
      %v796 = vld [vmem:[%s4 + $0x144] sm:$0xf]
      %v797 = vld [vmem:[%s4 + $0x148] sm:$0xf]
      %v798 = vld [vmem:[%s4 + $0x14c] sm:$0xf]
      %v799 = vld [vmem:[%s4 + $0x150] sm:$0xf]
      %v800 = vld [vmem:[%s4 + $0x154] sm:$0xf]
      %v801 = vld [vmem:[%s4 + $0x158] sm:$0xf]
      %v802 = vld [vmem:[%s4 + $0x15c] sm:$0xf]
      %v803 = vld [vmem:[%s4 + $0x160] sm:$0xf]
      %v804 = vld [vmem:[%s4 + $0x164] sm:$0xf]
      %v805 = vld [vmem:[%s4 + $0x168] sm:$0xf]
      %v806 = vld [vmem:[%s4 + $0x16c] sm:$0xf]
      %v807 = vld [vmem:[%s4 + $0x170] sm:$0xf]
      %v808 = vld [vmem:[%s4 + $0x174] sm:$0xf]
      %v809 = vld [vmem:[%s4 + $0x178] sm:$0xf]
      %v810 = vld [vmem:[%s4 + $0x17c] sm:$0xf]
      %v811 = vld [vmem:[%s4 + $0x180] sm:$0xf]
      %v812 = vld [vmem:[%s4 + $0x184] sm:$0xf]
      %v813 = vld [vmem:[%s4 + $0x188] sm:$0xf]
      %v814 = vld [vmem:[%s4 + $0x18c] sm:$0xf]
      %v815 = vld [vmem:[%s4 + $0x190] sm:$0xf]
      %v816 = vld [vmem:[%s4 + $0x194] sm:$0xf]
      %v817 = vld [vmem:[%s4 + $0x198] sm:$0xf]
      %v818 = vld [vmem:[%s4 + $0x19c] sm:$0xf]
      %v819 = vld [vmem:[%s4 + $0x1a0] sm:$0xf]
      %v820 = vld [vmem:[%s4 + $0x1a4] sm:$0xf]
      %v821 = vld [vmem:[%s4 + $0x1a8] sm:$0xf]
      %v822 = vld [vmem:[%s4 + $0x1ac] sm:$0xf]
      %v823 = vld [vmem:[%s4 + $0x1b0] sm:$0xf]
      %v824 = vld [vmem:[%s4 + $0x1b4] sm:$0xf]
      %v825 = vld [vmem:[%s4 + $0x1b8] sm:$0xf]
      %v826 = vld [vmem:[%s4 + $0x1bc] sm:$0xf]
      %v827 = vld [vmem:[%s4 + $0x1c0] sm:$0xf]
      %v828 = vld [vmem:[%s4 + $0x1c4] sm:$0xf]
      %v829 = vld [vmem:[%s4 + $0x1c8] sm:$0xf]
      %v830 = vld [vmem:[%s4 + $0x1cc] sm:$0xf]
      %v831 = vld [vmem:[%s4 + $0x1d0] sm:$0xf]
      %v832 = vld [vmem:[%s4 + $0x1d4] sm:$0xf]
      %v833 = vld [vmem:[%s4 + $0x1d8] sm:$0xf]
      %v834 = vld [vmem:[%s4 + $0x1dc] sm:$0xf]
      %v835 = vld [vmem:[%s4 + $0x1e0] sm:$0xf]
      %v836 = vld [vmem:[%s4 + $0x1e4] sm:$0xf]
      %v837 = vld [vmem:[%s4 + $0x1e8] sm:$0xf]
      %v838 = vld [vmem:[%s4 + $0x1ec] sm:$0xf]
      %v839 = vld [vmem:[%s4 + $0x1f0] sm:$0xf]
      %v840 = vld [vmem:[%s4 + $0x1f4] sm:$0xf]
      %v841 = vld [vmem:[%s4 + $0x1f8] sm:$0xf]
      %v842 = vld [vmem:[%s4 + $0x1fc] sm:$0xf]
      %v843 = vld [vmem:[%s4 + $0x200] sm:$0xf]
      %v844 = vld [vmem:[%s4 + $0x204] sm:$0xf]
      %v845 = vld [vmem:[%s4 + $0x208] sm:$0xf]
      %v846 = vld [vmem:[%s4 + $0x20c] sm:$0xf]
      %v847 = vld [vmem:[%s4 + $0x210] sm:$0xf]
      %v848 = vld [vmem:[%s4 + $0x214] sm:$0xf]
      %v849 = vld [vmem:[%s4 + $0x218] sm:$0xf]
      %v850 = vld [vmem:[%s4 + $0x21c] sm:$0xf]
      %v851 = vld [vmem:[%s4 + $0x220] sm:$0xf]
      %v852 = vld [vmem:[%s4 + $0x224] sm:$0xf]
      %v853 = vld [vmem:[%s4 + $0x228] sm:$0xf]
      %v854 = vld [vmem:[%s4 + $0x22c] sm:$0xf]
      %v855 = vld [vmem:[%s4 + $0x230] sm:$0xf]
      %v856 = vld [vmem:[%s4 + $0x234] sm:$0xf]
      %v857 = vld [vmem:[%s4 + $0x238] sm:$0xf]
      %v858 = vld [vmem:[%s4 + $0x23c] sm:$0xf]
      %v1003 = vunpack.c.l.b16 %v715
      %v1004 = vunpack.c.l.b16 %v716
      %v1005 = vunpack.c.l.b16 %v717
      %v1006 = vunpack.c.l.b16 %v718
      %v1007 = vunpack.c.l.b16 %v719
      %v1008 = vunpack.c.l.b16 %v720
      %v1009 = vunpack.c.l.b16 %v721
      %v1010 = vunpack.c.l.b16 %v722
      %v1011 = vunpack.c.l.b16 %v723
      %v1012 = vunpack.c.l.b16 %v724
      %v1013 = vunpack.c.l.b16 %v725
      %v1014 = vunpack.c.l.b16 %v726
      %v1015 = vunpack.c.l.b16 %v727
      %v1016 = vunpack.c.l.b16 %v728
      %v1017 = vunpack.c.l.b16 %v729
      %v1018 = vunpack.c.l.b16 %v730
      %v1019 = vunpack.c.l.b16 %v731
      %v1020 = vunpack.c.l.b16 %v732
      %v1021 = vunpack.c.l.b16 %v733
      %v1022 = vunpack.c.l.b16 %v734
      %v1023 = vunpack.c.l.b16 %v735
      %v1024 = vunpack.c.l.b16 %v736
      %v1025 = vunpack.c.l.b16 %v737
      %v1026 = vunpack.c.l.b16 %v738
      %v1027 = vunpack.c.l.b16 %v739
      %v1028 = vunpack.c.l.b16 %v740
      %v1029 = vunpack.c.l.b16 %v741
      %v1030 = vunpack.c.l.b16 %v742
      %v1031 = vunpack.c.l.b16 %v743
      %v1032 = vunpack.c.l.b16 %v744
      %v1033 = vunpack.c.l.b16 %v745
      %v1034 = vunpack.c.l.b16 %v746
      %v1035 = vunpack.c.l.b16 %v747
      %v1036 = vunpack.c.l.b16 %v748
      %v1037 = vunpack.c.l.b16 %v749
      %v1038 = vunpack.c.l.b16 %v750
      %v1039 = vunpack.c.l.b16 %v751
      %v1040 = vunpack.c.l.b16 %v752
      %v1041 = vunpack.c.l.b16 %v753
      %v1042 = vunpack.c.l.b16 %v754
      %v1043 = vunpack.c.l.b16 %v755
      %v1044 = vunpack.c.l.b16 %v756
      %v1045 = vunpack.c.l.b16 %v757
      %v1046 = vunpack.c.l.b16 %v758
      %v1047 = vunpack.c.l.b16 %v759
      %v1048 = vunpack.c.l.b16 %v760
      %v1049 = vunpack.c.l.b16 %v761
      %v1050 = vunpack.c.l.b16 %v762
      %v1051 = vunpack.c.l.b16 %v763
      %v1052 = vunpack.c.l.b16 %v764
      %v1053 = vunpack.c.l.b16 %v765
      %v1054 = vunpack.c.l.b16 %v766
      %v1055 = vunpack.c.l.b16 %v767
      %v1056 = vunpack.c.l.b16 %v768
      %v1057 = vunpack.c.l.b16 %v769
      %v1058 = vunpack.c.l.b16 %v770
      %v1059 = vunpack.c.l.b16 %v771
      %v1060 = vunpack.c.l.b16 %v772
      %v1061 = vunpack.c.l.b16 %v773
      %v1062 = vunpack.c.l.b16 %v774
      %v1063 = vunpack.c.l.b16 %v775
      %v1064 = vunpack.c.l.b16 %v776
      %v1065 = vunpack.c.l.b16 %v777
      %v1066 = vunpack.c.l.b16 %v778
      %v1067 = vunpack.c.l.b16 %v779
      %v1068 = vunpack.c.l.b16 %v780
      %v1069 = vunpack.c.l.b16 %v781
      %v1070 = vunpack.c.l.b16 %v782
      %v1071 = vunpack.c.l.b16 %v783
      %v1072 = vunpack.c.l.b16 %v784
      %v1073 = vunpack.c.l.b16 %v785
      %v1074 = vunpack.c.l.b16 %v786
      %v1075 = vunpack.c.l.b16 %v787
      %v1076 = vunpack.c.l.b16 %v788
      %v1077 = vunpack.c.l.b16 %v789
      %v1078 = vunpack.c.l.b16 %v790
      %v1079 = vunpack.c.l.b16 %v791
      %v1080 = vunpack.c.l.b16 %v792
      %v1081 = vunpack.c.l.b16 %v793
      %v1082 = vunpack.c.l.b16 %v794
      %v1083 = vunpack.c.l.b16 %v795
      %v1084 = vunpack.c.l.b16 %v796
      %v1085 = vunpack.c.l.b16 %v797
      %v1086 = vunpack.c.l.b16 %v798
      %v1087 = vunpack.c.l.b16 %v799
      %v1088 = vunpack.c.l.b16 %v800
      %v1089 = vunpack.c.l.b16 %v801
      %v1090 = vunpack.c.l.b16 %v802
      %v1091 = vunpack.c.l.b16 %v803
      %v1092 = vunpack.c.l.b16 %v804
      %v1093 = vunpack.c.l.b16 %v805
      %v1094 = vunpack.c.l.b16 %v806
      %v1095 = vunpack.c.l.b16 %v807
      %v1096 = vunpack.c.l.b16 %v808
      %v1097 = vunpack.c.l.b16 %v809
      %v1098 = vunpack.c.l.b16 %v810
      %v1099 = vunpack.c.l.b16 %v811
      %v1100 = vunpack.c.l.b16 %v812
      %v1101 = vunpack.c.l.b16 %v813
      %v1102 = vunpack.c.l.b16 %v814
      %v1103 = vunpack.c.l.b16 %v815
      %v1104 = vunpack.c.l.b16 %v816
      %v1105 = vunpack.c.l.b16 %v817
      %v1106 = vunpack.c.l.b16 %v818
      %v1107 = vunpack.c.l.b16 %v819
      %v1108 = vunpack.c.l.b16 %v820
      %v1109 = vunpack.c.l.b16 %v821
      %v1110 = vunpack.c.l.b16 %v822
      %v1111 = vunpack.c.l.b16 %v823
      %v1112 = vunpack.c.l.b16 %v824
      %v1113 = vunpack.c.l.b16 %v825
      %v1114 = vunpack.c.l.b16 %v826
      %v1115 = vunpack.c.l.b16 %v827
      %v1116 = vunpack.c.l.b16 %v828
      %v1117 = vunpack.c.l.b16 %v829
      %v1118 = vunpack.c.l.b16 %v830
      %v1119 = vunpack.c.l.b16 %v831
      %v1120 = vunpack.c.l.b16 %v832
      %v1121 = vunpack.c.l.b16 %v833
      %v1122 = vunpack.c.l.b16 %v834
      %v1123 = vunpack.c.l.b16 %v835
      %v1124 = vunpack.c.l.b16 %v836
      %v1125 = vunpack.c.l.b16 %v837
      %v1126 = vunpack.c.l.b16 %v838
      %v1127 = vunpack.c.l.b16 %v839
      %v1128 = vunpack.c.l.b16 %v840
      %v1129 = vunpack.c.l.b16 %v841
      %v1130 = vunpack.c.l.b16 %v842
      %v1131 = vunpack.c.l.b16 %v843
      %v1132 = vunpack.c.l.b16 %v844
      %v1133 = vunpack.c.l.b16 %v845
      %v1134 = vunpack.c.l.b16 %v846
      %v1135 = vunpack.c.l.b16 %v847
      %v1136 = vunpack.c.l.b16 %v848
      %v1137 = vunpack.c.l.b16 %v849
      %v1138 = vunpack.c.l.b16 %v850
      %v1139 = vunpack.c.l.b16 %v851
      %v1140 = vunpack.c.l.b16 %v852
      %v1141 = vunpack.c.l.b16 %v853
      %v1142 = vunpack.c.l.b16 %v854
      %v1143 = vunpack.c.l.b16 %v855
      %v1144 = vunpack.c.l.b16 %v856
      %v1145 = vunpack.c.l.b16 %v857
      %v1146 = vunpack.c.l.b16 %v858
      %v1147 = vpack.c.b16 %v1004, %v1003
      %v1148 = vpack.c.b16 %v1006, %v1005
      %v1149 = vpack.c.b16 %v1008, %v1007
      %v1150 = vpack.c.b16 %v1010, %v1009
      %v1151 = vpack.c.b16 %v1012, %v1011
      %v1152 = vpack.c.b16 %v1014, %v1013
      %v1153 = vpack.c.b16 %v1016, %v1015
      %v1154 = vpack.c.b16 %v1018, %v1017
      %v1155 = vpack.c.b16 %v1020, %v1019
      %v1156 = vpack.c.b16 %v1022, %v1021
      %v1157 = vpack.c.b16 %v1024, %v1023
      %v1158 = vpack.c.b16 %v1026, %v1025
      %v1159 = vpack.c.b16 %v1028, %v1027
      %v1160 = vpack.c.b16 %v1030, %v1029
      %v1161 = vpack.c.b16 %v1032, %v1031
      %v1162 = vpack.c.b16 %v1034, %v1033
      %v1163 = vpack.c.b16 %v1036, %v1035
      %v1164 = vpack.c.b16 %v1038, %v1037
      %v1165 = vpack.c.b16 %v1040, %v1039
      %v1166 = vpack.c.b16 %v1042, %v1041
      %v1167 = vpack.c.b16 %v1044, %v1043
      %v1168 = vpack.c.b16 %v1046, %v1045
      %v1169 = vpack.c.b16 %v1048, %v1047
      %v1170 = vpack.c.b16 %v1050, %v1049
      %v1171 = vpack.c.b16 %v1052, %v1051
      %v1172 = vpack.c.b16 %v1054, %v1053
      %v1173 = vpack.c.b16 %v1056, %v1055
      %v1174 = vpack.c.b16 %v1058, %v1057
      %v1175 = vpack.c.b16 %v1060, %v1059
      %v1176 = vpack.c.b16 %v1062, %v1061
      %v1177 = vpack.c.b16 %v1064, %v1063
      %v1178 = vpack.c.b16 %v1066, %v1065
      %v1179 = vpack.c.b16 %v1068, %v1067
      %v1180 = vpack.c.b16 %v1070, %v1069
      %v1181 = vpack.c.b16 %v1072, %v1071
      %v1182 = vpack.c.b16 %v1074, %v1073
      %v1183 = vpack.c.b16 %v1076, %v1075
      %v1184 = vpack.c.b16 %v1078, %v1077
      %v1185 = vpack.c.b16 %v1080, %v1079
      %v1186 = vpack.c.b16 %v1082, %v1081
      %v1187 = vpack.c.b16 %v1084, %v1083
      %v1188 = vpack.c.b16 %v1086, %v1085
      %v1189 = vpack.c.b16 %v1088, %v1087
      %v1190 = vpack.c.b16 %v1090, %v1089
      %v1191 = vpack.c.b16 %v1092, %v1091
      %v1192 = vpack.c.b16 %v1094, %v1093
      %v1193 = vpack.c.b16 %v1096, %v1095
      %v1194 = vpack.c.b16 %v1098, %v1097
      %v1195 = vpack.c.b16 %v1100, %v1099
      %v1196 = vpack.c.b16 %v1102, %v1101
      %v1197 = vpack.c.b16 %v1104, %v1103
      %v1198 = vpack.c.b16 %v1106, %v1105
      %v1199 = vpack.c.b16 %v1108, %v1107
      %v1200 = vpack.c.b16 %v1110, %v1109
      %v1201 = vpack.c.b16 %v1112, %v1111
      %v1202 = vpack.c.b16 %v1114, %v1113
      %v1203 = vpack.c.b16 %v1116, %v1115
      %v1204 = vpack.c.b16 %v1118, %v1117
      %v1205 = vpack.c.b16 %v1120, %v1119
      %v1206 = vpack.c.b16 %v1122, %v1121
      %v1207 = vpack.c.b16 %v1124, %v1123
      %v1208 = vpack.c.b16 %v1126, %v1125
      %v1209 = vpack.c.b16 %v1128, %v1127
      %v1210 = vpack.c.b16 %v1130, %v1129
      %v1211 = vpack.c.b16 %v1132, %v1131
      %v1212 = vpack.c.b16 %v1134, %v1133
      %v1213 = vpack.c.b16 %v1136, %v1135
      %v1214 = vpack.c.b16 %v1138, %v1137
      %v1215 = vpack.c.b16 %v1140, %v1139
      %v1216 = vpack.c.b16 %v1142, %v1141
      %v1217 = vpack.c.b16 %v1144, %v1143
      %v1218 = vpack.c.b16 %v1146, %v1145
      %1291 = vmatprep.subr.bf16.mxu0 0
      %1292 = vmatpush1.bf16.msra.mxu0 %v1147
      %1293 = vmatprep.subr.bf16.mxu0 0
      %1294 = vmatpush1.bf16.msra.mxu0 %v1148
      %1295 = vmatprep.subr.bf16.mxu0 0
      %1296 = vmatpush1.bf16.msra.mxu0 %v1149
      %1297 = vmatprep.subr.bf16.mxu0 0
      %1298 = vmatpush1.bf16.msra.mxu0 %v1150
      %1299 = vmatprep.subr.bf16.mxu0 0
      %1300 = vmatpush1.bf16.msra.mxu0 %v1151
      %1301 = vmatprep.subr.bf16.mxu0 0
      %1302 = vmatpush1.bf16.msra.mxu0 %v1152
      %1303 = vmatprep.subr.bf16.mxu0 0
      %1304 = vmatpush1.bf16.msra.mxu0 %v1153
      %1305 = vmatprep.subr.bf16.mxu0 0
      %1306 = vmatpush1.bf16.msra.mxu0 %v1154
      %1307 = vmatprep.subr.bf16.mxu0 0
      %1308 = vmatpush1.bf16.msra.mxu0 %v1155
      %1309 = vmatprep.subr.bf16.mxu0 0
      %1310 = vmatpush1.bf16.msra.mxu0 %v1156
      %1311 = vmatprep.subr.bf16.mxu0 0
      %1312 = vmatpush1.bf16.msra.mxu0 %v1157
      %1313 = vmatprep.subr.bf16.mxu0 0
      %1314 = vmatpush1.bf16.msra.mxu0 %v1158
      %1315 = vmatprep.subr.bf16.mxu0 0
      %1316 = vmatpush1.bf16.msra.mxu0 %v1159
      %1317 = vmatprep.subr.bf16.mxu0 0
      %1318 = vmatpush1.bf16.msra.mxu0 %v1160
      %1319 = vmatprep.subr.bf16.mxu0 0
      %1320 = vmatpush1.bf16.msra.mxu0 %v1161
      %1321 = vmatprep.subr.bf16.mxu0 0
      %1322 = vmatpush1.bf16.msra.mxu0 %v1162
      %1323 = vmatprep.mubr.bf16.mxu0 %v498
      %1324 = vmatmul.mubr.bf16.gmra.mrb[0].mxu0 %v470
      %v1325 = vpop.f32.mrb[0].mxu0
      %v1326 = vadd.f32 0.0, %v1325
      %v1327 = vpop.f32.mrb[0].mxu0
      %v1328 = vpop.f32.mrb[0].mxu0
      %v1329 = vadd.f32 0.0, %v1328
      %v1330 = vpop.f32.mrb[0].mxu0
      %1331 = vmatprep.mubr.bf16.mxu0 %v499
      %1332 = vmatmul.mubr.bf16.gmra.mrb[0].mxu0 %v471
      %v1333 = vpop.f32.mrb[0].mxu0
      %v1334 = vadd.f32 0.0, %v1333
      %v1335 = vpop.f32.mrb[0].mxu0
      %v1336 = vpop.f32.mrb[0].mxu0
      %v1337 = vadd.f32 0.0, %v1336
      %v1338 = vpop.f32.mrb[0].mxu0
      %1339 = vmatprep.mubr.bf16.mxu0 %v500
      %1340 = vmatmul.mubr.bf16.gmra.mrb[0].mxu0 %v472
      %v1341 = vpop.f32.mrb[0].mxu0
      %v1342 = vadd.f32 0.0, %v1341
      %v1343 = vpop.f32.mrb[0].mxu0
      %v1344 = vpop.f32.mrb[0].mxu0
      %v1345 = vadd.f32 0.0, %v1344
      %v1346 = vpop.f32.mrb[0].mxu0
      %1347 = vmatprep.mubr.bf16.mxu0 %v501
      %1348 = vmatmul.mubr.bf16.gmra.mrb[0].mxu0 %v473
      %v1349 = vpop.f32.mrb[0].mxu0
      %v1350 = vadd.f32 0.0, %v1349
      %v1351 = vpop.f32.mrb[0].mxu0
      %v1352 = vpop.f32.mrb[0].mxu0
      %v1353 = vadd.f32 0.0, %v1352
      %v1354 = vpop.f32.mrb[0].mxu0
      %1355 = vdwg.mxu0
      %1356 = vmatprep.subr.bf16.mxu0 0
      %1357 = vmatpush1.bf16.msra.mxu0 %v1163
      %1358 = vmatprep.subr.bf16.mxu0 0
      %1359 = vmatpush1.bf16.msra.mxu0 %v1164
      %1360 = vmatprep.subr.bf16.mxu0 0
      %1361 = vmatpush1.bf16.msra.mxu0 %v1165
      %1362 = vmatprep.subr.bf16.mxu0 0
      %1363 = vmatpush1.bf16.msra.mxu0 %v1166
      %1364 = vmatprep.subr.bf16.mxu0 0
      %1365 = vmatpush1.bf16.msra.mxu0 %v1167
      %1366 = vmatprep.subr.bf16.mxu0 0
      %1367 = vmatpush1.bf16.msra.mxu0 %v1168
      %1368 = vmatprep.subr.bf16.mxu0 0
      %1369 = vmatpush1.bf16.msra.mxu0 %v1169
      %1370 = vmatprep.subr.bf16.mxu0 0
      %1371 = vmatpush1.bf16.msra.mxu0 %v1170
      %1372 = vmatprep.subr.bf16.mxu0 0
      %1373 = vmatpush1.bf16.msra.mxu0 %v1171
      %1374 = vmatprep.subr.bf16.mxu0 0
      %1375 = vmatpush1.bf16.msra.mxu0 %v1172
      %1376 = vmatprep.subr.bf16.mxu0 0
      %1377 = vmatpush1.bf16.msra.mxu0 %v1173
      %1378 = vmatprep.subr.bf16.mxu0 0
      %1379 = vmatpush1.bf16.msra.mxu0 %v1174
      %1380 = vmatprep.subr.bf16.mxu0 0
      %1381 = vmatpush1.bf16.msra.mxu0 %v1175
      %1382 = vmatprep.subr.bf16.mxu0 0
      %1383 = vmatpush1.bf16.msra.mxu0 %v1176
      %1384 = vmatprep.subr.bf16.mxu0 0
      %1385 = vmatpush1.bf16.msra.mxu0 %v1177
      %1386 = vmatprep.subr.bf16.mxu0 0
      %1387 = vmatpush1.bf16.msra.mxu0 %v1178
      %1388 = vmatprep.mubr.bf16.mxu0 %v579
      %1389 = vmatmul.mubr.bf16.gmra.mrb[0].mxu0 %v551
      %v1390 = vpop.f32.mrb[0].mxu0
      %v1391 = vadd.f32 %v1326, %v1390
      %v1392 = vpop.f32.mrb[0].mxu0
      %v1393 = vpop.f32.mrb[0].mxu0
      %v1394 = vadd.f32 %v1329, %v1393
      %v1395 = vpop.f32.mrb[0].mxu0
      %1396 = vmatprep.mubr.bf16.mxu0 %v580
      %1397 = vmatmul.mubr.bf16.gmra.mrb[0].mxu0 %v552
      %v1398 = vpop.f32.mrb[0].mxu0
      %v1399 = vadd.f32 %v1334, %v1398
      %v1400 = vpop.f32.mrb[0].mxu0
      %v1401 = vpop.f32.mrb[0].mxu0
      %v1402 = vadd.f32 %v1337, %v1401
      %v1403 = vpop.f32.mrb[0].mxu0
      %1404 = vmatprep.mubr.bf16.mxu0 %v581
      %1405 = vmatmul.mubr.bf16.gmra.mrb[0].mxu0 %v553
      %v1406 = vpop.f32.mrb[0].mxu0
      %v1407 = vadd.f32 %v1342, %v1406
      %v1408 = vpop.f32.mrb[0].mxu0
      %v1409 = vpop.f32.mrb[0].mxu0
      %v1410 = vadd.f32 %v1345, %v1409
      %v1411 = vpop.f32.mrb[0].mxu0
      %1412 = vmatprep.mubr.bf16.mxu0 %v582
      %1413 = vmatmul.mubr.bf16.gmra.mrb[0].mxu0 %v554
      %v1414 = vpop.f32.mrb[0].mxu0
      %v1415 = vadd.f32 %v1350, %v1414
      %v1416 = vpop.f32.mrb[0].mxu0
      %v1417 = vpop.f32.mrb[0].mxu0
      %v1418 = vadd.f32 %v1353, %v1417
      %v1419 = vpop.f32.mrb[0].mxu0
      %1420 = vdwg.mxu0
      %1421 = vmatprep.subr.bf16.mxu0 0
      %1422 = vmatpush1.bf16.msra.mxu0 %v1179
      %1423 = vmatprep.subr.bf16.mxu0 0
      %1424 = vmatpush1.bf16.msra.mxu0 %v1180
      %1425 = vmatprep.subr.bf16.mxu0 0
      %1426 = vmatpush1.bf16.msra.mxu0 %v1181
      %1427 = vmatprep.subr.bf16.mxu0 0
      %1428 = vmatpush1.bf16.msra.mxu0 %v1182
      %1429 = vmatprep.subr.bf16.mxu0 0
      %1430 = vmatpush1.bf16.msra.mxu0 %v1183
      %1431 = vmatprep.subr.bf16.mxu0 0
      %1432 = vmatpush1.bf16.msra.mxu0 %v1184
      %1433 = vmatprep.subr.bf16.mxu0 0
      %1434 = vmatpush1.bf16.msra.mxu0 %v1185
      %1435 = vmatprep.subr.bf16.mxu0 0
      %1436 = vmatpush1.bf16.msra.mxu0 %v1186
      %1437 = vmatprep.subr.bf16.mxu0 0
      %1438 = vmatpush1.bf16.msra.mxu0 %v1187
      %1439 = vmatprep.subr.bf16.mxu0 0
      %1440 = vmatpush1.bf16.msra.mxu0 %v1188
      %1441 = vmatprep.subr.bf16.mxu0 0
      %1442 = vmatpush1.bf16.msra.mxu0 %v1189
      %1443 = vmatprep.subr.bf16.mxu0 0
      %1444 = vmatpush1.bf16.msra.mxu0 %v1190
      %1445 = vmatprep.subr.bf16.mxu0 0
      %1446 = vmatpush1.bf16.msra.mxu0 %v1191
      %1447 = vmatprep.subr.bf16.mxu0 0
      %1448 = vmatpush1.bf16.msra.mxu0 %v1192
      %1449 = vmatprep.subr.bf16.mxu0 0
      %1450 = vmatpush1.bf16.msra.mxu0 %v1193
      %1451 = vmatprep.subr.bf16.mxu0 0
      %1452 = vmatpush1.bf16.msra.mxu0 %v1194
      %1453 = vmatprep.mubr.bf16.mxu0 %v611
      %1454 = vmatmul.mubr.bf16.gmra.mrb[0].mxu0 %v583
      %v1455 = vpop.f32.mrb[0].mxu0
      %v1456 = vadd.f32 %v1391, %v1455
      %v1457 = vpop.f32.mrb[0].mxu0
      %v1458 = vpop.f32.mrb[0].mxu0
      %v1459 = vadd.f32 %v1394, %v1458
      %v1460 = vpop.f32.mrb[0].mxu0
      %1461 = vmatprep.mubr.bf16.mxu0 %v612
      %1462 = vmatmul.mubr.bf16.gmra.mrb[0].mxu0 %v584
      %v1463 = vpop.f32.mrb[0].mxu0
      %v1464 = vadd.f32 %v1399, %v1463
      %v1465 = vpop.f32.mrb[0].mxu0
      %v1466 = vpop.f32.mrb[0].mxu0
      %v1467 = vadd.f32 %v1402, %v1466
      %v1468 = vpop.f32.mrb[0].mxu0
      %1469 = vmatprep.mubr.bf16.mxu0 %v613
      %1470 = vmatmul.mubr.bf16.gmra.mrb[0].mxu0 %v585
      %v1471 = vpop.f32.mrb[0].mxu0
      %v1472 = vadd.f32 %v1407, %v1471
      %v1473 = vpop.f32.mrb[0].mxu0
      %v1474 = vpop.f32.mrb[0].mxu0
      %v1475 = vadd.f32 %v1410, %v1474
      %v1476 = vpop.f32.mrb[0].mxu0
      %1477 = vmatprep.mubr.bf16.mxu0 %v614
      %1478 = vmatmul.mubr.bf16.gmra.mrb[0].mxu0 %v586
      %v1479 = vpop.f32.mrb[0].mxu0
      %v1480 = vadd.f32 %v1415, %v1479
      %v1481 = vpop.f32.mrb[0].mxu0
      %v1482 = vpop.f32.mrb[0].mxu0
      %v1483 = vadd.f32 %v1418, %v1482
      %v1484 = vpop.f32.mrb[0].mxu0
      %1485 = vdwg.mxu0
      %1486 = vmatprep.subr.bf16.mxu0 0
      %1487 = vmatpush1.bf16.msra.mxu0 %v1195
      %1488 = vmatprep.subr.bf16.mxu0 0
      %1489 = vmatpush1.bf16.msra.mxu0 %v1196
      %1490 = vmatprep.subr.bf16.mxu0 0
      %1491 = vmatpush1.bf16.msra.mxu0 %v1197
      %1492 = vmatprep.subr.bf16.mxu0 0
      %1493 = vmatpush1.bf16.msra.mxu0 %v1198
      %1494 = vmatprep.subr.bf16.mxu0 0
      %1495 = vmatpush1.bf16.msra.mxu0 %v1199
      %1496 = vmatprep.subr.bf16.mxu0 0
      %1497 = vmatpush1.bf16.msra.mxu0 %v1200
      %1498 = vmatprep.subr.bf16.mxu0 0
      %1499 = vmatpush1.bf16.msra.mxu0 %v1201
      %1500 = vmatprep.subr.bf16.mxu0 0
      %1501 = vmatpush1.bf16.msra.mxu0 %v1202
      %1502 = vmatprep.subr.bf16.mxu0 0
      %1503 = vmatpush1.bf16.msra.mxu0 %v1203
      %1504 = vmatprep.subr.bf16.mxu0 0
      %1505 = vmatpush1.bf16.msra.mxu0 %v1204
      %1506 = vmatprep.subr.bf16.mxu0 0
      %1507 = vmatpush1.bf16.msra.mxu0 %v1205
      %1508 = vmatprep.subr.bf16.mxu0 0
      %1509 = vmatpush1.bf16.msra.mxu0 %v1206
      %1510 = vmatprep.subr.bf16.mxu0 0
      %1511 = vmatpush1.bf16.msra.mxu0 %v1207
      %1512 = vmatprep.subr.bf16.mxu0 0
      %1513 = vmatpush1.bf16.msra.mxu0 %v1208
      %1514 = vmatprep.subr.bf16.mxu0 0
      %1515 = vmatpush1.bf16.msra.mxu0 %v1209
      %1516 = vmatprep.subr.bf16.mxu0 0
      %1517 = vmatpush1.bf16.msra.mxu0 %v1210
      %1518 = vmatprep.mubr.bf16.mxu0 %v675
      %1519 = vmatmul.mubr.bf16.gmra.mrb[0].mxu0 %v647
      %v1520 = vpop.f32.mrb[0].mxu0
      %v1521 = vadd.f32 %v1456, %v1520
      %v1522 = vpop.f32.mrb[0].mxu0
      %v1523 = vpop.f32.mrb[0].mxu0
      %v1524 = vadd.f32 %v1459, %v1523
      %v1525 = vpop.f32.mrb[0].mxu0
      %1526 = vmatprep.mubr.bf16.mxu0 %v676
      %1527 = vmatmul.mubr.bf16.gmra.mrb[0].mxu0 %v648
      %v1528 = vpop.f32.mrb[0].mxu0
      %v1529 = vadd.f32 %v1464, %v1528
      %v1530 = vpop.f32.mrb[0].mxu0
      %v1531 = vpop.f32.mrb[0].mxu0
      %v1532 = vadd.f32 %v1467, %v1531
      %v1533 = vpop.f32.mrb[0].mxu0
      %1534 = vmatprep.mubr.bf16.mxu0 %v677
      %1535 = vmatmul.mubr.bf16.gmra.mrb[0].mxu0 %v649
      %v1536 = vpop.f32.mrb[0].mxu0
      %v1537 = vadd.f32 %v1472, %v1536
      %v1538 = vpop.f32.mrb[0].mxu0
      %v1539 = vpop.f32.mrb[0].mxu0
      %v1540 = vadd.f32 %v1475, %v1539
      %v1541 = vpop.f32.mrb[0].mxu0
      %1542 = vmatprep.mubr.bf16.mxu0 %v678
      %1543 = vmatmul.mubr.bf16.gmra.mrb[0].mxu0 %v650
      %v1544 = vpop.f32.mrb[0].mxu0
      %v1545 = vadd.f32 %v1480, %v1544
      %v1546 = vpop.f32.mrb[0].mxu0
      %v1547 = vpop.f32.mrb[0].mxu0
      %v1548 = vadd.f32 %v1483, %v1547
      %v1549 = vpop.f32.mrb[0].mxu0
      %1550 = vdwg.mxu0
      %1551 = vmatprep.subr.bf16.mxu0 0
      %1552 = vmatpush1.bf16.msra.mxu0 %v1211
      %1553 = vmatprep.subr.bf16.mxu0 0
      %1554 = vmatpush1.bf16.msra.mxu0 %v1212
      %1555 = vmatprep.subr.bf16.mxu0 0
      %1556 = vmatpush1.bf16.msra.mxu0 %v1213
      %1557 = vmatprep.subr.bf16.mxu0 0
      %1558 = vmatpush1.bf16.msra.mxu0 %v1214
      %1559 = vmatprep.subr.bf16.mxu0 0
      %1560 = vmatpush1.bf16.msra.mxu0 %v1215
      %1561 = vmatprep.subr.bf16.mxu0 0
      %1562 = vmatpush1.bf16.msra.mxu0 %v1216
      %1563 = vmatprep.subr.bf16.mxu0 0
      %1564 = vmatpush1.bf16.msra.mxu0 %v1217
      %1565 = vmatprep.subr.bf16.mxu0 0
      %1566 = vmatpush1.bf16.msra.mxu0 %v1218
      %1567 = vmatprep.subr.bf16.mxu0 0
      %1568 = vmatpush1.bf16.msra.mxu0 0
      %1569 = vmatprep.subr.bf16.mxu0 0
      %1570 = vmatpush1.bf16.msra.mxu0 0
      %1571 = vmatprep.subr.bf16.mxu0 0
      %1572 = vmatpush1.bf16.msra.mxu0 0
      %1573 = vmatprep.subr.bf16.mxu0 0
      %1574 = vmatpush1.bf16.msra.mxu0 0
      %1575 = vmatprep.subr.bf16.mxu0 0
      %1576 = vmatpush1.bf16.msra.mxu0 0
      %1577 = vmatprep.subr.bf16.mxu0 0
      %1578 = vmatpush1.bf16.msra.mxu0 0
      %1579 = vmatprep.subr.bf16.mxu0 0
      %1580 = vmatpush1.bf16.msra.mxu0 0
      %1581 = vmatprep.subr.bf16.mxu0 0
      %1582 = vmatpush1.bf16.msra.mxu0 0
      %1583 = vmatprep.mubr.bf16.mxu0 0
      %1584 = vmatmul.mubr.bf16.gmra.mrb[0].mxu0 %v711
      %v1585 = vpop.f32.mrb[0].mxu0
      %v1586 = vadd.f32 %v1521, %v1585
      %v1587 = vpop.f32.mrb[0].mxu0
      %v1588 = vpop.f32.mrb[0].mxu0
      %v1589 = vadd.f32 %v1524, %v1588
      %v1590 = vpop.f32.mrb[0].mxu0
      %1591 = vmatprep.mubr.bf16.mxu0 0
      %1592 = vmatmul.mubr.bf16.gmra.mrb[0].mxu0 %v712
      %v1593 = vpop.f32.mrb[0].mxu0
      %v1594 = vadd.f32 %v1529, %v1593
      %v1595 = vpop.f32.mrb[0].mxu0
      %v1596 = vpop.f32.mrb[0].mxu0
      %v1597 = vadd.f32 %v1532, %v1596
      %v1598 = vpop.f32.mrb[0].mxu0
      %1599 = vmatprep.mubr.bf16.mxu0 0
      %1600 = vmatmul.mubr.bf16.gmra.mrb[0].mxu0 %v713
      %v1601 = vpop.f32.mrb[0].mxu0
      %v1602 = vadd.f32 %v1537, %v1601
      %v1603 = vpop.f32.mrb[0].mxu0
      %v1604 = vpop.f32.mrb[0].mxu0
      %v1605 = vadd.f32 %v1540, %v1604
      %v1606 = vpop.f32.mrb[0].mxu0
      %1607 = vmatprep.mubr.bf16.mxu0 0
      %1608 = vmatmul.mubr.bf16.gmra.mrb[0].mxu0 %v714
      %v1609 = vpop.f32.mrb[0].mxu0
      %v1610 = vadd.f32 %v1545, %v1609
      %v1611 = vpop.f32.mrb[0].mxu0
      %v1612 = vpop.f32.mrb[0].mxu0
      %v1613 = vadd.f32 %v1548, %v1612
      %v1614 = vpop.f32.mrb[0].mxu0
      %1615 = vdwg.mxu0
      %v1616 = vpack.c.bf16 %v1589, %v1586
      %v1617 = vpack.c.bf16 %v1597, %v1594
      %v1618 = vpack.c.bf16 %v1605, %v1602
      %v1619 = vpack.c.bf16 %v1613, %v1610
      %v1624 = vunpack.c.l.b16 %v1616
      %v1625 = vunpack.c.h.b16 %v1616
      %v1626 = vunpack.c.l.b16 %v1617
      %v1627 = vunpack.c.h.b16 %v1617
      %v1628 = vunpack.c.l.b16 %v1618
      %v1629 = vunpack.c.h.b16 %v1618
      %v1630 = vunpack.c.l.b16 %v1619
      %v1631 = vunpack.c.h.b16 %v1619
      %v1632 = vpack.c.b16 %v1624, %v1624
      %v1633 = vpack.c.b16 %v1625, %v1625
      %v1634 = vpack.c.b16 %v1626, %v1626
      %v1635 = vpack.c.b16 %v1627, %v1627
      %v1636 = vpack.c.b16 %v1628, %v1628
      %v1637 = vpack.c.b16 %v1629, %v1629
      %v1638 = vpack.c.b16 %v1630, %v1630
      %v1639 = vpack.c.b16 %v1631, %v1631
      %1648 = vst [vmem:[%s260] sm:$0xf] %v1632
      %1649 = vst [vmem:[%s260 + $0x4] sm:$0xf] %v1633
      %1650 = vst [vmem:[%s260 + $0x8] sm:$0xf] %v1634
      %1651 = vst [vmem:[%s260 + $0xc] sm:$0xf] %v1635
      %1652 = vst [vmem:[%s260 + $0x10] sm:$0xf] %v1636
      %1653 = vst [vmem:[%s260 + $0x14] sm:$0xf] %v1637
      %1654 = vst [vmem:[%s260 + $0x18] sm:$0xf] %v1638
      %1655 = vst [vmem:[%s260 + $0x1c] sm:$0xf] %v1639
      %v1656 = vadd.f32 %v1586, %v1589
      %v1657 = vadd.f32 %v1656, %v1594
      %v1658 = vadd.f32 %v1657, %v1597
      %v1659 = vadd.f32 %v1658, %v1602
      %v1660 = vadd.f32 %v1659, %v1605
      %v1661 = vadd.f32 %v1660, %v1610
      %v1662 = vadd.f32 %v1661, %v1613
      %v1663 = vrot.slane %v1662, 4
      %v1664 = vadd.f32 %v1662, %v1663
      %v1665 = vrot.slane %v1664, 2
      %v1666 = vadd.f32 %v1664, %v1665
      %v1667 = vrot.slane %v1666, 1
      %v1668 = vadd.f32 %v1666, %v1667
      %v1669 = vmul.f32 %v1586, %v1586
      %v1670 = vmul.f32 %v1589, %v1589
      %v1671 = vmul.f32 %v1594, %v1594
      %v1672 = vmul.f32 %v1597, %v1597
      %v1673 = vmul.f32 %v1602, %v1602
      %v1674 = vmul.f32 %v1605, %v1605
      %v1675 = vmul.f32 %v1610, %v1610
      %v1676 = vmul.f32 %v1613, %v1613
      %v1677 = vadd.f32 %v1669, %v1670
      %v1678 = vadd.f32 %v1677, %v1671
      %v1679 = vadd.f32 %v1678, %v1672
      %v1680 = vadd.f32 %v1679, %v1673
      %v1681 = vadd.f32 %v1680, %v1674
      %v1682 = vadd.f32 %v1681, %v1675
      %v1683 = vadd.f32 %v1682, %v1676
      %v1684 = vrot.slane %v1683, 4
      %v1685 = vadd.f32 %v1683, %v1684
      %v1686 = vrot.slane %v1685, 2
      %v1687 = vadd.f32 %v1685, %v1686
      %v1688 = vrot.slane %v1687, 1
      %v1689 = vadd.f32 %v1687, %v1688
      %vm1690 = vcmask 1040384
      %v1691 = vsel %vm1690, %v1668, %v1689
      %1692 = vst [vmem:[%s265] sm:$0x3] %v1691
      %s1693 = smul.u32 8, %s18
      %p1694 = scmp.lt.s32.totalorder %s1693, 15
      %s1695 = scalar_select %p1694, %s1693, 15
      %s1696 = smul.addr %s1695, 4
      %s1697 = scalar_lea.vmem %s5, %s1696
      %p1698 = scmp.lt.s32.totalorder %s18, 1
      %s1699 = scalar_select %p1698, %s18, 1
      %s1700 = smul.addr %s1699, 2
      %s1701 = scalar_lea.vmem %s6, %s1700
      // Predicated region
      $region41: #{oca1_forward.5} parent=39 // pred_check
        %p1702 = pneg %p146
      $region42: #{oca1_forward.5} parent=39 // pred_check_branch
        %1704 = sbr.rel (%p1702) target = $region44
      $region43: #{oca1_forward.5} parent=39 // pred_region
        %s1705 = smul.u32 8, %s18
      $region44: #{oca1_forward.5} parent=39 // pred_fallthru
        _
      // Predicated region
      $region45: #{oca1_forward.5} parent=39 // pred_check
        %p1706 = pneg %p172
      $region46: #{oca1_forward.5} parent=39 // pred_check_branch
        %1708 = sbr.rel (%p1706) target = $region48
      $region47: #{oca1_forward.5} parent=39 // pred_region
        _
      $region48: #{oca1_forward.5} parent=39 // pred_fallthru
        _
    $region40: #{oca1_forward.5} parent=5 // pred_fallthru
      _
    %p1709 = scmp.le.s32.totalorder 2, %s13
    // Predicated region
    $region49: #{oca1_forward.5} parent=5 // pred_check
      %p1710 = pneg %p1709
    $region50: #{oca1_forward.5} parent=5 // pred_check_branch
      %1712 = sbr.rel (%p1710) target = $region52
    $region51: #{oca1_forward.5} parent=5 // pred_region
      %s1713 = ssub.s32 %s13, 2
      // Predicated region
      $region53: #{oca1_forward.5} parent=51 // pred_check
        %p1714 = pneg %p152
      $region54: #{oca1_forward.5} parent=51 // pred_check_branch
        %1716 = sbr.rel (%p1714) target = $region56
      $region55: #{oca1_forward.5} parent=51 // pred_region
        %s1717 = smul.u32 8, %s19
        %p1718 = scmp.lt.s32.totalorder %s1717, 15
        %s1719 = scalar_select %p1718, %s1717, 15
        %s1720 = smul.addr %s1719, 4
        %s1721 = scalar_lea.vmem %s5, %s1720
      $region56: #{oca1_forward.5} parent=51 // pred_fallthru
        _
      // Predicated region
      $region57: #{oca1_forward.5} parent=51 // pred_check
        %p1722 = pneg %p178
      $region58: #{oca1_forward.5} parent=51 // pred_check_branch
        %1724 = sbr.rel (%p1722) target = $region60
      $region59: #{oca1_forward.5} parent=51 // pred_region
        %p1725 = scmp.lt.s32.totalorder %s19, 1
        %s1726 = scalar_select %p1725, %s19, 1
        %s1727 = smul.addr %s1726, 2
        %s1728 = scalar_lea.vmem %s6, %s1727
      $region60: #{oca1_forward.5} parent=51 // pred_fallthru
        _
    $region52: #{oca1_forward.5} parent=5 // pred_fallthru
      _
  $region6: #{oca1_forward.5} parent=0 // loop_footer
    %s17 = sadd.s32 1, %s13
  $region7: #{oca1_forward.5} parent=0 // loop_footer_branch
    %12 = sbr.rel target = $region3
  $region8: #{oca1_forward.5} parent=0 // loop_exit
    _

// kernel: oca1_forward.7
$region0: #{oca1_forward.7}
  #allocation0 [shape = 'u32[]', space=smem, size = 0x4, offset = 0x4, fixed_abs, tag = 'smem constant byte address 0x4 - core index']
  #allocation1 [shape = 'u32[144,128]{1,0:T(1,128)}', space=vmem, size = 0x12000, scoped, tag = 'internal scratch']
  %s0 = inlined_call_operand.vmem [shape: f32[2,2,128], index: 0, kind: input, shape index: {}]
  %s1 = inlined_call_operand.vmem [shape: f32[1,128], index: 1, kind: input, shape index: {}]
  %s2 = inlined_call_operand.vmem [shape: f32[1,128], index: 2, kind: input, shape index: {}]
  %s3 = inlined_call_operand.vmem [shape: bf16[2,64,128], index: 3, kind: input, shape index: {}]
  %s4 = inlined_call_operand.vmem [shape: f32[64,128], index: 4, kind: input, shape index: {}]
  %s5 = inlined_call_operand.vmem [shape: f32[128,128], index: 5, kind: input, shape index: {}]
  %s6 = inlined_call_operand.vmem [shape: f32[128,128], index: 6, kind: input, shape index: {}]
  %s7 = inlined_call_operand.vmem [shape: bf16[128,128], index: 7, kind: input, shape index: {}]
  %s8 = inlined_call_operand.vmem [shape: f32[1,128], index: 8, kind: input, shape index: {}]
  %s9 = inlined_call_operand.vmem [shape: bf16[2,64,128], index: 9, kind: input, shape index: {}]
  %s10 = inlined_call_operand.vmem [shape: f32[2,64,128], index: 10, kind: output, shape index: {}]
  %s11 = sld [smem:[#allocation0]]
  $region73: #{oca1_forward.7} parent=0
    _
  %s13 = ssub.s32 1, %s11
  %s14 = scalar_select 0, %s13, %s11
  loop: start=0, step=1, limit=4
  $region2: #{oca1_forward.7} parent=0 // loop_pre_header
    _
  $region3: #{oca1_forward.7} parent=0 // loop_header
    %s16 = sphi 0, %s20
    %p17 = scmp.ge.s32.totalorder %s16, 4
    %s24 = sphi 0, %s24
    %s26 = sphi 0, %s24
    %s27 = sphi 0, %s26
    %s41 = sphi 0, %s27
    %s45 = sphi 0, %s45
    %s47 = sphi 0, %s45
    %s48 = sphi 0, %s47
    %s62 = sphi 0, %s48
    %s66 = sphi 0, %s66
    %s68 = sphi 0, %s66
    %s69 = sphi 0, %s68
    %s83 = sphi 0, %s69
    %s89 = sphi 0, %s91
    %s92 = sphi 0, %s89
    %s93 = sphi 0, %s92
    %s109 = sphi 0, %s93
    %s113 = sphi 0, %s113
    %s115 = sphi 0, %s113
    %s116 = sphi 0, %s115
    %s130 = sphi 0, %s116
    %s134 = sphi 0, %s134
    %s136 = sphi 0, %s134
    %s137 = sphi 0, %s136
    %s151 = sphi 0, %s137
    %s155 = sphi 0, %s155
    %s157 = sphi 0, %s155
    %s158 = sphi 0, %s157
    %s172 = sphi 0, %s158
    %s176 = sphi 0, %s176
    %s178 = sphi 0, %s176
    %s179 = sphi 0, %s178
    %s193 = sphi 0, %s179
    %s197 = sphi 0, %s197
    %s199 = sphi 0, %s197
    %s200 = sphi 0, %s199
    %s214 = sphi 0, %s200
    %s220 = sphi 0, %s222
    %s223 = sphi 0, %s220
    %s224 = sphi 0, %s223
    %s240 = sphi 0, %s224
    %s246 = sphi 0, %s248
    %s249 = sphi 0, %s246
    %s250 = sphi 0, %s249
    %s266 = sphi 0, %s250
  $region4: #{oca1_forward.7} parent=0 // loop_header_branch
    %19 = sbr.rel (%p17) target = $region8
  $region5: #{oca1_forward.7} parent=0 // loop_body
    %s21 = ssub.s32 %s16, 1
    %s22 = ssub.s32 %s16, 2
    %s23 = sadd.s32 %s16, 1
    %s25 = sadd.s32 %s24, 1
    %p28 = scmp.eq.s32.totalorder %s16, 1
    %p29 = scmp.ne.s32.totalorder %s24, %s26
    %p30 = scmp.eq.s32.totalorder %s16, 0
    %p31 = por %p29, %p30
    %p32 = scmp.ne.s32.totalorder %s24, %s26
    %p33 = scmp.eq.s32.totalorder %s21, 1
    %p34 = por %p32, %p33
    %p35 = scmp.ne.s32.totalorder %s26, %s27
    %p36 = scmp.eq.s32.totalorder %s21, 0
    %p37 = por %p35, %p36
    %p38 = scmp.ne.s32.totalorder %s26, %s27
    %p39 = scmp.eq.s32.totalorder %s22, 1
    %p40 = por %p38, %p39
    %p42 = scmp.ne.s32.totalorder %s27, %s41
    %p43 = scmp.eq.s32.totalorder %s22, 0
    %p44 = por %p42, %p43
    %s46 = sadd.s32 %s45, 1
    %p49 = scmp.eq.s32.totalorder %s16, 1
    %p50 = scmp.ne.s32.totalorder %s45, %s47
    %p51 = scmp.eq.s32.totalorder %s16, 0
    %p52 = por %p50, %p51
    %p53 = scmp.ne.s32.totalorder %s45, %s47
    %p54 = scmp.eq.s32.totalorder %s21, 1
    %p55 = por %p53, %p54
    %p56 = scmp.ne.s32.totalorder %s47, %s48
    %p57 = scmp.eq.s32.totalorder %s21, 0
    %p58 = por %p56, %p57
    %p59 = scmp.ne.s32.totalorder %s47, %s48
    %p60 = scmp.eq.s32.totalorder %s22, 1
    %p61 = por %p59, %p60
    %p63 = scmp.ne.s32.totalorder %s48, %s62
    %p64 = scmp.eq.s32.totalorder %s22, 0
    %p65 = por %p63, %p64
    %s67 = sadd.s32 %s66, 1
    %p70 = scmp.eq.s32.totalorder %s16, 1
    %p71 = scmp.ne.s32.totalorder %s66, %s68
    %p72 = scmp.eq.s32.totalorder %s16, 0
    %p73 = por %p71, %p72
    %p74 = scmp.ne.s32.totalorder %s66, %s68
    %p75 = scmp.eq.s32.totalorder %s21, 1
    %p76 = por %p74, %p75
    %p77 = scmp.ne.s32.totalorder %s68, %s69
    %p78 = scmp.eq.s32.totalorder %s21, 0
    %p79 = por %p77, %p78
    %p80 = scmp.ne.s32.totalorder %s68, %s69
    %p81 = scmp.eq.s32.totalorder %s22, 1
    %p82 = por %p80, %p81
    %p84 = scmp.ne.s32.totalorder %s69, %s83
    %p85 = scmp.eq.s32.totalorder %s22, 0
    %p86 = por %p84, %p85
    %s87 = ssub.s32 %s16, %s23
    %p88 = scmp.eq.s32.totalorder %s87, 0
    %s90 = sadd.s32 %s89, 1
    %s91 = scalar_select %p88, %s89, %s90
    %p94 = pneg %p88
    %p95 = scmp.eq.s32.totalorder %s16, 1
    %p96 = por %p94, %p95
    %p97 = scmp.ne.s32.totalorder %s89, %s92
    %p98 = scmp.eq.s32.totalorder %s16, 0
    %p99 = por %p97, %p98
    %p100 = scmp.ne.s32.totalorder %s89, %s92
    %p101 = scmp.eq.s32.totalorder %s21, 1
    %p102 = por %p100, %p101
    %p103 = scmp.ne.s32.totalorder %s92, %s93
    %p104 = scmp.eq.s32.totalorder %s21, 0
    %p105 = por %p103, %p104
    %p106 = scmp.ne.s32.totalorder %s92, %s93
    %p107 = scmp.eq.s32.totalorder %s22, 1
    %p108 = por %p106, %p107
    %p110 = scmp.ne.s32.totalorder %s93, %s109
    %p111 = scmp.eq.s32.totalorder %s22, 0
    %p112 = por %p110, %p111
    %s114 = sadd.s32 %s113, 1
    %p117 = scmp.eq.s32.totalorder %s16, 1
    %p118 = scmp.ne.s32.totalorder %s113, %s115
    %p119 = scmp.eq.s32.totalorder %s16, 0
    %p120 = por %p118, %p119
    %p121 = scmp.ne.s32.totalorder %s113, %s115
    %p122 = scmp.eq.s32.totalorder %s21, 1
    %p123 = por %p121, %p122
    %p124 = scmp.ne.s32.totalorder %s115, %s116
    %p125 = scmp.eq.s32.totalorder %s21, 0
    %p126 = por %p124, %p125
    %p127 = scmp.ne.s32.totalorder %s115, %s116
    %p128 = scmp.eq.s32.totalorder %s22, 1
    %p129 = por %p127, %p128
    %p131 = scmp.ne.s32.totalorder %s116, %s130
    %p132 = scmp.eq.s32.totalorder %s22, 0
    %p133 = por %p131, %p132
    %s135 = sadd.s32 %s134, 1
    %p138 = scmp.eq.s32.totalorder %s16, 1
    %p139 = scmp.ne.s32.totalorder %s134, %s136
    %p140 = scmp.eq.s32.totalorder %s16, 0
    %p141 = por %p139, %p140
    %p142 = scmp.ne.s32.totalorder %s134, %s136
    %p143 = scmp.eq.s32.totalorder %s21, 1
    %p144 = por %p142, %p143
    %p145 = scmp.ne.s32.totalorder %s136, %s137
    %p146 = scmp.eq.s32.totalorder %s21, 0
    %p147 = por %p145, %p146
    %p148 = scmp.ne.s32.totalorder %s136, %s137
    %p149 = scmp.eq.s32.totalorder %s22, 1
    %p150 = por %p148, %p149
    %p152 = scmp.ne.s32.totalorder %s137, %s151
    %p153 = scmp.eq.s32.totalorder %s22, 0
    %p154 = por %p152, %p153
    %s156 = sadd.s32 %s155, 1
    %p159 = scmp.eq.s32.totalorder %s16, 1
    %p160 = scmp.ne.s32.totalorder %s155, %s157
    %p161 = scmp.eq.s32.totalorder %s16, 0
    %p162 = por %p160, %p161
    %p163 = scmp.ne.s32.totalorder %s155, %s157
    %p164 = scmp.eq.s32.totalorder %s21, 1
    %p165 = por %p163, %p164
    %p166 = scmp.ne.s32.totalorder %s157, %s158
    %p167 = scmp.eq.s32.totalorder %s21, 0
    %p168 = por %p166, %p167
    %p169 = scmp.ne.s32.totalorder %s157, %s158
    %p170 = scmp.eq.s32.totalorder %s22, 1
    %p171 = por %p169, %p170
    %p173 = scmp.ne.s32.totalorder %s158, %s172
    %p174 = scmp.eq.s32.totalorder %s22, 0
    %p175 = por %p173, %p174
    %s177 = sadd.s32 %s176, 1
    %p180 = scmp.eq.s32.totalorder %s16, 1
    %p181 = scmp.ne.s32.totalorder %s176, %s178
    %p182 = scmp.eq.s32.totalorder %s16, 0
    %p183 = por %p181, %p182
    %p184 = scmp.ne.s32.totalorder %s176, %s178
    %p185 = scmp.eq.s32.totalorder %s21, 1
    %p186 = por %p184, %p185
    %p187 = scmp.ne.s32.totalorder %s178, %s179
    %p188 = scmp.eq.s32.totalorder %s21, 0
    %p189 = por %p187, %p188
    %p190 = scmp.ne.s32.totalorder %s178, %s179
    %p191 = scmp.eq.s32.totalorder %s22, 1
    %p192 = por %p190, %p191
    %p194 = scmp.ne.s32.totalorder %s179, %s193
    %p195 = scmp.eq.s32.totalorder %s22, 0
    %p196 = por %p194, %p195
    %s198 = sadd.s32 %s197, 1
    %p201 = scmp.eq.s32.totalorder %s16, 1
    %p202 = scmp.ne.s32.totalorder %s197, %s199
    %p203 = scmp.eq.s32.totalorder %s16, 0
    %p204 = por %p202, %p203
    %p205 = scmp.ne.s32.totalorder %s197, %s199
    %p206 = scmp.eq.s32.totalorder %s21, 1
    %p207 = por %p205, %p206
    %p208 = scmp.ne.s32.totalorder %s199, %s200
    %p209 = scmp.eq.s32.totalorder %s21, 0
    %p210 = por %p208, %p209
    %p211 = scmp.ne.s32.totalorder %s199, %s200
    %p212 = scmp.eq.s32.totalorder %s22, 1
    %p213 = por %p211, %p212
    %p215 = scmp.ne.s32.totalorder %s200, %s214
    %p216 = scmp.eq.s32.totalorder %s22, 0
    %p217 = por %p215, %p216
    %s218 = ssub.s32 %s16, %s23
    %p219 = scmp.eq.s32.totalorder %s218, 0
    %s221 = sadd.s32 %s220, 1
    %s222 = scalar_select %p219, %s220, %s221
    %p225 = pneg %p219
    %p226 = scmp.eq.s32.totalorder %s16, 1
    %p227 = por %p225, %p226
    %p228 = scmp.ne.s32.totalorder %s220, %s223
    %p229 = scmp.eq.s32.totalorder %s16, 0
    %p230 = por %p228, %p229
    %p231 = scmp.ne.s32.totalorder %s220, %s223
    %p232 = scmp.eq.s32.totalorder %s21, 1
    %p233 = por %p231, %p232
    %p234 = scmp.ne.s32.totalorder %s223, %s224
    %p235 = scmp.eq.s32.totalorder %s21, 0
    %p236 = por %p234, %p235
    %p237 = scmp.ne.s32.totalorder %s223, %s224
    %p238 = scmp.eq.s32.totalorder %s22, 1
    %p239 = por %p237, %p238
    %p241 = scmp.ne.s32.totalorder %s224, %s240
    %p242 = scmp.eq.s32.totalorder %s22, 0
    %p243 = por %p241, %p242
    %s244 = ssub.s32 %s16, %s23
    %p245 = scmp.eq.s32.totalorder %s244, 0
    %s247 = sadd.s32 %s246, 1
    %s248 = scalar_select %p245, %s246, %s247
    %p251 = pneg %p245
    %p252 = scmp.eq.s32.totalorder %s16, 1
    %p253 = por %p251, %p252
    %p254 = scmp.ne.s32.totalorder %s246, %s249
    %p255 = scmp.eq.s32.totalorder %s16, 0
    %p256 = por %p254, %p255
    %p257 = scmp.ne.s32.totalorder %s246, %s249
    %p258 = scmp.eq.s32.totalorder %s21, 1
    %p259 = por %p257, %p258
    %p260 = scmp.ne.s32.totalorder %s249, %s250
    %p261 = scmp.eq.s32.totalorder %s21, 0
    %p262 = por %p260, %p261
    %p263 = scmp.ne.s32.totalorder %s249, %s250
    %p264 = scmp.eq.s32.totalorder %s22, 1
    %p265 = por %p263, %p264
    %p267 = scmp.ne.s32.totalorder %s250, %s266
    %p268 = scmp.eq.s32.totalorder %s22, 0
    %p269 = por %p267, %p268
    %p270 = scmp.le.s32.totalorder 1, %s16
    %p271 = scmp.lt.s32.totalorder %s16, 3
    %p272 = pnand %p270, %p271
    %p273 = pneg %p272
    // Predicated region
    $region9: #{oca1_forward.7} parent=5 // pred_check
      _
    $region10: #{oca1_forward.7} parent=5 // pred_check_branch
      %275 = sbr.rel (%p272) target = $region12
    $region11: #{oca1_forward.7} parent=5 // pred_region
      %s276 = ssub.s32 %s16, 1
      // Predicated region
      $region13: #{oca1_forward.7} parent=11 // pred_check
        %p277 = pneg %p37
      $region14: #{oca1_forward.7} parent=11 // pred_check_branch
        %279 = sbr.rel (%p277) target = $region16
      $region15: #{oca1_forward.7} parent=11 // pred_region
        _
      $region16: #{oca1_forward.7} parent=11 // pred_fallthru
        _
      // Predicated region
      $region17: #{oca1_forward.7} parent=11 // pred_check
        %p280 = pneg %p58
      $region18: #{oca1_forward.7} parent=11 // pred_check_branch
        %282 = sbr.rel (%p280) target = $region20
      $region19: #{oca1_forward.7} parent=11 // pred_region
        _
      $region20: #{oca1_forward.7} parent=11 // pred_fallthru
        _
      // Predicated region
      $region21: #{oca1_forward.7} parent=11 // pred_check
        %p283 = pneg %p79
      $region22: #{oca1_forward.7} parent=11 // pred_check_branch
        %285 = sbr.rel (%p283) target = $region24
      $region23: #{oca1_forward.7} parent=11 // pred_region
        _
      $region24: #{oca1_forward.7} parent=11 // pred_fallthru
        _
      // Predicated region
      $region25: #{oca1_forward.7} parent=11 // pred_check
        %p286 = pneg %p126
      $region26: #{oca1_forward.7} parent=11 // pred_check_branch
        %288 = sbr.rel (%p286) target = $region28
      $region27: #{oca1_forward.7} parent=11 // pred_region
        _
      $region28: #{oca1_forward.7} parent=11 // pred_fallthru
        _
      // Predicated region
      $region29: #{oca1_forward.7} parent=11 // pred_check
        %p289 = pneg %p147
      $region30: #{oca1_forward.7} parent=11 // pred_check_branch
        %291 = sbr.rel (%p289) target = $region32
      $region31: #{oca1_forward.7} parent=11 // pred_region
        _
      $region32: #{oca1_forward.7} parent=11 // pred_fallthru
        _
      // Predicated region
      $region33: #{oca1_forward.7} parent=11 // pred_check
        %p292 = pneg %p168
      $region34: #{oca1_forward.7} parent=11 // pred_check_branch
        %294 = sbr.rel (%p292) target = $region36
      $region35: #{oca1_forward.7} parent=11 // pred_region
        _
      $region36: #{oca1_forward.7} parent=11 // pred_fallthru
        _
      // Predicated region
      $region37: #{oca1_forward.7} parent=11 // pred_check
        %p295 = pneg %p189
      $region38: #{oca1_forward.7} parent=11 // pred_check_branch
        %297 = sbr.rel (%p295) target = $region40
      $region39: #{oca1_forward.7} parent=11 // pred_region
        _
      $region40: #{oca1_forward.7} parent=11 // pred_fallthru
        _
      // Predicated region
      $region41: #{oca1_forward.7} parent=11 // pred_check
        %p298 = pneg %p210
      $region42: #{oca1_forward.7} parent=11 // pred_check_branch
        %300 = sbr.rel (%p298) target = $region44
      $region43: #{oca1_forward.7} parent=11 // pred_region
        _
      $region44: #{oca1_forward.7} parent=11 // pred_fallthru
        _
    $region12: #{oca1_forward.7} parent=5 // pred_fallthru
      _
    %p301 = scmp.lt.s32.totalorder %s16, 2
    // Predicated region
    $region45: #{oca1_forward.7} parent=5 // pred_check
      %p302 = pneg %p301
    $region46: #{oca1_forward.7} parent=5 // pred_check_branch
      %304 = sbr.rel (%p302) target = $region48
    $region47: #{oca1_forward.7} parent=5 // pred_region
      // Predicated region
      $region49: #{oca1_forward.7} parent=47 // pred_check
        %p305 = pneg %p99
      $region50: #{oca1_forward.7} parent=47 // pred_check_branch
        %307 = sbr.rel (%p305) target = $region52
      $region51: #{oca1_forward.7} parent=47 // pred_region
        %p308 = scmp.lt.s32.totalorder %s16, 1
        %s309 = scalar_select %p308, %s16, 1
        %s310 = smul.addr %s309, 8
        %s311 = smul.addr %s310, 4
        %s312 = scalar_lea.vmem %s3, %s311
      $region52: #{oca1_forward.7} parent=47 // pred_fallthru
        _
      // Predicated region
      $region53: #{oca1_forward.7} parent=47 // pred_check
        %p313 = pneg %p230
      $region54: #{oca1_forward.7} parent=47 // pred_check_branch
        %315 = sbr.rel (%p313) target = $region56
      $region55: #{oca1_forward.7} parent=47 // pred_region
        %p316 = scmp.lt.s32.totalorder %s16, 1
        %s317 = scalar_select %p316, %s16, 1
        %s318 = smul.addr %s317, 8
        %s319 = smul.addr %s318, 4
        %s320 = scalar_lea.vmem %s9, %s319
      $region56: #{oca1_forward.7} parent=47 // pred_fallthru
        _
    $region48: #{oca1_forward.7} parent=5 // pred_fallthru
      _
    %p321 = scmp.le.s32.totalorder 1, %s16
    %p322 = scmp.lt.s32.totalorder %s16, 3
    %p323 = pnand %p321, %p322
    %p324 = pneg %p323
    // Predicated region
    $region57: #{oca1_forward.7} parent=5 // pred_check
      _
    $region58: #{oca1_forward.7} parent=5 // pred_check_branch
      %326 = sbr.rel (%p323) target = $region60
    $region59: #{oca1_forward.7} parent=5 // pred_region
      %s327 = ssub.s32 %s16, 1
      %p328 = pneg %p37
      %p329 = pneg %p34
      %p330 = pneg %p58
      %p331 = pneg %p55
      %p332 = pneg %p79
      %p333 = pneg %p76
      %p334 = scmp.lt.s32.totalorder %s21, 1
      %s335 = scalar_select %p334, %s21, 1
      %s336 = smul.addr %s335, 8
      %s337 = smul.addr %s336, 4
      %s338 = scalar_lea.vmem %s3, %s337
      %p339 = pneg %p105
      %p340 = pneg %p102
      %p341 = pneg %p126
      %p342 = pneg %p123
      %p343 = pneg %p147
      %p344 = pneg %p144
      %p345 = pneg %p168
      %p346 = pneg %p165
      %p347 = pneg %p189
      %p348 = pneg %p186
      %p349 = pneg %p210
      %p350 = pneg %p207
      %p351 = scmp.lt.s32.totalorder %s21, 1
      %s352 = scalar_select %p351, %s21, 1
      %s353 = smul.addr %s352, 8
      %s354 = smul.addr %s353, 4
      %s355 = scalar_lea.vmem %s9, %s354
      %p356 = pneg %p236
      %p357 = pneg %p233
      %p358 = pneg %p262
      %p359 = pneg %p259
      %p360 = scmp.lt.s32.totalorder %s21, 1
      %s361 = scalar_select %p360, %s21, 1
      %s362 = smul.addr %s361, 8
      %s363 = smul.addr %s362, 8
      %s364 = scalar_lea.vmem %s10, %s363
      %p365 = scmp.lt.s32.totalorder %s21, 1
      %s366 = scalar_select %p365, %s21, 1
      %s367 = smul.addr %s366, 8
      %s368 = smul.addr %s367, 4
      %s369 = scalar_lea.vmem %s3, %s368
      %p370 = scmp.lt.s32.totalorder %s21, 1
      %s371 = scalar_select %p370, %s21, 1
      %s372 = smul.addr %s371, 8
      %s373 = smul.addr %s372, 4
      %s374 = scalar_lea.vmem %s9, %s373
      %p375 = scmp.lt.s32.totalorder %s21, 1
      %s376 = scalar_select %p375, %s21, 1
      %s377 = smul.addr %s376, 8
      %s378 = smul.addr %s377, 8
      %s379 = scalar_lea.vmem %s10, %s378
      %v381 = vld [vmem:[%s0] sm:$0x3]
      %v382 = vld [vmem:[%s0 + $0x2] sm:$0x3]
      %v383 = vld [vmem:[%s1] sm:$0x1]
      %v384 = vld [vmem:[%s2] sm:$0x1]
      %vm385 = vcmask 1041408
      %v386 = vsel %vm385, %v381, 0.0
      %v387 = vsel %vm385, %v382, 0.0
      %v388 = vadd.f32 %v386, %v387
      %v389 = vmul.f32 %v388, 0.0078125
      %v390 = vmul.f32 %v389, %v389
      %v392 = vrot.slane %v390, 7
      %v394 = vsub.f32 %v389, %v392
      %v395 = vmax.f32 %v394, 0.0
      %v396 = vadd.f32 %v395, 1e-05
      %v397 = vrsqrt.pop %v396
      %v400 = vunpack.c.l.s4 1966171168
      %v401 = vunpack.c.0.s8 %v400
      %v402 = vlaneseq
      %v403 = vshrl.u32 %v402, 7
      %v404 = vsub.s32 %v401, %v403
      %v405 = vrot.slane %v397, %v404
      %v406 = vcombine.high %v405, %v405
      %v408 = vunpack.c.l.s4 1966171168
      %v409 = vunpack.c.0.s8 %v408
      %v410 = vlaneseq
      %v411 = vshrl.u32 %v410, 7
      %v412 = vsub.s32 %v409, %v411
      %v413 = vrot.slane %v406, %v412
      %v415 = vmul.f32 %v383, %v413
      %v416 = vmul.f32 %v389, %v415
      %v417 = vsub.f32 %v384, %v416
      %v418 = vld [vmem:[%s369] sm:$0xf]
      %v419 = vld [vmem:[%s369 + $0x4] sm:$0xf]
      %v420 = vld [vmem:[%s369 + $0x8] sm:$0xf]
      %v421 = vld [vmem:[%s369 + $0xc] sm:$0xf]
      %v422 = vld [vmem:[%s369 + $0x10] sm:$0xf]
      %v423 = vld [vmem:[%s369 + $0x14] sm:$0xf]
      %v424 = vld [vmem:[%s369 + $0x18] sm:$0xf]
      %v425 = vld [vmem:[%s369 + $0x1c] sm:$0xf]
      %v426 = vunpack.c.l.bf16 %v418
      %v427 = vunpack.c.l.bf16 %v419
      %v428 = vunpack.c.l.bf16 %v420
      %v429 = vunpack.c.l.bf16 %v421
      %v430 = vunpack.c.l.bf16 %v422
      %v431 = vunpack.c.l.bf16 %v423
      %v432 = vunpack.c.l.bf16 %v424
      %v433 = vunpack.c.l.bf16 %v425
      %v435 = vlaneseq
      %v436 = vshrl.u32 %v435, 7
      %v437 = vsub.s32 0, %v436
      %v438 = vrot.slane %v415, %v437
      %v440 = vmul.f32 %v426, %v438
      %v441 = vmul.f32 %v427, %v438
      %v442 = vmul.f32 %v428, %v438
      %v443 = vmul.f32 %v429, %v438
      %v444 = vmul.f32 %v430, %v438
      %v445 = vmul.f32 %v431, %v438
      %v446 = vmul.f32 %v432, %v438
      %v447 = vmul.f32 %v433, %v438
      %v449 = vlaneseq
      %v450 = vshrl.u32 %v449, 7
      %v451 = vsub.s32 0, %v450
      %v452 = vrot.slane %v417, %v451
      %v454 = vadd.f32 %v440, %v452
      %v455 = vadd.f32 %v441, %v452
      %v456 = vadd.f32 %v442, %v452
      %v457 = vadd.f32 %v443, %v452
      %v458 = vadd.f32 %v444, %v452
      %v459 = vadd.f32 %v445, %v452
      %v460 = vadd.f32 %v446, %v452
      %v461 = vadd.f32 %v447, %v452
      %v462 = vld [vmem:[%s4] sm:$0xff]
      %v463 = vld [vmem:[%s4 + $0x8] sm:$0xff]
      %v464 = vld [vmem:[%s4 + $0x10] sm:$0xff]
      %v465 = vld [vmem:[%s4 + $0x18] sm:$0xff]
      %v466 = vld [vmem:[%s4 + $0x20] sm:$0xff]
      %v467 = vld [vmem:[%s4 + $0x28] sm:$0xff]
      %v468 = vld [vmem:[%s4 + $0x30] sm:$0xff]
      %v469 = vld [vmem:[%s4 + $0x38] sm:$0xff]
      %v470 = vmul.f32 %v462, %v454
      %v471 = vmul.f32 %v463, %v455
      %v472 = vmul.f32 %v464, %v456
      %v473 = vmul.f32 %v465, %v457
      %v474 = vmul.f32 %v466, %v458
      %v475 = vmul.f32 %v467, %v459
      %v476 = vmul.f32 %v468, %v460
      %v477 = vmul.f32 %v469, %v461
      %v478 = vadd.f32 %v470, %v471
      %v479 = vadd.f32 %v478, %v472
      %v480 = vadd.f32 %v479, %v473
      %v481 = vadd.f32 %v480, %v474
      %v482 = vadd.f32 %v481, %v475
      %v483 = vadd.f32 %v482, %v476
      %v484 = vadd.f32 %v483, %v477
      %v485 = vrot.slane %v484, 4
      %v486 = vadd.f32 %v484, %v485
      %v487 = vrot.slane %v486, 2
      %v488 = vadd.f32 %v486, %v487
      %v489 = vrot.slane %v488, 1
      %v490 = vadd.f32 %v488, %v489
      %v491 = vld [vmem:[%s5] sm:$0xff]
      %v492 = vld [vmem:[%s5 + $0x8] sm:$0xff]
      %v493 = vld [vmem:[%s5 + $0x10] sm:$0xff]
      %v494 = vld [vmem:[%s5 + $0x18] sm:$0xff]
      %v495 = vld [vmem:[%s5 + $0x20] sm:$0xff]
      %v496 = vld [vmem:[%s5 + $0x28] sm:$0xff]
      %v497 = vld [vmem:[%s5 + $0x30] sm:$0xff]
      %v498 = vld [vmem:[%s5 + $0x38] sm:$0xff]
      %v499 = vld [vmem:[%s5 + $0x40] sm:$0xff]
      %v500 = vld [vmem:[%s5 + $0x48] sm:$0xff]
      %v501 = vld [vmem:[%s5 + $0x50] sm:$0xff]
      %v502 = vld [vmem:[%s5 + $0x58] sm:$0xff]
      %v503 = vld [vmem:[%s5 + $0x60] sm:$0xff]
      %v504 = vld [vmem:[%s5 + $0x68] sm:$0xff]
      %v505 = vld [vmem:[%s5 + $0x70] sm:$0xff]
      %v506 = vld [vmem:[%s5 + $0x78] sm:$0xff]
      %507 = vmatprep.subr.mxu0 0.0
      %508 = vmatpush1.msra.mxu0 %v491
      %509 = vmatprep.subr.mxu0 0.0
      %510 = vmatpush1.msra.mxu0 %v492
      %511 = vmatprep.subr.mxu0 0.0
      %512 = vmatpush1.msra.mxu0 %v493
      %513 = vmatprep.subr.mxu0 0.0
      %514 = vmatpush1.msra.mxu0 %v494
      %515 = vmatprep.subr.mxu0 0.0
      %516 = vmatpush1.msra.mxu0 %v495
      %517 = vmatprep.subr.mxu0 0.0
      %518 = vmatpush1.msra.mxu0 %v496
      %519 = vmatprep.subr.mxu0 0.0
      %520 = vmatpush1.msra.mxu0 %v497
      %521 = vmatprep.subr.mxu0 0.0
      %522 = vmatpush1.msra.mxu0 %v498
      %523 = vmatprep.subr.mxu0 0.0
      %524 = vmatpush1.msra.mxu0 %v499
      %525 = vmatprep.subr.mxu0 0.0
      %526 = vmatpush1.msra.mxu0 %v500
      %527 = vmatprep.subr.mxu0 0.0
      %528 = vmatpush1.msra.mxu0 %v501
      %529 = vmatprep.subr.mxu0 0.0
      %530 = vmatpush1.msra.mxu0 %v502
      %531 = vmatprep.subr.mxu0 0.0
      %532 = vmatpush1.msra.mxu0 %v503
      %533 = vmatprep.subr.mxu0 0.0
      %534 = vmatpush1.msra.mxu0 %v504
      %535 = vmatprep.subr.mxu0 0.0
      %536 = vmatpush1.msra.mxu0 %v505
      %537 = vmatprep.subr.mxu0 0.0
      %538 = vmatpush1.msra.mxu0 %v506
      %539 = vmatprep.subr.mxu0 0.0
      %540 = vmatpush1.msra.mxu0 0.0
      %541 = vmatprep.subr.mxu0 0.0
      %542 = vmatpush1.msra.mxu0 0.0
      %543 = vmatprep.subr.mxu0 0.0
      %544 = vmatpush1.msra.mxu0 0.0
      %545 = vmatprep.subr.mxu0 0.0
      %546 = vmatpush1.msra.mxu0 0.0
      %547 = vmatprep.subr.mxu0 0.0
      %548 = vmatpush1.msra.mxu0 0.0
      %549 = vmatprep.subr.mxu0 0.0
      %550 = vmatpush1.msra.mxu0 0.0
      %551 = vmatprep.subr.mxu0 0.0
      %552 = vmatpush1.msra.mxu0 0.0
      %553 = vmatprep.subr.mxu0 0.0
      %554 = vmatpush1.msra.mxu0 0.0
      %555 = vmatprep.subr.mxu0 0.0
      %556 = vmatpush1.msra.mxu0 0.0
      %557 = vmatprep.subr.mxu0 0.0
      %558 = vmatpush1.msra.mxu0 0.0
      %559 = vmatprep.subr.mxu0 0.0
      %560 = vmatpush1.msra.mxu0 0.0
      %561 = vmatprep.subr.mxu0 0.0
      %562 = vmatpush1.msra.mxu0 0.0
      %563 = vmatprep.subr.mxu0 0.0
      %564 = vmatpush1.msra.mxu0 0.0
      %565 = vmatprep.subr.mxu0 0.0
      %566 = vmatpush1.msra.mxu0 0.0
      %567 = vmatprep.subr.mxu0 0.0
      %568 = vmatpush1.msra.mxu0 0.0
      %569 = vmatprep.subr.mxu0 0.0
      %570 = vmatpush1.msra.mxu0 0.0
      %571 = vmatprep.mubr.f32.mxu0 0.0
      %572 = vmatmul.mubr.f32.gmra.mrb[0].mxu0 %v490
      %v573 = vpop.f32.mrb[0].mxu0
      %v574 = vadd.f32 0.0, %v573
      %v575 = vpop.f32.mrb[0].mxu0
      %576 = vdwg.mxu0
      %v577 = vmax.f32 %v574, 0.0
      %v578 = vld [vmem:[%s6] sm:$0xff]
      %v579 = vld [vmem:[%s6 + $0x8] sm:$0xff]
      %v580 = vld [vmem:[%s6 + $0x10] sm:$0xff]
      %v581 = vld [vmem:[%s6 + $0x18] sm:$0xff]
      %v582 = vld [vmem:[%s6 + $0x20] sm:$0xff]
      %v583 = vld [vmem:[%s6 + $0x28] sm:$0xff]
      %v584 = vld [vmem:[%s6 + $0x30] sm:$0xff]
      %v585 = vld [vmem:[%s6 + $0x38] sm:$0xff]
      %v586 = vld [vmem:[%s6 + $0x40] sm:$0xff]
      %v587 = vld [vmem:[%s6 + $0x48] sm:$0xff]
      %v588 = vld [vmem:[%s6 + $0x50] sm:$0xff]
      %v589 = vld [vmem:[%s6 + $0x58] sm:$0xff]
      %v590 = vld [vmem:[%s6 + $0x60] sm:$0xff]
      %v591 = vld [vmem:[%s6 + $0x68] sm:$0xff]
      %v592 = vld [vmem:[%s6 + $0x70] sm:$0xff]
      %v593 = vld [vmem:[%s6 + $0x78] sm:$0xff]
      %594 = vmatprep.subr.mxu0 0.0
      %595 = vmatpush1.msra.mxu0 %v578
      %596 = vmatprep.subr.mxu0 0.0
      %597 = vmatpush1.msra.mxu0 %v579
      %598 = vmatprep.subr.mxu0 0.0
      %599 = vmatpush1.msra.mxu0 %v580
      %600 = vmatprep.subr.mxu0 0.0
      %601 = vmatpush1.msra.mxu0 %v581
      %602 = vmatprep.subr.mxu0 0.0
      %603 = vmatpush1.msra.mxu0 %v582
      %604 = vmatprep.subr.mxu0 0.0
      %605 = vmatpush1.msra.mxu0 %v583
      %606 = vmatprep.subr.mxu0 0.0
      %607 = vmatpush1.msra.mxu0 %v584
      %608 = vmatprep.subr.mxu0 0.0
      %609 = vmatpush1.msra.mxu0 %v585
      %610 = vmatprep.subr.mxu0 0.0
      %611 = vmatpush1.msra.mxu0 %v586
      %612 = vmatprep.subr.mxu0 0.0
      %613 = vmatpush1.msra.mxu0 %v587
      %614 = vmatprep.subr.mxu0 0.0
      %615 = vmatpush1.msra.mxu0 %v588
      %616 = vmatprep.subr.mxu0 0.0
      %617 = vmatpush1.msra.mxu0 %v589
      %618 = vmatprep.subr.mxu0 0.0
      %619 = vmatpush1.msra.mxu0 %v590
      %620 = vmatprep.subr.mxu0 0.0
      %621 = vmatpush1.msra.mxu0 %v591
      %622 = vmatprep.subr.mxu0 0.0
      %623 = vmatpush1.msra.mxu0 %v592
      %624 = vmatprep.subr.mxu0 0.0
      %625 = vmatpush1.msra.mxu0 %v593
      %626 = vmatprep.subr.mxu0 0.0
      %627 = vmatpush1.msra.mxu0 0.0
      %628 = vmatprep.subr.mxu0 0.0
      %629 = vmatpush1.msra.mxu0 0.0
      %630 = vmatprep.subr.mxu0 0.0
      %631 = vmatpush1.msra.mxu0 0.0
      %632 = vmatprep.subr.mxu0 0.0
      %633 = vmatpush1.msra.mxu0 0.0
      %634 = vmatprep.subr.mxu0 0.0
      %635 = vmatpush1.msra.mxu0 0.0
      %636 = vmatprep.subr.mxu0 0.0
      %637 = vmatpush1.msra.mxu0 0.0
      %638 = vmatprep.subr.mxu0 0.0
      %639 = vmatpush1.msra.mxu0 0.0
      %640 = vmatprep.subr.mxu0 0.0
      %641 = vmatpush1.msra.mxu0 0.0
      %642 = vmatprep.subr.mxu0 0.0
      %643 = vmatpush1.msra.mxu0 0.0
      %644 = vmatprep.subr.mxu0 0.0
      %645 = vmatpush1.msra.mxu0 0.0
      %646 = vmatprep.subr.mxu0 0.0
      %647 = vmatpush1.msra.mxu0 0.0
      %648 = vmatprep.subr.mxu0 0.0
      %649 = vmatpush1.msra.mxu0 0.0
      %650 = vmatprep.subr.mxu0 0.0
      %651 = vmatpush1.msra.mxu0 0.0
      %652 = vmatprep.subr.mxu0 0.0
      %653 = vmatpush1.msra.mxu0 0.0
      %654 = vmatprep.subr.mxu0 0.0
      %655 = vmatpush1.msra.mxu0 0.0
      %656 = vmatprep.subr.mxu0 0.0
      %657 = vmatpush1.msra.mxu0 0.0
      %658 = vmatprep.mubr.f32.mxu0 0.0
      %659 = vmatmul.mubr.f32.gmra.mrb[0].mxu0 %v577
      %v660 = vpop.f32.mrb[0].mxu0
      %v661 = vadd.f32 0.0, %v660
      %v662 = vpop.f32.mrb[0].mxu0
      %663 = vdwg.mxu0
      %v664 = vxor.u32 %v661, 2147483648
      %v665 = vmul.f32 %v664, 1.442695
      %v666 = vpow.pop %v665
      %v667 = vadd.f32 %v666, 1.0
      %v668 = vrcp.pop %v667
      %v669 = vmul.f32 1.0, %v668
      %v670 = vlaneseq
      %v671 = vshrl.u32 %v670, 7
      %v672 = vsub.s32 0, %v671
      %v673 = vrot.slane %v669, %v672
      %v674 = vmul.f32 %v454, %v673
      %v675 = vmul.f32 %v455, %v673
      %v676 = vmul.f32 %v456, %v673
      %v677 = vmul.f32 %v457, %v673
      %v678 = vmul.f32 %v458, %v673
      %v679 = vmul.f32 %v459, %v673
      %v680 = vmul.f32 %v460, %v673
      %v681 = vmul.f32 %v461, %v673
      %v682 = vpack.c.bf16 %v675, %v674
      %v683 = vpack.c.bf16 %v677, %v676
      %v684 = vpack.c.bf16 %v679, %v678
      %v685 = vpack.c.bf16 %v681, %v680
      %v686 = vld [vmem:[%s7] sm:$0xf]
      %v687 = vld [vmem:[%s7 + $0x4] sm:$0xf]
      %v688 = vld [vmem:[%s7 + $0x8] sm:$0xf]
      %v689 = vld [vmem:[%s7 + $0xc] sm:$0xf]
      %v690 = vld [vmem:[%s7 + $0x10] sm:$0xf]
      %v691 = vld [vmem:[%s7 + $0x14] sm:$0xf]
      %v692 = vld [vmem:[%s7 + $0x18] sm:$0xf]
      %v693 = vld [vmem:[%s7 + $0x1c] sm:$0xf]
      %v694 = vld [vmem:[%s7 + $0x20] sm:$0xf]
      %v695 = vld [vmem:[%s7 + $0x24] sm:$0xf]
      %v696 = vld [vmem:[%s7 + $0x28] sm:$0xf]
      %v697 = vld [vmem:[%s7 + $0x2c] sm:$0xf]
      %v698 = vld [vmem:[%s7 + $0x30] sm:$0xf]
      %v699 = vld [vmem:[%s7 + $0x34] sm:$0xf]
      %v700 = vld [vmem:[%s7 + $0x38] sm:$0xf]
      %v701 = vld [vmem:[%s7 + $0x3c] sm:$0xf]
      %v718 = vunpack.c.l.b16 %v686
      %v719 = vunpack.c.l.b16 %v687
      %v720 = vunpack.c.l.b16 %v688
      %v721 = vunpack.c.l.b16 %v689
      %v722 = vunpack.c.l.b16 %v690
      %v723 = vunpack.c.l.b16 %v691
      %v724 = vunpack.c.l.b16 %v692
      %v725 = vunpack.c.l.b16 %v693
      %v726 = vunpack.c.l.b16 %v694
      %v727 = vunpack.c.l.b16 %v695
      %v728 = vunpack.c.l.b16 %v696
      %v729 = vunpack.c.l.b16 %v697
      %v730 = vunpack.c.l.b16 %v698
      %v731 = vunpack.c.l.b16 %v699
      %v732 = vunpack.c.l.b16 %v700
      %v733 = vunpack.c.l.b16 %v701
      %v734 = vpack.c.b16 %v719, %v718
      %v735 = vpack.c.b16 %v721, %v720
      %v736 = vpack.c.b16 %v723, %v722
      %v737 = vpack.c.b16 %v725, %v724
      %v738 = vpack.c.b16 %v727, %v726
      %v739 = vpack.c.b16 %v729, %v728
      %v740 = vpack.c.b16 %v731, %v730
      %v741 = vpack.c.b16 %v733, %v732
      %750 = vmatprep.subr.bf16.mxu0 0
      %751 = vmatpush1.bf16.msra.mxu0 %v734
      %752 = vmatprep.subr.bf16.mxu0 0
      %753 = vmatpush1.bf16.msra.mxu0 %v735
      %754 = vmatprep.subr.bf16.mxu0 0
      %755 = vmatpush1.bf16.msra.mxu0 %v736
      %756 = vmatprep.subr.bf16.mxu0 0
      %757 = vmatpush1.bf16.msra.mxu0 %v737
      %758 = vmatprep.subr.bf16.mxu0 0
      %759 = vmatpush1.bf16.msra.mxu0 %v738
      %760 = vmatprep.subr.bf16.mxu0 0
      %761 = vmatpush1.bf16.msra.mxu0 %v739
      %762 = vmatprep.subr.bf16.mxu0 0
      %763 = vmatpush1.bf16.msra.mxu0 %v740
      %764 = vmatprep.subr.bf16.mxu0 0
      %765 = vmatpush1.bf16.msra.mxu0 %v741
      %766 = vmatprep.subr.bf16.mxu0 0
      %767 = vmatpush1.bf16.msra.mxu0 0
      %768 = vmatprep.subr.bf16.mxu0 0
      %769 = vmatpush1.bf16.msra.mxu0 0
      %770 = vmatprep.subr.bf16.mxu0 0
      %771 = vmatpush1.bf16.msra.mxu0 0
      %772 = vmatprep.subr.bf16.mxu0 0
      %773 = vmatpush1.bf16.msra.mxu0 0
      %774 = vmatprep.subr.bf16.mxu0 0
      %775 = vmatpush1.bf16.msra.mxu0 0
      %776 = vmatprep.subr.bf16.mxu0 0
      %777 = vmatpush1.bf16.msra.mxu0 0
      %778 = vmatprep.subr.bf16.mxu0 0
      %779 = vmatpush1.bf16.msra.mxu0 0
      %780 = vmatprep.subr.bf16.mxu0 0
      %781 = vmatpush1.bf16.msra.mxu0 0
      %782 = vmatprep.mubr.bf16.mxu0 0
      %783 = vmatmul.mubr.bf16.gmra.mrb[0].mxu0 %v682
      %v784 = vpop.f32.mrb[0].mxu0
      %v785 = vadd.f32 0.0, %v784
      %v786 = vpop.f32.mrb[0].mxu0
      %v787 = vpop.f32.mrb[0].mxu0
      %v788 = vadd.f32 0.0, %v787
      %v789 = vpop.f32.mrb[0].mxu0
      %790 = vmatprep.mubr.bf16.mxu0 0
      %791 = vmatmul.mubr.bf16.gmra.mrb[0].mxu0 %v683
      %v792 = vpop.f32.mrb[0].mxu0
      %v793 = vadd.f32 0.0, %v792
      %v794 = vpop.f32.mrb[0].mxu0
      %v795 = vpop.f32.mrb[0].mxu0
      %v796 = vadd.f32 0.0, %v795
      %v797 = vpop.f32.mrb[0].mxu0
      %798 = vmatprep.mubr.bf16.mxu0 0
      %799 = vmatmul.mubr.bf16.gmra.mrb[0].mxu0 %v684
      %v800 = vpop.f32.mrb[0].mxu0
      %v801 = vadd.f32 0.0, %v800
      %v802 = vpop.f32.mrb[0].mxu0
      %v803 = vpop.f32.mrb[0].mxu0
      %v804 = vadd.f32 0.0, %v803
      %v805 = vpop.f32.mrb[0].mxu0
      %806 = vmatprep.mubr.bf16.mxu0 0
      %807 = vmatmul.mubr.bf16.gmra.mrb[0].mxu0 %v685
      %v808 = vpop.f32.mrb[0].mxu0
      %v809 = vadd.f32 0.0, %v808
      %v810 = vpop.f32.mrb[0].mxu0
      %v811 = vpop.f32.mrb[0].mxu0
      %v812 = vadd.f32 0.0, %v811
      %v813 = vpop.f32.mrb[0].mxu0
      %814 = vdwg.mxu0
      %v815 = vld [vmem:[%s8] sm:$0x1]
      %v817 = vlaneseq
      %v818 = vshrl.u32 %v817, 7
      %v819 = vsub.s32 0, %v818
      %v820 = vrot.slane %v815, %v819
      %v822 = vadd.f32 %v785, %v820
      %v823 = vadd.f32 %v788, %v820
      %v824 = vadd.f32 %v793, %v820
      %v825 = vadd.f32 %v796, %v820
      %v826 = vadd.f32 %v801, %v820
      %v827 = vadd.f32 %v804, %v820
      %v828 = vadd.f32 %v809, %v820
      %v829 = vadd.f32 %v812, %v820
      %v830 = vld [vmem:[%s374] sm:$0xf]
      %v831 = vld [vmem:[%s374 + $0x4] sm:$0xf]
      %v832 = vld [vmem:[%s374 + $0x8] sm:$0xf]
      %v833 = vld [vmem:[%s374 + $0xc] sm:$0xf]
      %v834 = vld [vmem:[%s374 + $0x10] sm:$0xf]
      %v835 = vld [vmem:[%s374 + $0x14] sm:$0xf]
      %v836 = vld [vmem:[%s374 + $0x18] sm:$0xf]
      %v837 = vld [vmem:[%s374 + $0x1c] sm:$0xf]
      %v838 = vunpack.c.l.bf16 %v830
      %v839 = vunpack.c.l.bf16 %v831
      %v840 = vunpack.c.l.bf16 %v832
      %v841 = vunpack.c.l.bf16 %v833
      %v842 = vunpack.c.l.bf16 %v834
      %v843 = vunpack.c.l.bf16 %v835
      %v844 = vunpack.c.l.bf16 %v836
      %v845 = vunpack.c.l.bf16 %v837
      %v846 = vadd.f32 %v822, %v838
      %v847 = vadd.f32 %v823, %v839
      %v848 = vadd.f32 %v824, %v840
      %v849 = vadd.f32 %v825, %v841
      %v850 = vadd.f32 %v826, %v842
      %v851 = vadd.f32 %v827, %v843
      %v852 = vadd.f32 %v828, %v844
      %v853 = vadd.f32 %v829, %v845
      %v854 = vmax.f32 %v846, 0.0
      %v855 = vmax.f32 %v847, 0.0
      %v856 = vmax.f32 %v848, 0.0
      %v857 = vmax.f32 %v849, 0.0
      %v858 = vmax.f32 %v850, 0.0
      %v859 = vmax.f32 %v851, 0.0
      %v860 = vmax.f32 %v852, 0.0
      %v861 = vmax.f32 %v853, 0.0
      %862 = vst [vmem:[%s379] sm:$0xff] %v854
      %863 = vst [vmem:[%s379 + $0x8] sm:$0xff] %v855
      %864 = vst [vmem:[%s379 + $0x10] sm:$0xff] %v856
      %865 = vst [vmem:[%s379 + $0x18] sm:$0xff] %v857
      %866 = vst [vmem:[%s379 + $0x20] sm:$0xff] %v858
      %867 = vst [vmem:[%s379 + $0x28] sm:$0xff] %v859
      %868 = vst [vmem:[%s379 + $0x30] sm:$0xff] %v860
      %869 = vst [vmem:[%s379 + $0x38] sm:$0xff] %v861
      %p870 = scmp.lt.s32.totalorder %s21, 1
      %s871 = scalar_select %p870, %s21, 1
      %s872 = smul.addr %s871, 8
      %s873 = smul.addr %s872, 8
      %s874 = scalar_lea.vmem %s10, %s873
      // Predicated region
      $region61: #{oca1_forward.7} parent=59 // pred_check
        %p875 = pneg %p259
      $region62: #{oca1_forward.7} parent=59 // pred_check_branch
        %877 = sbr.rel (%p875) target = $region64
      $region63: #{oca1_forward.7} parent=59 // pred_region
        _
      $region64: #{oca1_forward.7} parent=59 // pred_fallthru
        _
    $region60: #{oca1_forward.7} parent=5 // pred_fallthru
      _
    %p878 = scmp.le.s32.totalorder 2, %s16
    // Predicated region
    $region65: #{oca1_forward.7} parent=5 // pred_check
      %p879 = pneg %p878
    $region66: #{oca1_forward.7} parent=5 // pred_check_branch
      %881 = sbr.rel (%p879) target = $region68
    $region67: #{oca1_forward.7} parent=5 // pred_region
      %s882 = ssub.s32 %s16, 2
      // Predicated region
      $region69: #{oca1_forward.7} parent=67 // pred_check
        %p883 = pneg %p265
      $region70: #{oca1_forward.7} parent=67 // pred_check_branch
        %885 = sbr.rel (%p883) target = $region72
      $region71: #{oca1_forward.7} parent=67 // pred_region
        %p886 = scmp.lt.s32.totalorder %s22, 1
        %s887 = scalar_select %p886, %s22, 1
        %s888 = smul.addr %s887, 8
        %s889 = smul.addr %s888, 8
        %s890 = scalar_lea.vmem %s10, %s889
      $region72: #{oca1_forward.7} parent=67 // pred_fallthru
        _
    $region68: #{oca1_forward.7} parent=5 // pred_fallthru
      _
  $region6: #{oca1_forward.7} parent=0 // loop_footer
    %s20 = sadd.s32 1, %s16
  $region7: #{oca1_forward.7} parent=0 // loop_footer_branch
    %15 = sbr.rel target = $region3
  $region8: #{oca1_forward.7} parent=0 // loop_exit
    _

</llo_original>
